<compile_context>
chip_gen: v5e
topology: v5e:2x2
jax: 0.10.0
libtpu: 0.0.40
codegen_flags: <defaults>
</compile_context>

<pallas_src>
import functools

import jax
import jax.numpy as jnp
from jax import lax
from jax.experimental import pallas as pl
from jax.experimental.pallas import tpu as pltpu


def _bottleneck_kernel(x_ref, hpos_ref, wpos_ref,
                       w1_ref, b1_ref, w2_ref, b2_ref, w3_ref, b3_ref,
                       o_ref, col_ref, *, Nb, H, W, Cin, P, Cout, compute_dtype):
    """One grid step: (Nb, H, W, Cin) NHWC block -> (Nb, H, W, Cout)."""
    f32 = jnp.float32
    M = Nb * H * W

    # ---- conv1 (1x1) -> bn1 (scale folded into w1) -> relu ------------------
    x2d = x_ref[...].reshape(M, Cin)                      # compute_dtype (MXU operand)
    out1 = jnp.dot(x2d, w1_ref[...], preferred_element_type=f32)
    out1 = jnp.maximum(out1 + b1_ref[...], 0.0)           # (M, P) f32

    # ---- conv2 (3x3, pad=1, stride=1): im2col via rolls into a VMEM scratch --
    # Tap (dy, dx) of flattened pixel m needs out1[m + dy*W + dx]; pltpu.roll on
    # the (M, P) activation (XLU) realizes the shift.  An (M, 1) position mask
    # zeroes out-of-image taps (the zero padding), which also kills both the
    # roll wrap-around and any cross-image leakage inside the Nb-batched block.
    # The 9 masked taps are packed side by side into (M, 9P) so conv2 becomes a
    # single wide-K MXU matmul.
    hpos = hpos_ref[...]                                  # (M, 1) int32, h index
    wpos = wpos_ref[...]                                  # (M, 1) int32, w index
    row_ok = {-1: hpos >= 1, 0: None, 1: hpos <= H - 2}
    col_ok = {-1: wpos >= 1, 0: None, 1: wpos <= W - 2}

    t = 0
    for dy in (-1, 0, 1):
        for dx in (-1, 0, 1):
            shift = dy * W + dx
            tap = out1 if shift == 0 else pltpu.roll(out1, shift=(-shift) % M, axis=0)
            mask = row_ok[dy]
            if col_ok[dx] is not None:
                mask = col_ok[dx] if mask is None else (mask & col_ok[dx])
            if mask is not None:
                tap = jnp.where(mask, tap, 0.0)           # (M, 1) mask broadcast over P
            col_ref[:, t * P:(t + 1) * P] = tap           # static lane-slice store
            t += 1

    # ---- conv2 (single K=9P matmul) -> bn2 -> relu ---------------------------
    out2 = jnp.dot(col_ref[...].astype(compute_dtype), w2_ref[...],
                   preferred_element_type=f32)
    out2 = jnp.maximum(out2 + b2_ref[...], 0.0)           # (M, P) f32

    # ---- conv3 (1x1) -> bn3 -> identity residual add -> relu ----------------
    out3 = jnp.dot(out2.astype(compute_dtype), w3_ref[...],
                   preferred_element_type=f32)
    # Re-read the input block for the residual (don't keep it live through conv2/3).
    res = x_ref[...].reshape(M, Cout).astype(f32)
    out = jnp.maximum(out3 + b3_ref[...] + res, 0.0)      # (M, Cout) f32
    o_ref[...] = out.reshape(Nb, H, W, Cout).astype(o_ref.dtype)


def _fold_bn(gamma, beta, mean, var, eps=1e-5):
    scale = gamma / jnp.sqrt(var + eps)
    return scale, beta - mean * scale


def _physical_vmem_bytes():
    """Physical VMEM per TensorCore; conservative (v7x-sized) fallback."""
    try:
        info = pltpu.get_tpu_info()
        cap = getattr(info, "vmem_capacity_bytes", None)
        if cap:
            return int(cap)
    except Exception:
        pass
    return 64 << 20


def bottleneck_forward_nhwc(x_nhwc, params, *, compute_dtype=jnp.bfloat16):
    """x_nhwc: (N, H, W, Cin) -> (N, H, W, Cout), dtype = compute_dtype.

    Inference-mode BN.  compute_dtype is used for HBM storage and MXU operands;
    accumulation and all elementwise math stay f32.
    """
    assert compute_dtype in (jnp.float32, jnp.bfloat16)
    N, H, W, Cin = x_nhwc.shape
    w1, w2, w3 = params["w1"], params["w2"], params["w3"]
    P = w1.shape[1]
    Cout = w3.shape[1]
    assert Cin == Cout, "identity residual requires inplanes == planes * expansion"

    itemsize = jnp.dtype(compute_dtype).itemsize
    sublane = 8 if itemsize == 4 else 16
    assert W % sublane == 0, (
        f"W must be a multiple of {sublane} for relayout-free (Nb,H,W,C)->(M,C) "
        f"reshapes with dtype {jnp.dtype(compute_dtype).name}")

    # ---- BN folding: scales into conv weights, shifts stay in-kernel --------
    s1, b1 = _fold_bn(*params["bn1"])
    s2, b2 = _fold_bn(*params["bn2"])
    s3, b3 = _fold_bn(*params["bn3"])
    w1f = (w1 * s1[None, :]).astype(compute_dtype)                     # (Cin, P)
    w2f = (w2 * s2[None, None, None, :]).reshape(9 * P, P).astype(compute_dtype)
    w3f = (w3 * s3[None, :]).astype(compute_dtype)                     # (P, Cout)
    b1 = b1.reshape(1, P).astype(jnp.float32)
    b2 = b2.reshape(1, P).astype(jnp.float32)
    b3 = b3.reshape(1, Cout).astype(jnp.float32)

    # ---- choose Nb (images per grid step) and the VMEM limit ----------------
    HW = H * W
    vmem_cap = (_physical_vmem_bytes() * 3) // 4          # headroom: 48 MiB on v7x, 96 on v5e/v6e
    per_img = (2 * HW * (Cin + Cout) * itemsize           # double-buffered in/out blocks
               + HW * 9 * P * 4                           # f32 im2col scratch
               + HW * (Cin + 4 * P + 3 * Cout) * 4)       # live f32 intermediates (estimate)
    fixed = ((Cin * P + 9 * P * P + P * Cout) * itemsize
             + (2 * P + Cout) * 4 + (4 << 20))            # weights/shifts + compiler headroom

    nb = max(1, (2 << 20) // max(HW * Cin * itemsize, 1))           # ~2 MiB activation block
    nb = min(nb, max(1, (vmem_cap - fixed) // max(per_img, 1)))     # stay inside VMEM budget
    if N >= 2:
        nb = min(nb, N // 2)        # keep >= 2 grid steps: both v7x TCs get work
    nb = max(1, min(nb, N))
    while N % nb:                   # keep the batch grid exact (no partial blocks)
        nb -= 1
    M = nb * HW
    vmem_limit = int(min(max(nb * per_img + fixed, 32 << 20), vmem_cap))

    # (M, 1) pixel-position vectors for the zero-padding masks (tile per image).
    m_idx = jnp.arange(M, dtype=jnp.int32)
    hpos = ((m_idx // W) % H).reshape(M, 1)
    wpos = (m_idx % W).reshape(M, 1)

    kernel = functools.partial(_bottleneck_kernel, Nb=nb, H=H, W=W,
                               Cin=Cin, P=P, Cout=Cout, compute_dtype=compute_dtype)

    return pl.pallas_call(
        kernel,
        out_shape=jax.ShapeDtypeStruct((N, H, W, Cout), compute_dtype),
        grid_spec=pltpu.PrefetchScalarGridSpec(
            num_scalar_prefetch=0,
            grid=(N // nb,),
            in_specs=[
                pl.BlockSpec((nb, H, W, Cin), lambda n: (n, 0, 0, 0)),   # x block
                pl.BlockSpec((M, 1), lambda n: (0, 0)),                  # h positions
                pl.BlockSpec((M, 1), lambda n: (0, 0)),                  # w positions
                pl.BlockSpec((Cin, P), lambda n: (0, 0)),                # w1 * s1
                pl.BlockSpec((1, P), lambda n: (0, 0)),                  # bn1 shift
                pl.BlockSpec((9 * P, P), lambda n: (0, 0)),              # w2 * s2 (im2col)
                pl.BlockSpec((1, P), lambda n: (0, 0)),                  # bn2 shift
                pl.BlockSpec((P, Cout), lambda n: (0, 0)),               # w3 * s3
                pl.BlockSpec((1, Cout), lambda n: (0, 0)),               # bn3 shift
            ],
            out_specs=pl.BlockSpec((nb, H, W, Cout), lambda n: (n, 0, 0, 0)),
            scratch_shapes=[pltpu.VMEM((M, 9 * P), jnp.float32)],        # im2col
        ),
        compiler_params=pltpu.CompilerParams(
            dimension_semantics=("parallel",),
            vmem_limit_bytes=vmem_limit,
        ),
    )(x_nhwc.astype(compute_dtype), hpos, wpos, w1f, b1, w2f, b2, w3f, b3)


def bottleneck_forward(x_nchw, params, *, compute_dtype=jnp.bfloat16):
    """PyTorch-layout entry point: (N, Cin, H, W) -> (N, Cout, H, W).

    For best performance keep activations NHWC end-to-end and call
    bottleneck_forward_nhwc directly (avoids the boundary transposes).
    """
    out = bottleneck_forward_nhwc(jnp.transpose(x_nchw, (0, 2, 3, 1)), params,
                                  compute_dtype=compute_dtype)
    return jnp.transpose(out, (0, 3, 1, 2))


def _reference_forward(x_nchw, params):
    """Pure-JAX f32 reference (lax.conv, unfolded BN) for correctness checking."""
    x = jnp.transpose(x_nchw, (0, 2, 3, 1)).astype(jnp.float32)

    def conv(v, w, pad):
        return lax.conv_general_dilated(
            v, w, (1, 1), [(pad, pad), (pad, pad)],
            dimension_numbers=("NHWC", "HWIO", "NHWC"))

    def bn(v, gamma, beta, mean, var, eps=1e-5):
        return (v - mean) / jnp.sqrt(var + eps) * gamma + beta

    out = jax.nn.relu(bn(conv(x, params["w1"][None, None], 0), *params["bn1"]))
    out = jax.nn.relu(bn(conv(out, params["w2"], 1), *params["bn2"]))
    out = bn(conv(out, params["w3"][None, None], 0), *params["bn3"])
    out = jax.nn.relu(out + x)
    return jnp.transpose(out, (0, 3, 1, 2))


if __name__ == "__main__":
    key = jax.random.PRNGKey(0)
    # Small but layout-realistic CIFAR bottleneck: inplanes=64, planes=16
    # (expansion 4 -> Cout = 64 = inplanes, identity residual), 16x16 spatial.
    inplanes, planes = 64, 16
    N, H, W = 2, 16, 16

    ks = jax.random.split(key, 16)

    def nrm(k, shape, scale=0.1):
        return scale * jax.random.normal(k, shape, jnp.float32)

    params = {
        # conv weights (channels-last / HWIO)
        "w1": nrm(ks[0], (inplanes, planes)),
        "w2": nrm(ks[5], (3, 3, planes, planes)),
        "w3": nrm(ks[10], (planes, planes * 4)),
        # BN params: (gamma, beta, running_mean, running_var)
        "bn1": (1.0 + nrm(ks[1], (planes,)), nrm(ks[2], (planes,)),
                nrm(ks[3], (planes,)), 1.0 + jnp.abs(nrm(ks[4], (planes,)))),
        "bn2": (1.0 + nrm(ks[6], (planes,)), nrm(ks[7], (planes,)),
                nrm(ks[8], (planes,)), 1.0 + jnp.abs(nrm(ks[9], (planes,)))),
        "bn3": (1.0 + nrm(ks[11], (planes * 4,)), nrm(ks[12], (planes * 4,)),
                nrm(ks[13], (planes * 4,)), 1.0 + jnp.abs(nrm(ks[14], (planes * 4,)))),
    }

    x = jax.random.normal(ks[15], (N, inplanes, H, W), jnp.float32)   # NCHW input

    ref = _reference_forward(x, params)

    # Strict correctness gate: f32 MXU operands.  This validates the roll/mask
    # im2col, BN folding, residual and multi-image blocking logic independently
    # of bf16 rounding (tolerance covers MXU accumulation order only).
    out_f32 = jax.block_until_ready(
        bottleneck_forward(x, params, compute_dtype=jnp.float32))
    assert out_f32.shape == (N, planes * 4, H, W)
    err_f32 = jnp.max(jnp.abs(out_f32.astype(jnp.float32) - ref))
    assert jnp.allclose(out_f32.astype(jnp.float32), ref, atol=2e-3, rtol=2e-3), \
        f"f32 max abs err {err_f32}"

    # Default (production) path: bf16 HBM storage + bf16 MXU operands, f32
    # accumulation/elementwise.  Loose sanity bound reflecting bf16 operand
    # rounding through three chained matmuls vs. the f32 reference.
    out_bf16 = jax.block_until_ready(bottleneck_forward(x, params))
    err_bf16 = jnp.max(jnp.abs(out_bf16.astype(jnp.float32) - ref))
    assert err_bf16 < 2e-1, f"bf16 max abs err {err_bf16}"

    print("KERNEL_OK")
</pallas_src>

<mosaic_0001>
module attributes {stable_mosaic.version = 11 : i64} {
  func.func @_bottleneck_kernel(%arg0: i32, %arg1: memref<1x16x16x64xf32, #tpu.memory_space<vmem>>, %arg2: memref<256x1xi32, #tpu.memory_space<vmem>>, %arg3: memref<256x1xi32, #tpu.memory_space<vmem>>, %arg4: memref<64x16xf32, #tpu.memory_space<vmem>>, %arg5: memref<1x16xf32, #tpu.memory_space<vmem>>, %arg6: memref<144x16xf32, #tpu.memory_space<vmem>>, %arg7: memref<1x16xf32, #tpu.memory_space<vmem>>, %arg8: memref<16x64xf32, #tpu.memory_space<vmem>>, %arg9: memref<1x64xf32, #tpu.memory_space<vmem>>, %arg10: memref<1x16x16x64xf32, #tpu.memory_space<vmem>>, %arg11: memref<256x144xf32, #tpu.memory_space<vmem>>) attributes {dimension_semantics = [#tpu.dimension_semantics<parallel>], iteration_bounds = array<i64: 2>, scalar_prefetch = 0 : i64, scratch_operands = 1 : i64, tpu.core_type = #tpu.core_type<tc>, window_params = [{transform_indices = @transform_0, window_bounds = array<i64: 1, 16, 16, 64>}, {pipeline_mode = #tpu.pipeline_mode<synchronous>, transform_indices = @transform_1, window_bounds = array<i64: 256, 1>}, {pipeline_mode = #tpu.pipeline_mode<synchronous>, transform_indices = @transform_2, window_bounds = array<i64: 256, 1>}, {pipeline_mode = #tpu.pipeline_mode<synchronous>, transform_indices = @transform_3, window_bounds = array<i64: 64, 16>}, {pipeline_mode = #tpu.pipeline_mode<synchronous>, transform_indices = @transform_4, window_bounds = array<i64: 1, 16>}, {pipeline_mode = #tpu.pipeline_mode<synchronous>, transform_indices = @transform_5, window_bounds = array<i64: 144, 16>}, {pipeline_mode = #tpu.pipeline_mode<synchronous>, transform_indices = @transform_6, window_bounds = array<i64: 1, 16>}, {pipeline_mode = #tpu.pipeline_mode<synchronous>, transform_indices = @transform_7, window_bounds = array<i64: 16, 64>}, {pipeline_mode = #tpu.pipeline_mode<synchronous>, transform_indices = @transform_8, window_bounds = array<i64: 1, 64>}, {transform_indices = @transform_9, window_bounds = array<i64: 1, 16, 16, 64>}]} {
    %c0 = arith.constant 0 : index
    %c0_0 = arith.constant 0 : index
    %c0_1 = arith.constant 0 : index
    %c0_2 = arith.constant 0 : index
    %0 = vector.load %arg1[%c0, %c0_0, %c0_1, %c0_2] : memref<1x16x16x64xf32, #tpu.memory_space<vmem>>, vector<1x16x16x64xf32>
    %1 = vector.shape_cast %0 : vector<1x16x16x64xf32> to vector<256x64xf32>
    %c0_3 = arith.constant 0 : index
    %c0_4 = arith.constant 0 : index
    %2 = vector.load %arg4[%c0_3, %c0_4] : memref<64x16xf32, #tpu.memory_space<vmem>>, vector<64x16xf32>
    %cst = arith.constant dense<0.000000e+00> : vector<256x16xf32>
    %3 = tpu.matmul %1, %2, %cst {dimension_numbers = #tpu.dot_dimension_numbers<[1], [0], [0], [1], [0, 0, 1, 1], [], []>} : vector<256x64xf32>, vector<64x16xf32>, vector<256x16xf32> -> vector<256x16xf32>
    %c0_5 = arith.constant 0 : index
    %c0_6 = arith.constant 0 : index
    %4 = vector.load %arg5[%c0_5, %c0_6] : memref<1x16xf32, #tpu.memory_space<vmem>>, vector<1x16xf32>
    %5 = vector.broadcast %4 : vector<1x16xf32> to vector<256x16xf32>
    %6 = arith.addf %3, %5 : vector<256x16xf32>
    %cst_7 = arith.constant 0.000000e+00 : f32
    %7 = vector.broadcast %cst_7 : f32 to vector<256x16xf32>
    %8 = arith.maximumf %6, %7 : vector<256x16xf32>
    %c0_8 = arith.constant 0 : index
    %c0_9 = arith.constant 0 : index
    %9 = vector.load %arg2[%c0_8, %c0_9] : memref<256x1xi32, #tpu.memory_space<vmem>>, vector<256x1xi32>
    %c0_10 = arith.constant 0 : index
    %c0_11 = arith.constant 0 : index
    %10 = vector.load %arg3[%c0_10, %c0_11] : memref<256x1xi32, #tpu.memory_space<vmem>>, vector<256x1xi32>
    %c1_i32 = arith.constant 1 : i32
    %11 = vector.broadcast %c1_i32 : i32 to vector<256x1xi32>
    %12 = arith.cmpi sge, %9, %11 : vector<256x1xi32>
    %c14_i32 = arith.constant 14 : i32
    %13 = vector.broadcast %c14_i32 : i32 to vector<256x1xi32>
    %14 = arith.cmpi sle, %9, %13 : vector<256x1xi32>
    %c1_i32_12 = arith.constant 1 : i32
    %15 = vector.broadcast %c1_i32_12 : i32 to vector<256x1xi32>
    %16 = arith.cmpi sge, %10, %15 : vector<256x1xi32>
    %c14_i32_13 = arith.constant 14 : i32
    %17 = vector.broadcast %c14_i32_13 : i32 to vector<256x1xi32>
    %18 = arith.cmpi sle, %10, %17 : vector<256x1xi32>
    %c17_i32 = arith.constant 17 : i32
    %19 = tpu.dynamic_rotate %8 by %c17_i32 dim 0 : vector<256x16xf32>, i32 -> vector<256x16xf32>
    %20 = arith.andi %12, %16 : vector<256x1xi1>
    %cst_14 = arith.constant 0.000000e+00 : f32
    %21 = vector.shape_cast %20 : vector<256x1xi1> to vector<256x1xi1>
    %22 = vector.broadcast %21 : vector<256x1xi1> to vector<256x16xi1>
    %23 = vector.broadcast %cst_14 : f32 to vector<256x16xf32>
    %24 = arith.select %22, %19, %23 : vector<256x16xi1>, vector<256x16xf32>
    %c0_15 = arith.constant 0 : index
    %c0_16 = arith.constant 0 : index
    %25 = vector.load %arg11[%c0_15, %c0_16] : memref<256x144xf32, #tpu.memory_space<vmem>>, vector<256x16xf32>
    tpu.vector_store %arg11[%c0_15, %c0_16], %24 {strides = array<i32>} : memref<256x144xf32, #tpu.memory_space<vmem>>, vector<256x16xf32>,
    %c16_i32 = arith.constant 16 : i32
    %26 = tpu.dynamic_rotate %8 by %c16_i32 dim 0 : vector<256x16xf32>, i32 -> vector<256x16xf32>
    %cst_17 = arith.constant 0.000000e+00 : f32
    %27 = vector.shape_cast %12 : vector<256x1xi1> to vector<256x1xi1>
    %28 = vector.broadcast %27 : vector<256x1xi1> to vector<256x16xi1>
    %29 = vector.broadcast %cst_17 : f32 to vector<256x16xf32>
    %30 = arith.select %28, %26, %29 : vector<256x16xi1>, vector<256x16xf32>
    %c0_18 = arith.constant 0 : index
    %c16 = arith.constant 16 : index
    %31 = vector.load %arg11[%c0_18, %c16] : memref<256x144xf32, #tpu.memory_space<vmem>>, vector<256x16xf32>
    tpu.vector_store %arg11[%c0_18, %c16], %30 {strides = array<i32>} : memref<256x144xf32, #tpu.memory_space<vmem>>, vector<256x16xf32>,
    %c15_i32 = arith.constant 15 : i32
    %32 = tpu.dynamic_rotate %8 by %c15_i32 dim 0 : vector<256x16xf32>, i32 -> vector<256x16xf32>
    %33 = arith.andi %12, %18 : vector<256x1xi1>
    %cst_19 = arith.constant 0.000000e+00 : f32
    %34 = vector.shape_cast %33 : vector<256x1xi1> to vector<256x1xi1>
    %35 = vector.broadcast %34 : vector<256x1xi1> to vector<256x16xi1>
    %36 = vector.broadcast %cst_19 : f32 to vector<256x16xf32>
    %37 = arith.select %35, %32, %36 : vector<256x16xi1>, vector<256x16xf32>
    %c0_20 = arith.constant 0 : index
    %c32 = arith.constant 32 : index
    %38 = vector.load %arg11[%c0_20, %c32] : memref<256x144xf32, #tpu.memory_space<vmem>>, vector<256x16xf32>
    tpu.vector_store %arg11[%c0_20, %c32], %37 {strides = array<i32>} : memref<256x144xf32, #tpu.memory_space<vmem>>, vector<256x16xf32>,
    %c1_i32_21 = arith.constant 1 : i32
    %39 = tpu.dynamic_rotate %8 by %c1_i32_21 dim 0 : vector<256x16xf32>, i32 -> vector<256x16xf32>
    %cst_22 = arith.constant 0.000000e+00 : f32
    %40 = vector.shape_cast %16 : vector<256x1xi1> to vector<256x1xi1>
    %41 = vector.broadcast %40 : vector<256x1xi1> to vector<256x16xi1>
    %42 = vector.broadcast %cst_22 : f32 to vector<256x16xf32>
    %43 = arith.select %41, %39, %42 : vector<256x16xi1>, vector<256x16xf32>
    %c0_23 = arith.constant 0 : index
    %c48 = arith.constant 48 : index
    %44 = vector.load %arg11[%c0_23, %c48] : memref<256x144xf32, #tpu.memory_space<vmem>>, vector<256x16xf32>
    tpu.vector_store %arg11[%c0_23, %c48], %43 {strides = array<i32>} : memref<256x144xf32, #tpu.memory_space<vmem>>, vector<256x16xf32>,
    %c0_24 = arith.constant 0 : index
    %c64 = arith.constant 64 : index
    %45 = vector.load %arg11[%c0_24, %c64] : memref<256x144xf32, #tpu.memory_space<vmem>>, vector<256x16xf32>
    tpu.vector_store %arg11[%c0_24, %c64], %8 {strides = array<i32>} : memref<256x144xf32, #tpu.memory_space<vmem>>, vector<256x16xf32>,
    %c255_i32 = arith.constant 255 : i32
    %46 = tpu.dynamic_rotate %8 by %c255_i32 dim 0 : vector<256x16xf32>, i32 -> vector<256x16xf32>
    %cst_25 = arith.constant 0.000000e+00 : f32
    %47 = vector.shape_cast %18 : vector<256x1xi1> to vector<256x1xi1>
    %48 = vector.broadcast %47 : vector<256x1xi1> to vector<256x16xi1>
    %49 = vector.broadcast %cst_25 : f32 to vector<256x16xf32>
    %50 = arith.select %48, %46, %49 : vector<256x16xi1>, vector<256x16xf32>
    %c0_26 = arith.constant 0 : index
    %c80 = arith.constant 80 : index
    %51 = vector.load %arg11[%c0_26, %c80] : memref<256x144xf32, #tpu.memory_space<vmem>>, vector<256x16xf32>
    tpu.vector_store %arg11[%c0_26, %c80], %50 {strides = array<i32>} : memref<256x144xf32, #tpu.memory_space<vmem>>, vector<256x16xf32>,
    %c241_i32 = arith.constant 241 : i32
    %52 = tpu.dynamic_rotate %8 by %c241_i32 dim 0 : vector<256x16xf32>, i32 -> vector<256x16xf32>
    %53 = arith.andi %14, %16 : vector<256x1xi1>
    %cst_27 = arith.constant 0.000000e+00 : f32
    %54 = vector.shape_cast %53 : vector<256x1xi1> to vector<256x1xi1>
    %55 = vector.broadcast %54 : vector<256x1xi1> to vector<256x16xi1>
    %56 = vector.broadcast %cst_27 : f32 to vector<256x16xf32>
    %57 = arith.select %55, %52, %56 : vector<256x16xi1>, vector<256x16xf32>
    %c0_28 = arith.constant 0 : index
    %c96 = arith.constant 96 : index
    %58 = vector.load %arg11[%c0_28, %c96] : memref<256x144xf32, #tpu.memory_space<vmem>>, vector<256x16xf32>
    tpu.vector_store %arg11[%c0_28, %c96], %57 {strides = array<i32>} : memref<256x144xf32, #tpu.memory_space<vmem>>, vector<256x16xf32>,
    %c240_i32 = arith.constant 240 : i32
    %59 = tpu.dynamic_rotate %8 by %c240_i32 dim 0 : vector<256x16xf32>, i32 -> vector<256x16xf32>
    %cst_29 = arith.constant 0.000000e+00 : f32
    %60 = vector.shape_cast %14 : vector<256x1xi1> to vector<256x1xi1>
    %61 = vector.broadcast %60 : vector<256x1xi1> to vector<256x16xi1>
    %62 = vector.broadcast %cst_29 : f32 to vector<256x16xf32>
    %63 = arith.select %61, %59, %62 : vector<256x16xi1>, vector<256x16xf32>
    %c0_30 = arith.constant 0 : index
    %c112 = arith.constant 112 : index
    %64 = vector.load %arg11[%c0_30, %c112] : memref<256x144xf32, #tpu.memory_space<vmem>>, vector<256x16xf32>
    tpu.vector_store %arg11[%c0_30, %c112], %63 {strides = array<i32>} : memref<256x144xf32, #tpu.memory_space<vmem>>, vector<256x16xf32>,
    %c239_i32 = arith.constant 239 : i32
    %65 = tpu.dynamic_rotate %8 by %c239_i32 dim 0 : vector<256x16xf32>, i32 -> vector<256x16xf32>
    %66 = arith.andi %14, %18 : vector<256x1xi1>
    %cst_31 = arith.constant 0.000000e+00 : f32
    %67 = vector.shape_cast %66 : vector<256x1xi1> to vector<256x1xi1>
    %68 = vector.broadcast %67 : vector<256x1xi1> to vector<256x16xi1>
    %69 = vector.broadcast %cst_31 : f32 to vector<256x16xf32>
    %70 = arith.select %68, %65, %69 : vector<256x16xi1>, vector<256x16xf32>
    %c0_32 = arith.constant 0 : index
    %c128 = arith.constant 128 : index
    %71 = vector.load %arg11[%c0_32, %c128] : memref<256x144xf32, #tpu.memory_space<vmem>>, vector<256x16xf32>
    tpu.vector_store %arg11[%c0_32, %c128], %70 {strides = array<i32>} : memref<256x144xf32, #tpu.memory_space<vmem>>, vector<256x16xf32>,
    %c0_33 = arith.constant 0 : index
    %c0_34 = arith.constant 0 : index
    %72 = vector.load %arg11[%c0_33, %c0_34] : memref<256x144xf32, #tpu.memory_space<vmem>>, vector<256x144xf32>
    %c0_35 = arith.constant 0 : index
    %c0_36 = arith.constant 0 : index
    %73 = vector.load %arg6[%c0_35, %c0_36] : memref<144x16xf32, #tpu.memory_space<vmem>>, vector<144x16xf32>
    %cst_37 = arith.constant dense<0.000000e+00> : vector<256x16xf32>
    %74 = tpu.matmul %72, %73, %cst_37 {dimension_numbers = #tpu.dot_dimension_numbers<[1], [0], [0], [1], [0, 0, 1, 1], [], []>} : vector<256x144xf32>, vector<144x16xf32>, vector<256x16xf32> -> vector<256x16xf32>
    %c0_38 = arith.constant 0 : index
    %c0_39 = arith.constant 0 : index
    %75 = vector.load %arg7[%c0_38, %c0_39] : memref<1x16xf32, #tpu.memory_space<vmem>>, vector<1x16xf32>
    %76 = vector.broadcast %75 : vector<1x16xf32> to vector<256x16xf32>
    %77 = arith.addf %74, %76 : vector<256x16xf32>
    %cst_40 = arith.constant 0.000000e+00 : f32
    %78 = vector.broadcast %cst_40 : f32 to vector<256x16xf32>
    %79 = arith.maximumf %77, %78 : vector<256x16xf32>
    %c0_41 = arith.constant 0 : index
    %c0_42 = arith.constant 0 : index
    %80 = vector.load %arg8[%c0_41, %c0_42] : memref<16x64xf32, #tpu.memory_space<vmem>>, vector<16x64xf32>
    %cst_43 = arith.constant dense<0.000000e+00> : vector<256x64xf32>
    %81 = tpu.matmul %79, %80, %cst_43 {dimension_numbers = #tpu.dot_dimension_numbers<[1], [0], [0], [1], [0, 0, 1, 1], [], []>} : vector<256x16xf32>, vector<16x64xf32>, vector<256x64xf32> -> vector<256x64xf32>
    %c0_44 = arith.constant 0 : index
    %c0_45 = arith.constant 0 : index
    %c0_46 = arith.constant 0 : index
    %c0_47 = arith.constant 0 : index
    %82 = vector.load %arg1[%c0_44, %c0_45, %c0_46, %c0_47] : memref<1x16x16x64xf32, #tpu.memory_space<vmem>>, vector<1x16x16x64xf32>
    %83 = vector.shape_cast %82 : vector<1x16x16x64xf32> to vector<256x64xf32>
    %c0_48 = arith.constant 0 : index
    %c0_49 = arith.constant 0 : index
    %84 = vector.load %arg9[%c0_48, %c0_49] : memref<1x64xf32, #tpu.memory_space<vmem>>, vector<1x64xf32>
    %85 = vector.broadcast %84 : vector<1x64xf32> to vector<256x64xf32>
    %86 = arith.addf %81, %85 : vector<256x64xf32>
    %87 = arith.addf %86, %83 : vector<256x64xf32>
    %cst_50 = arith.constant 0.000000e+00 : f32
    %88 = vector.broadcast %cst_50 : f32 to vector<256x64xf32>
    %89 = arith.maximumf %87, %88 : vector<256x64xf32>
    %90 = vector.shape_cast %89 : vector<256x64xf32> to vector<1x16x16x64xf32>
    %c0_51 = arith.constant 0 : index
    %c0_52 = arith.constant 0 : index
    %c0_53 = arith.constant 0 : index
    %c0_54 = arith.constant 0 : index
    %91 = vector.load %arg10[%c0_51, %c0_52, %c0_53, %c0_54] : memref<1x16x16x64xf32, #tpu.memory_space<vmem>>, vector<1x16x16x64xf32>
    tpu.vector_store %arg10[%c0_51, %c0_52, %c0_53, %c0_54], %90 {strides = array<i32>} : memref<1x16x16x64xf32, #tpu.memory_space<vmem>>, vector<1x16x16x64xf32>,
    return
  }
  func.func @transform_0(%arg0: i32) -> (i32, i32, i32, i32) {
    %c0_i32 = arith.constant 0 : i32
    %c0_i32_0 = arith.constant 0 : i32
    %c0_i32_1 = arith.constant 0 : i32
    %c0_i32_2 = arith.constant 0 : i32
    return %arg0, %c0_i32, %c0_i32_0, %c0_i32_1 : i32, i32, i32, i32
  }
  func.func @transform_1(%arg0: i32) -> (i32, i32) {
    %c0_i32 = arith.constant 0 : i32
    %c0_i32_0 = arith.constant 0 : i32
    %c0_i32_1 = arith.constant 0 : i32
    return %c0_i32, %c0_i32_0 : i32, i32
  }
  func.func @transform_2(%arg0: i32) -> (i32, i32) {
    %c0_i32 = arith.constant 0 : i32
    %c0_i32_0 = arith.constant 0 : i32
    %c0_i32_1 = arith.constant 0 : i32
    return %c0_i32, %c0_i32_0 : i32, i32
  }
  func.func @transform_3(%arg0: i32) -> (i32, i32) {
    %c0_i32 = arith.constant 0 : i32
    %c0_i32_0 = arith.constant 0 : i32
    %c0_i32_1 = arith.constant 0 : i32
    return %c0_i32, %c0_i32_0 : i32, i32
  }
  func.func @transform_4(%arg0: i32) -> (i32, i32) {
    %c0_i32 = arith.constant 0 : i32
    %c0_i32_0 = arith.constant 0 : i32
    %c0_i32_1 = arith.constant 0 : i32
    return %c0_i32, %c0_i32_0 : i32, i32
  }
  func.func @transform_5(%arg0: i32) -> (i32, i32) {
    %c0_i32 = arith.constant 0 : i32
    %c0_i32_0 = arith.constant 0 : i32
    %c0_i32_1 = arith.constant 0 : i32
    return %c0_i32, %c0_i32_0 : i32, i32
  }
  func.func @transform_6(%arg0: i32) -> (i32, i32) {
    %c0_i32 = arith.constant 0 : i32
    %c0_i32_0 = arith.constant 0 : i32
    %c0_i32_1 = arith.constant 0 : i32
    return %c0_i32, %c0_i32_0 : i32, i32
  }
  func.func @transform_7(%arg0: i32) -> (i32, i32) {
    %c0_i32 = arith.constant 0 : i32
    %c0_i32_0 = arith.constant 0 : i32
    %c0_i32_1 = arith.constant 0 : i32
    return %c0_i32, %c0_i32_0 : i32, i32
  }
  func.func @transform_8(%arg0: i32) -> (i32, i32) {
    %c0_i32 = arith.constant 0 : i32
    %c0_i32_0 = arith.constant 0 : i32
    %c0_i32_1 = arith.constant 0 : i32
    return %c0_i32, %c0_i32_0 : i32, i32
  }
  func.func @transform_9(%arg0: i32) -> (i32, i32, i32, i32) {
    %c0_i32 = arith.constant 0 : i32
    %c0_i32_0 = arith.constant 0 : i32
    %c0_i32_1 = arith.constant 0 : i32
    %c0_i32_2 = arith.constant 0 : i32
    return %arg0, %c0_i32, %c0_i32_0, %c0_i32_1 : i32, i32, i32, i32
  }
}

</mosaic_0001>

<llo_original>
// kernel: tpu_custom_call.1
$region0: #{tpu_custom_call.1}
  #allocation0 [shape = 'u32[]', space=smem, size = 0x4, offset = 0x4, fixed_abs, tag = 'smem constant byte address 0x4 - core index']
  #allocation1 [shape = 'u32[72,128]{1,0:T(1,128)}', space=vmem, size = 0x9000, scoped, tag = 'internal scratch']
  #allocation2 [shape = 'f32[256,144]{1,0:T(8,128)}', space=vmem, size = 0x40000, scoped, tag = 'scratch operand']
  %s0 = inlined_call_operand.vmem [shape: f32[2,16,16,64], index: 0, kind: input, shape index: {}]
  %s1 = inlined_call_operand.vmem [shape: s32[256,1], index: 1, kind: input, shape index: {}]
  %s2 = inlined_call_operand.vmem [shape: s32[256,1], index: 2, kind: input, shape index: {}]
  %s3 = inlined_call_operand.vmem [shape: f32[64,16], index: 3, kind: input, shape index: {}]
  %s4 = inlined_call_operand.vmem [shape: f32[1,16], index: 4, kind: input, shape index: {}]
  %s5 = inlined_call_operand.vmem [shape: f32[144,16], index: 5, kind: input, shape index: {}]
  %s6 = inlined_call_operand.vmem [shape: f32[1,16], index: 6, kind: input, shape index: {}]
  %s7 = inlined_call_operand.vmem [shape: f32[16,64], index: 7, kind: input, shape index: {}]
  %s8 = inlined_call_operand.vmem [shape: f32[1,64], index: 8, kind: input, shape index: {}]
  %s9 = inlined_call_operand.hbm [shape: f32[2,16,16,64], index: 9, kind: output, shape index: {}]
  %s10 = sld [smem:[#allocation0]]
  $region69: #{tpu_custom_call.1} parent=0
    _
  %s12 = ssub.s32 1, %s10
  %s13 = scalar_select 0, %s12, %s10
  $region1: #{tpu_custom_call.1} parent=0
    #allocation3 [shape = 'u8[262144]{0}', space=vmem, size = 0x40000, scoped, tag = 'output window, operand 0']
    #allocation4 [shape = 's32[2]{0}', space=sflag, size = 0x8, scoped, tag = 'scoped memory for tpu_custom_call.1']
    %14 = vsyncpa [#allocation4], 0
    %s15 = scalar_lea.sflag [#allocation4], 1
    %16 = vsyncpa %s15, 0
    loop: start=0, step=1, limit=4
    $region2: #{tpu_custom_call.1} parent=1 // loop_pre_header
      _
    $region3: #{tpu_custom_call.1} parent=1 // loop_header
      %s18 = sphi 0, %s22
      %p19 = scmp.ge.s32.totalorder %s18, 4
      %s28 = sphi 0, %s30
      %s31 = sphi 0, %s28
      %s32 = sphi 0, %s31
      %s48 = sphi 0, %s32
      %s52 = sphi 0, %s52
      %s54 = sphi 0, %s52
      %s55 = sphi 0, %s54
      %s69 = sphi 0, %s55
      %s73 = sphi 0, %s73
      %s75 = sphi 0, %s73
      %s76 = sphi 0, %s75
      %s90 = sphi 0, %s76
      %s94 = sphi 0, %s94
      %s96 = sphi 0, %s94
      %s97 = sphi 0, %s96
      %s111 = sphi 0, %s97
      %s115 = sphi 0, %s115
      %s117 = sphi 0, %s115
      %s118 = sphi 0, %s117
      %s132 = sphi 0, %s118
      %s136 = sphi 0, %s136
      %s138 = sphi 0, %s136
      %s139 = sphi 0, %s138
      %s153 = sphi 0, %s139
      %s157 = sphi 0, %s157
      %s159 = sphi 0, %s157
      %s160 = sphi 0, %s159
      %s174 = sphi 0, %s160
      %s178 = sphi 0, %s178
      %s180 = sphi 0, %s178
      %s181 = sphi 0, %s180
      %s195 = sphi 0, %s181
      %s199 = sphi 0, %s199
      %s201 = sphi 0, %s199
      %s202 = sphi 0, %s201
      %s216 = sphi 0, %s202
      %s222 = sphi 0, %s224
      %s225 = sphi 0, %s222
      %s226 = sphi 0, %s225
      %s242 = sphi 0, %s226
    $region4: #{tpu_custom_call.1} parent=1 // loop_header_branch
      %21 = sbr.rel (%p19) target = $region8
    $region5: #{tpu_custom_call.1} parent=1 // loop_body
      %s23 = ssub.s32 %s18, 1
      %s24 = ssub.s32 %s18, 2
      %s25 = sadd.s32 %s18, 1
      %s26 = ssub.s32 %s18, %s25
      %p27 = scmp.eq.s32.totalorder %s26, 0
      %s29 = sadd.s32 %s28, 1
      %s30 = scalar_select %p27, %s28, %s29
      %p33 = pneg %p27
      %p34 = scmp.eq.s32.totalorder %s18, 1
      %p35 = por %p33, %p34
      %p36 = scmp.ne.s32.totalorder %s28, %s31
      %p37 = scmp.eq.s32.totalorder %s18, 0
      %p38 = por %p36, %p37
      %p39 = scmp.ne.s32.totalorder %s28, %s31
      %p40 = scmp.eq.s32.totalorder %s23, 1
      %p41 = por %p39, %p40
      %p42 = scmp.ne.s32.totalorder %s31, %s32
      %p43 = scmp.eq.s32.totalorder %s23, 0
      %p44 = por %p42, %p43
      %p45 = scmp.ne.s32.totalorder %s31, %s32
      %p46 = scmp.eq.s32.totalorder %s24, 1
      %p47 = por %p45, %p46
      %p49 = scmp.ne.s32.totalorder %s32, %s48
      %p50 = scmp.eq.s32.totalorder %s24, 0
      %p51 = por %p49, %p50
      %s53 = sadd.s32 %s52, 1
      %p56 = scmp.eq.s32.totalorder %s18, 1
      %p57 = scmp.ne.s32.totalorder %s52, %s54
      %p58 = scmp.eq.s32.totalorder %s18, 0
      %p59 = por %p57, %p58
      %p60 = scmp.ne.s32.totalorder %s52, %s54
      %p61 = scmp.eq.s32.totalorder %s23, 1
      %p62 = por %p60, %p61
      %p63 = scmp.ne.s32.totalorder %s54, %s55
      %p64 = scmp.eq.s32.totalorder %s23, 0
      %p65 = por %p63, %p64
      %p66 = scmp.ne.s32.totalorder %s54, %s55
      %p67 = scmp.eq.s32.totalorder %s24, 1
      %p68 = por %p66, %p67
      %p70 = scmp.ne.s32.totalorder %s55, %s69
      %p71 = scmp.eq.s32.totalorder %s24, 0
      %p72 = por %p70, %p71
      %s74 = sadd.s32 %s73, 1
      %p77 = scmp.eq.s32.totalorder %s18, 1
      %p78 = scmp.ne.s32.totalorder %s73, %s75
      %p79 = scmp.eq.s32.totalorder %s18, 0
      %p80 = por %p78, %p79
      %p81 = scmp.ne.s32.totalorder %s73, %s75
      %p82 = scmp.eq.s32.totalorder %s23, 1
      %p83 = por %p81, %p82
      %p84 = scmp.ne.s32.totalorder %s75, %s76
      %p85 = scmp.eq.s32.totalorder %s23, 0
      %p86 = por %p84, %p85
      %p87 = scmp.ne.s32.totalorder %s75, %s76
      %p88 = scmp.eq.s32.totalorder %s24, 1
      %p89 = por %p87, %p88
      %p91 = scmp.ne.s32.totalorder %s76, %s90
      %p92 = scmp.eq.s32.totalorder %s24, 0
      %p93 = por %p91, %p92
      %s95 = sadd.s32 %s94, 1
      %p98 = scmp.eq.s32.totalorder %s18, 1
      %p99 = scmp.ne.s32.totalorder %s94, %s96
      %p100 = scmp.eq.s32.totalorder %s18, 0
      %p101 = por %p99, %p100
      %p102 = scmp.ne.s32.totalorder %s94, %s96
      %p103 = scmp.eq.s32.totalorder %s23, 1
      %p104 = por %p102, %p103
      %p105 = scmp.ne.s32.totalorder %s96, %s97
      %p106 = scmp.eq.s32.totalorder %s23, 0
      %p107 = por %p105, %p106
      %p108 = scmp.ne.s32.totalorder %s96, %s97
      %p109 = scmp.eq.s32.totalorder %s24, 1
      %p110 = por %p108, %p109
      %p112 = scmp.ne.s32.totalorder %s97, %s111
      %p113 = scmp.eq.s32.totalorder %s24, 0
      %p114 = por %p112, %p113
      %s116 = sadd.s32 %s115, 1
      %p119 = scmp.eq.s32.totalorder %s18, 1
      %p120 = scmp.ne.s32.totalorder %s115, %s117
      %p121 = scmp.eq.s32.totalorder %s18, 0
      %p122 = por %p120, %p121
      %p123 = scmp.ne.s32.totalorder %s115, %s117
      %p124 = scmp.eq.s32.totalorder %s23, 1
      %p125 = por %p123, %p124
      %p126 = scmp.ne.s32.totalorder %s117, %s118
      %p127 = scmp.eq.s32.totalorder %s23, 0
      %p128 = por %p126, %p127
      %p129 = scmp.ne.s32.totalorder %s117, %s118
      %p130 = scmp.eq.s32.totalorder %s24, 1
      %p131 = por %p129, %p130
      %p133 = scmp.ne.s32.totalorder %s118, %s132
      %p134 = scmp.eq.s32.totalorder %s24, 0
      %p135 = por %p133, %p134
      %s137 = sadd.s32 %s136, 1
      %p140 = scmp.eq.s32.totalorder %s18, 1
      %p141 = scmp.ne.s32.totalorder %s136, %s138
      %p142 = scmp.eq.s32.totalorder %s18, 0
      %p143 = por %p141, %p142
      %p144 = scmp.ne.s32.totalorder %s136, %s138
      %p145 = scmp.eq.s32.totalorder %s23, 1
      %p146 = por %p144, %p145
      %p147 = scmp.ne.s32.totalorder %s138, %s139
      %p148 = scmp.eq.s32.totalorder %s23, 0
      %p149 = por %p147, %p148
      %p150 = scmp.ne.s32.totalorder %s138, %s139
      %p151 = scmp.eq.s32.totalorder %s24, 1
      %p152 = por %p150, %p151
      %p154 = scmp.ne.s32.totalorder %s139, %s153
      %p155 = scmp.eq.s32.totalorder %s24, 0
      %p156 = por %p154, %p155
      %s158 = sadd.s32 %s157, 1
      %p161 = scmp.eq.s32.totalorder %s18, 1
      %p162 = scmp.ne.s32.totalorder %s157, %s159
      %p163 = scmp.eq.s32.totalorder %s18, 0
      %p164 = por %p162, %p163
      %p165 = scmp.ne.s32.totalorder %s157, %s159
      %p166 = scmp.eq.s32.totalorder %s23, 1
      %p167 = por %p165, %p166
      %p168 = scmp.ne.s32.totalorder %s159, %s160
      %p169 = scmp.eq.s32.totalorder %s23, 0
      %p170 = por %p168, %p169
      %p171 = scmp.ne.s32.totalorder %s159, %s160
      %p172 = scmp.eq.s32.totalorder %s24, 1
      %p173 = por %p171, %p172
      %p175 = scmp.ne.s32.totalorder %s160, %s174
      %p176 = scmp.eq.s32.totalorder %s24, 0
      %p177 = por %p175, %p176
      %s179 = sadd.s32 %s178, 1
      %p182 = scmp.eq.s32.totalorder %s18, 1
      %p183 = scmp.ne.s32.totalorder %s178, %s180
      %p184 = scmp.eq.s32.totalorder %s18, 0
      %p185 = por %p183, %p184
      %p186 = scmp.ne.s32.totalorder %s178, %s180
      %p187 = scmp.eq.s32.totalorder %s23, 1
      %p188 = por %p186, %p187
      %p189 = scmp.ne.s32.totalorder %s180, %s181
      %p190 = scmp.eq.s32.totalorder %s23, 0
      %p191 = por %p189, %p190
      %p192 = scmp.ne.s32.totalorder %s180, %s181
      %p193 = scmp.eq.s32.totalorder %s24, 1
      %p194 = por %p192, %p193
      %p196 = scmp.ne.s32.totalorder %s181, %s195
      %p197 = scmp.eq.s32.totalorder %s24, 0
      %p198 = por %p196, %p197
      %s200 = sadd.s32 %s199, 1
      %p203 = scmp.eq.s32.totalorder %s18, 1
      %p204 = scmp.ne.s32.totalorder %s199, %s201
      %p205 = scmp.eq.s32.totalorder %s18, 0
      %p206 = por %p204, %p205
      %p207 = scmp.ne.s32.totalorder %s199, %s201
      %p208 = scmp.eq.s32.totalorder %s23, 1
      %p209 = por %p207, %p208
      %p210 = scmp.ne.s32.totalorder %s201, %s202
      %p211 = scmp.eq.s32.totalorder %s23, 0
      %p212 = por %p210, %p211
      %p213 = scmp.ne.s32.totalorder %s201, %s202
      %p214 = scmp.eq.s32.totalorder %s24, 1
      %p215 = por %p213, %p214
      %p217 = scmp.ne.s32.totalorder %s202, %s216
      %p218 = scmp.eq.s32.totalorder %s24, 0
      %p219 = por %p217, %p218
      %s220 = ssub.s32 %s18, %s25
      %p221 = scmp.eq.s32.totalorder %s220, 0
      %s223 = sadd.s32 %s222, 1
      %s224 = scalar_select %p221, %s222, %s223
      %p227 = pneg %p221
      %p228 = scmp.eq.s32.totalorder %s18, 1
      %p229 = por %p227, %p228
      %p230 = scmp.ne.s32.totalorder %s222, %s225
      %p231 = scmp.eq.s32.totalorder %s18, 0
      %p232 = por %p230, %p231
      %p233 = scmp.ne.s32.totalorder %s222, %s225
      %p234 = scmp.eq.s32.totalorder %s23, 1
      %p235 = por %p233, %p234
      %p236 = scmp.ne.s32.totalorder %s225, %s226
      %p237 = scmp.eq.s32.totalorder %s23, 0
      %p238 = por %p236, %p237
      %p239 = scmp.ne.s32.totalorder %s225, %s226
      %p240 = scmp.eq.s32.totalorder %s24, 1
      %p241 = por %p239, %p240
      %p243 = scmp.ne.s32.totalorder %s226, %s242
      %p244 = scmp.eq.s32.totalorder %s24, 0
      %p245 = por %p243, %p244
      %p246 = scmp.le.s32.totalorder 1, %s18
      %p247 = scmp.lt.s32.totalorder %s18, 3
      %p248 = pnand %p246, %p247
      %p249 = pneg %p248
      // Predicated region
      $region9: #{tpu_custom_call.1} parent=5 // pred_check
        _
      $region10: #{tpu_custom_call.1} parent=5 // pred_check_branch
        %251 = sbr.rel (%p248) target = $region12
      $region11: #{tpu_custom_call.1} parent=5 // pred_region
        %s252 = ssub.s32 %s18, 1
        // Predicated region
        $region13: #{tpu_custom_call.1} parent=11 // pred_check
          %p253 = pneg %p65
        $region14: #{tpu_custom_call.1} parent=11 // pred_check_branch
          %255 = sbr.rel (%p253) target = $region16
        $region15: #{tpu_custom_call.1} parent=11 // pred_region
          _
        $region16: #{tpu_custom_call.1} parent=11 // pred_fallthru
          _
        // Predicated region
        $region17: #{tpu_custom_call.1} parent=11 // pred_check
          %p256 = pneg %p86
        $region18: #{tpu_custom_call.1} parent=11 // pred_check_branch
          %258 = sbr.rel (%p256) target = $region20
        $region19: #{tpu_custom_call.1} parent=11 // pred_region
          _
        $region20: #{tpu_custom_call.1} parent=11 // pred_fallthru
          _
        // Predicated region
        $region21: #{tpu_custom_call.1} parent=11 // pred_check
          %p259 = pneg %p107
        $region22: #{tpu_custom_call.1} parent=11 // pred_check_branch
          %261 = sbr.rel (%p259) target = $region24
        $region23: #{tpu_custom_call.1} parent=11 // pred_region
          _
        $region24: #{tpu_custom_call.1} parent=11 // pred_fallthru
          _
        // Predicated region
        $region25: #{tpu_custom_call.1} parent=11 // pred_check
          %p262 = pneg %p128
        $region26: #{tpu_custom_call.1} parent=11 // pred_check_branch
          %264 = sbr.rel (%p262) target = $region28
        $region27: #{tpu_custom_call.1} parent=11 // pred_region
          _
        $region28: #{tpu_custom_call.1} parent=11 // pred_fallthru
          _
        // Predicated region
        $region29: #{tpu_custom_call.1} parent=11 // pred_check
          %p265 = pneg %p149
        $region30: #{tpu_custom_call.1} parent=11 // pred_check_branch
          %267 = sbr.rel (%p265) target = $region32
        $region31: #{tpu_custom_call.1} parent=11 // pred_region
          _
        $region32: #{tpu_custom_call.1} parent=11 // pred_fallthru
          _
        // Predicated region
        $region33: #{tpu_custom_call.1} parent=11 // pred_check
          %p268 = pneg %p170
        $region34: #{tpu_custom_call.1} parent=11 // pred_check_branch
          %270 = sbr.rel (%p268) target = $region36
        $region35: #{tpu_custom_call.1} parent=11 // pred_region
          _
        $region36: #{tpu_custom_call.1} parent=11 // pred_fallthru
          _
        // Predicated region
        $region37: #{tpu_custom_call.1} parent=11 // pred_check
          %p271 = pneg %p191
        $region38: #{tpu_custom_call.1} parent=11 // pred_check_branch
          %273 = sbr.rel (%p271) target = $region40
        $region39: #{tpu_custom_call.1} parent=11 // pred_region
          _
        $region40: #{tpu_custom_call.1} parent=11 // pred_fallthru
          _
        // Predicated region
        $region41: #{tpu_custom_call.1} parent=11 // pred_check
          %p274 = pneg %p212
        $region42: #{tpu_custom_call.1} parent=11 // pred_check_branch
          %276 = sbr.rel (%p274) target = $region44
        $region43: #{tpu_custom_call.1} parent=11 // pred_region
          _
        $region44: #{tpu_custom_call.1} parent=11 // pred_fallthru
          _
      $region12: #{tpu_custom_call.1} parent=5 // pred_fallthru
        _
      %p277 = scmp.lt.s32.totalorder %s18, 2
      // Predicated region
      $region45: #{tpu_custom_call.1} parent=5 // pred_check
        %p278 = pneg %p277
      $region46: #{tpu_custom_call.1} parent=5 // pred_check_branch
        %280 = sbr.rel (%p278) target = $region48
      $region47: #{tpu_custom_call.1} parent=5 // pred_region
        // Predicated region
        $region49: #{tpu_custom_call.1} parent=47 // pred_check
          %p281 = pneg %p38
        $region50: #{tpu_custom_call.1} parent=47 // pred_check_branch
          %283 = sbr.rel (%p281) target = $region52
        $region51: #{tpu_custom_call.1} parent=47 // pred_region
          %p284 = scmp.lt.s32.totalorder %s18, 1
          %s285 = scalar_select %p284, %s18, 1
          %s286 = smul.addr %s285, 32
          %s287 = smul.addr %s286, 8
          %s288 = scalar_lea.vmem %s0, %s287
        $region52: #{tpu_custom_call.1} parent=47 // pred_fallthru
          _
      $region48: #{tpu_custom_call.1} parent=5 // pred_fallthru
        _
      %p289 = scmp.le.s32.totalorder 1, %s18
      %p290 = scmp.lt.s32.totalorder %s18, 3
      %p291 = pnand %p289, %p290
      %p292 = pneg %p291
      // Predicated region
      $region53: #{tpu_custom_call.1} parent=5 // pred_check
        _
      $region54: #{tpu_custom_call.1} parent=5 // pred_check_branch
        %294 = sbr.rel (%p291) target = $region56
      $region55: #{tpu_custom_call.1} parent=5 // pred_region
        %s295 = ssub.s32 %s18, 1
        %p296 = scmp.lt.s32.totalorder %s23, 1
        %s297 = scalar_select %p296, %s23, 1
        %s298 = smul.addr %s297, 32
        %s299 = smul.addr %s298, 8
        %s300 = scalar_lea.vmem %s0, %s299
        %p301 = pneg %p44
        %p302 = pneg %p41
        %p303 = pneg %p65
        %p304 = pneg %p62
        %p305 = pneg %p86
        %p306 = pneg %p83
        %p307 = pneg %p107
        %p308 = pneg %p104
        %p309 = pneg %p128
        %p310 = pneg %p125
        %p311 = pneg %p149
        %p312 = pneg %p146
        %p313 = pneg %p170
        %p314 = pneg %p167
        %p315 = pneg %p191
        %p316 = pneg %p188
        %p317 = pneg %p212
        %p318 = pneg %p209
        %p319 = pneg %p238
        %p320 = pneg %p235
        %s321 = sand.u32 %s225, 1
        %s322 = scalar_lea.sflag [#allocation4], %s321
        %s323 = sand.u32 %s225, 1
        %s324 = smul.addr %s323, 256
        %s325 = scalar_lea.vmem [#allocation3], %s324
        %p326 = scmp.lt.s32.totalorder %s23, 1
        %s327 = scalar_select %p326, %s23, 1
        %s328 = smul.addr %s327, 32
        %s329 = smul.addr %s328, 8
        %s330 = scalar_lea.vmem %s0, %s329
        %v331 = vld [vmem:[%s330] sm:$0xff]
        %v332 = vld [vmem:[%s330 + $0x8] sm:$0xff]
        %v333 = vld [vmem:[%s330 + $0x10] sm:$0xff]
        %v334 = vld [vmem:[%s330 + $0x18] sm:$0xff]
        %v335 = vld [vmem:[%s330 + $0x20] sm:$0xff]
        %v336 = vld [vmem:[%s330 + $0x28] sm:$0xff]
        %v337 = vld [vmem:[%s330 + $0x30] sm:$0xff]
        %v338 = vld [vmem:[%s330 + $0x38] sm:$0xff]
        %v339 = vld [vmem:[%s330 + $0x40] sm:$0xff]
        %v340 = vld [vmem:[%s330 + $0x48] sm:$0xff]
        %v341 = vld [vmem:[%s330 + $0x50] sm:$0xff]
        %v342 = vld [vmem:[%s330 + $0x58] sm:$0xff]
        %v343 = vld [vmem:[%s330 + $0x60] sm:$0xff]
        %v344 = vld [vmem:[%s330 + $0x68] sm:$0xff]
        %v345 = vld [vmem:[%s330 + $0x70] sm:$0xff]
        %v346 = vld [vmem:[%s330 + $0x78] sm:$0xff]
        %v347 = vld [vmem:[%s330 + $0x80] sm:$0xff]
        %v348 = vld [vmem:[%s330 + $0x88] sm:$0xff]
        %v349 = vld [vmem:[%s330 + $0x90] sm:$0xff]
        %v350 = vld [vmem:[%s330 + $0x98] sm:$0xff]
        %v351 = vld [vmem:[%s330 + $0xa0] sm:$0xff]
        %v352 = vld [vmem:[%s330 + $0xa8] sm:$0xff]
        %v353 = vld [vmem:[%s330 + $0xb0] sm:$0xff]
        %v354 = vld [vmem:[%s330 + $0xb8] sm:$0xff]
        %v355 = vld [vmem:[%s330 + $0xc0] sm:$0xff]
        %v356 = vld [vmem:[%s330 + $0xc8] sm:$0xff]
        %v357 = vld [vmem:[%s330 + $0xd0] sm:$0xff]
        %v358 = vld [vmem:[%s330 + $0xd8] sm:$0xff]
        %v359 = vld [vmem:[%s330 + $0xe0] sm:$0xff]
        %v360 = vld [vmem:[%s330 + $0xe8] sm:$0xff]
        %v361 = vld [vmem:[%s330 + $0xf0] sm:$0xff]
        %v362 = vld [vmem:[%s330 + $0xf8] sm:$0xff]
        %v363 = vld [vmem:[%s3] sm:$0xff]
        %v364 = vld [vmem:[%s3 + $0x8] sm:$0xff]
        %v365 = vld [vmem:[%s3 + $0x10] sm:$0xff]
        %v366 = vld [vmem:[%s3 + $0x18] sm:$0xff]
        %v367 = vld [vmem:[%s3 + $0x20] sm:$0xff]
        %v368 = vld [vmem:[%s3 + $0x28] sm:$0xff]
        %v369 = vld [vmem:[%s3 + $0x30] sm:$0xff]
        %v370 = vld [vmem:[%s3 + $0x38] sm:$0xff]
        %v371 = vld [vmem:[%s4] sm:$0x1]
        %v373 = vperm.slane %v371, 0
        %vm375 = vcmask 523264
        %v377 = vsel %vm375, %v331, 0
        %v380 = vsel %vm375, %v332, 0
        %v383 = vsel %vm375, %v333, 0
        %v386 = vsel %vm375, %v334, 0
        %v389 = vsel %vm375, %v335, 0
        %v392 = vsel %vm375, %v336, 0
        %v395 = vsel %vm375, %v337, 0
        %v398 = vsel %vm375, %v338, 0
        %v401 = vsel %vm375, %v339, 0
        %v404 = vsel %vm375, %v340, 0
        %v407 = vsel %vm375, %v341, 0
        %v410 = vsel %vm375, %v342, 0
        %v413 = vsel %vm375, %v343, 0
        %v416 = vsel %vm375, %v344, 0
        %v419 = vsel %vm375, %v345, 0
        %v422 = vsel %vm375, %v346, 0
        %v425 = vsel %vm375, %v347, 0
        %v428 = vsel %vm375, %v348, 0
        %v431 = vsel %vm375, %v349, 0
        %v434 = vsel %vm375, %v350, 0
        %v437 = vsel %vm375, %v351, 0
        %v440 = vsel %vm375, %v352, 0
        %v443 = vsel %vm375, %v353, 0
        %v446 = vsel %vm375, %v354, 0
        %v449 = vsel %vm375, %v355, 0
        %v452 = vsel %vm375, %v356, 0
        %v455 = vsel %vm375, %v357, 0
        %v458 = vsel %vm375, %v358, 0
        %v461 = vsel %vm375, %v359, 0
        %v464 = vsel %vm375, %v360, 0
        %v467 = vsel %vm375, %v361, 0
        %v470 = vsel %vm375, %v362, 0
        %472 = vmatpush.msra.mxu0 0.0
        %473 = vmatpush.msra.mxu0 0.0
        %474 = vmatpush.msra.mxu0 0.0
        %475 = vmatpush.msra.mxu0 0.0
        %476 = vmatpush.msra.mxu0 0.0
        %477 = vmatpush.msra.mxu0 0.0
        %478 = vmatpush.msra.mxu0 0.0
        %479 = vmatpush.msra.mxu0 0.0
        %480 = vmatpush.msra.mxu0 %v370
        %481 = vmatpush.msra.mxu0 %v369
        %482 = vmatpush.msra.mxu0 %v368
        %483 = vmatpush.msra.mxu0 %v367
        %484 = vmatpush.msra.mxu0 %v366
        %485 = vmatpush.msra.mxu0 %v365
        %486 = vmatpush.msra.mxu0 %v364
        %487 = vmatpush.msra.mxu0 %v363
        %488 = vmatmul.f32.gmra.mxu0 %v377
        %v489 = vpop.f32.mrf.mxu0
        %v490 = vadd.f32 %v373, %v489
        %491 = vmatmul.f32.gmra.mxu0 %v380
        %v492 = vpop.f32.mrf.mxu0
        %v493 = vadd.f32 %v373, %v492
        %494 = vmatmul.f32.gmra.mxu0 %v383
        %v495 = vpop.f32.mrf.mxu0
        %v496 = vadd.f32 %v373, %v495
        %497 = vmatmul.f32.gmra.mxu0 %v386
        %v498 = vpop.f32.mrf.mxu0
        %v499 = vadd.f32 %v373, %v498
        %500 = vmatmul.f32.gmra.mxu0 %v389
        %v501 = vpop.f32.mrf.mxu0
        %v502 = vadd.f32 %v373, %v501
        %503 = vmatmul.f32.gmra.mxu0 %v392
        %v504 = vpop.f32.mrf.mxu0
        %v505 = vadd.f32 %v373, %v504
        %506 = vmatmul.f32.gmra.mxu0 %v395
        %v507 = vpop.f32.mrf.mxu0
        %v508 = vadd.f32 %v373, %v507
        %509 = vmatmul.f32.gmra.mxu0 %v398
        %v510 = vpop.f32.mrf.mxu0
        %v511 = vadd.f32 %v373, %v510
        %512 = vmatmul.f32.gmra.mxu0 %v401
        %v513 = vpop.f32.mrf.mxu0
        %v514 = vadd.f32 %v373, %v513
        %515 = vmatmul.f32.gmra.mxu0 %v404
        %v516 = vpop.f32.mrf.mxu0
        %v517 = vadd.f32 %v373, %v516
        %518 = vmatmul.f32.gmra.mxu0 %v407
        %v519 = vpop.f32.mrf.mxu0
        %v520 = vadd.f32 %v373, %v519
        %521 = vmatmul.f32.gmra.mxu0 %v410
        %v522 = vpop.f32.mrf.mxu0
        %v523 = vadd.f32 %v373, %v522
        %524 = vmatmul.f32.gmra.mxu0 %v413
        %v525 = vpop.f32.mrf.mxu0
        %v526 = vadd.f32 %v373, %v525
        %527 = vmatmul.f32.gmra.mxu0 %v416
        %v528 = vpop.f32.mrf.mxu0
        %v529 = vadd.f32 %v373, %v528
        %530 = vmatmul.f32.gmra.mxu0 %v419
        %v531 = vpop.f32.mrf.mxu0
        %v532 = vadd.f32 %v373, %v531
        %533 = vmatmul.f32.gmra.mxu0 %v422
        %v534 = vpop.f32.mrf.mxu0
        %v535 = vadd.f32 %v373, %v534
        %536 = vmatmul.f32.gmra.mxu0 %v425
        %v537 = vpop.f32.mrf.mxu0
        %v538 = vadd.f32 %v373, %v537
        %539 = vmatmul.f32.gmra.mxu0 %v428
        %v540 = vpop.f32.mrf.mxu0
        %v541 = vadd.f32 %v373, %v540
        %542 = vmatmul.f32.gmra.mxu0 %v431
        %v543 = vpop.f32.mrf.mxu0
        %v544 = vadd.f32 %v373, %v543
        %545 = vmatmul.f32.gmra.mxu0 %v434
        %v546 = vpop.f32.mrf.mxu0
        %v547 = vadd.f32 %v373, %v546
        %548 = vmatmul.f32.gmra.mxu0 %v437
        %v549 = vpop.f32.mrf.mxu0
        %v550 = vadd.f32 %v373, %v549
        %551 = vmatmul.f32.gmra.mxu0 %v440
        %v552 = vpop.f32.mrf.mxu0
        %v553 = vadd.f32 %v373, %v552
        %554 = vmatmul.f32.gmra.mxu0 %v443
        %v555 = vpop.f32.mrf.mxu0
        %v556 = vadd.f32 %v373, %v555
        %557 = vmatmul.f32.gmra.mxu0 %v446
        %v558 = vpop.f32.mrf.mxu0
        %v559 = vadd.f32 %v373, %v558
        %560 = vmatmul.f32.gmra.mxu0 %v449
        %v561 = vpop.f32.mrf.mxu0
        %v562 = vadd.f32 %v373, %v561
        %563 = vmatmul.f32.gmra.mxu0 %v452
        %v564 = vpop.f32.mrf.mxu0
        %v565 = vadd.f32 %v373, %v564
        %566 = vmatmul.f32.gmra.mxu0 %v455
        %v567 = vpop.f32.mrf.mxu0
        %v568 = vadd.f32 %v373, %v567
        %569 = vmatmul.f32.gmra.mxu0 %v458
        %v570 = vpop.f32.mrf.mxu0
        %v571 = vadd.f32 %v373, %v570
        %572 = vmatmul.f32.gmra.mxu0 %v461
        %v573 = vpop.f32.mrf.mxu0
        %v574 = vadd.f32 %v373, %v573
        %575 = vmatmul.f32.gmra.mxu0 %v464
        %v576 = vpop.f32.mrf.mxu0
        %v577 = vadd.f32 %v373, %v576
        %578 = vmatmul.f32.gmra.mxu0 %v467
        %v579 = vpop.f32.mrf.mxu0
        %v580 = vadd.f32 %v373, %v579
        %581 = vmatmul.f32.gmra.mxu0 %v470
        %v582 = vpop.f32.mrf.mxu0
        %v583 = vadd.f32 %v373, %v582
        %584 = vdwg.mxu0
        %v585 = vmax.f32 %v490, 0.0
        %v586 = vmax.f32 %v493, 0.0
        %v587 = vmax.f32 %v496, 0.0
        %v588 = vmax.f32 %v499, 0.0
        %v589 = vmax.f32 %v502, 0.0
        %v590 = vmax.f32 %v505, 0.0
        %v591 = vmax.f32 %v508, 0.0
        %v592 = vmax.f32 %v511, 0.0
        %v593 = vmax.f32 %v514, 0.0
        %v594 = vmax.f32 %v517, 0.0
        %v595 = vmax.f32 %v520, 0.0
        %v596 = vmax.f32 %v523, 0.0
        %v597 = vmax.f32 %v526, 0.0
        %v598 = vmax.f32 %v529, 0.0
        %v599 = vmax.f32 %v532, 0.0
        %v600 = vmax.f32 %v535, 0.0
        %v601 = vmax.f32 %v538, 0.0
        %v602 = vmax.f32 %v541, 0.0
        %v603 = vmax.f32 %v544, 0.0
        %v604 = vmax.f32 %v547, 0.0
        %v605 = vmax.f32 %v550, 0.0
        %v606 = vmax.f32 %v553, 0.0
        %v607 = vmax.f32 %v556, 0.0
        %v608 = vmax.f32 %v559, 0.0
        %v609 = vmax.f32 %v562, 0.0
        %v610 = vmax.f32 %v565, 0.0
        %v611 = vmax.f32 %v568, 0.0
        %v612 = vmax.f32 %v571, 0.0
        %v613 = vmax.f32 %v574, 0.0
        %v614 = vmax.f32 %v577, 0.0
        %v615 = vmax.f32 %v580, 0.0
        %v616 = vmax.f32 %v583, 0.0
        %v617 = vld [vmem:[%s1] sm:$0xff]
        %v618 = vld [vmem:[%s1 + $0x8] sm:$0xff]
        %v619 = vld [vmem:[%s1 + $0x10] sm:$0xff]
        %v620 = vld [vmem:[%s1 + $0x18] sm:$0xff]
        %v621 = vld [vmem:[%s1 + $0x20] sm:$0xff]
        %v622 = vld [vmem:[%s1 + $0x28] sm:$0xff]
        %v623 = vld [vmem:[%s1 + $0x30] sm:$0xff]
        %v624 = vld [vmem:[%s1 + $0x38] sm:$0xff]
        %v625 = vld [vmem:[%s1 + $0x40] sm:$0xff]
        %v626 = vld [vmem:[%s1 + $0x48] sm:$0xff]
        %v627 = vld [vmem:[%s1 + $0x50] sm:$0xff]
        %v628 = vld [vmem:[%s1 + $0x58] sm:$0xff]
        %v629 = vld [vmem:[%s1 + $0x60] sm:$0xff]
        %v630 = vld [vmem:[%s1 + $0x68] sm:$0xff]
        %v631 = vld [vmem:[%s1 + $0x70] sm:$0xff]
        %v632 = vld [vmem:[%s1 + $0x78] sm:$0xff]
        %v633 = vld [vmem:[%s1 + $0x80] sm:$0xff]
        %v634 = vld [vmem:[%s1 + $0x88] sm:$0xff]
        %v635 = vld [vmem:[%s1 + $0x90] sm:$0xff]
        %v636 = vld [vmem:[%s1 + $0x98] sm:$0xff]
        %v637 = vld [vmem:[%s1 + $0xa0] sm:$0xff]
        %v638 = vld [vmem:[%s1 + $0xa8] sm:$0xff]
        %v639 = vld [vmem:[%s1 + $0xb0] sm:$0xff]
        %v640 = vld [vmem:[%s1 + $0xb8] sm:$0xff]
        %v641 = vld [vmem:[%s1 + $0xc0] sm:$0xff]
        %v642 = vld [vmem:[%s1 + $0xc8] sm:$0xff]
        %v643 = vld [vmem:[%s1 + $0xd0] sm:$0xff]
        %v644 = vld [vmem:[%s1 + $0xd8] sm:$0xff]
        %v645 = vld [vmem:[%s1 + $0xe0] sm:$0xff]
        %v646 = vld [vmem:[%s1 + $0xe8] sm:$0xff]
        %v647 = vld [vmem:[%s1 + $0xf0] sm:$0xff]
        %v648 = vld [vmem:[%s1 + $0xf8] sm:$0xff]
        %v649 = vld [vmem:[%s2] sm:$0xff]
        %v650 = vld [vmem:[%s2 + $0x8] sm:$0xff]
        %v651 = vld [vmem:[%s2 + $0x10] sm:$0xff]
        %v652 = vld [vmem:[%s2 + $0x18] sm:$0xff]
        %v653 = vld [vmem:[%s2 + $0x20] sm:$0xff]
        %v654 = vld [vmem:[%s2 + $0x28] sm:$0xff]
        %v655 = vld [vmem:[%s2 + $0x30] sm:$0xff]
        %v656 = vld [vmem:[%s2 + $0x38] sm:$0xff]
        %v657 = vld [vmem:[%s2 + $0x40] sm:$0xff]
        %v658 = vld [vmem:[%s2 + $0x48] sm:$0xff]
        %v659 = vld [vmem:[%s2 + $0x50] sm:$0xff]
        %v660 = vld [vmem:[%s2 + $0x58] sm:$0xff]
        %v661 = vld [vmem:[%s2 + $0x60] sm:$0xff]
        %v662 = vld [vmem:[%s2 + $0x68] sm:$0xff]
        %v663 = vld [vmem:[%s2 + $0x70] sm:$0xff]
        %v664 = vld [vmem:[%s2 + $0x78] sm:$0xff]
        %v665 = vld [vmem:[%s2 + $0x80] sm:$0xff]
        %v666 = vld [vmem:[%s2 + $0x88] sm:$0xff]
        %v667 = vld [vmem:[%s2 + $0x90] sm:$0xff]
        %v668 = vld [vmem:[%s2 + $0x98] sm:$0xff]
        %v669 = vld [vmem:[%s2 + $0xa0] sm:$0xff]
        %v670 = vld [vmem:[%s2 + $0xa8] sm:$0xff]
        %v671 = vld [vmem:[%s2 + $0xb0] sm:$0xff]
        %v672 = vld [vmem:[%s2 + $0xb8] sm:$0xff]
        %v673 = vld [vmem:[%s2 + $0xc0] sm:$0xff]
        %v674 = vld [vmem:[%s2 + $0xc8] sm:$0xff]
        %v675 = vld [vmem:[%s2 + $0xd0] sm:$0xff]
        %v676 = vld [vmem:[%s2 + $0xd8] sm:$0xff]
        %v677 = vld [vmem:[%s2 + $0xe0] sm:$0xff]
        %v678 = vld [vmem:[%s2 + $0xe8] sm:$0xff]
        %v679 = vld [vmem:[%s2 + $0xf0] sm:$0xff]
        %v680 = vld [vmem:[%s2 + $0xf8] sm:$0xff]
        %vm681 = vcmp.ge.s32.totalorder %v617, 1
        %vm682 = vcmp.ge.s32.totalorder %v618, 1
        %vm683 = vcmp.ge.s32.totalorder %v619, 1
        %vm684 = vcmp.ge.s32.totalorder %v620, 1
        %vm685 = vcmp.ge.s32.totalorder %v621, 1
        %vm686 = vcmp.ge.s32.totalorder %v622, 1
        %vm687 = vcmp.ge.s32.totalorder %v623, 1
        %vm688 = vcmp.ge.s32.totalorder %v624, 1
        %vm689 = vcmp.ge.s32.totalorder %v625, 1
        %vm690 = vcmp.ge.s32.totalorder %v626, 1
        %vm691 = vcmp.ge.s32.totalorder %v627, 1
        %vm692 = vcmp.ge.s32.totalorder %v628, 1
        %vm693 = vcmp.ge.s32.totalorder %v629, 1
        %vm694 = vcmp.ge.s32.totalorder %v630, 1
        %vm695 = vcmp.ge.s32.totalorder %v631, 1
        %vm696 = vcmp.ge.s32.totalorder %v632, 1
        %vm697 = vcmp.ge.s32.totalorder %v633, 1
        %vm698 = vcmp.ge.s32.totalorder %v634, 1
        %vm699 = vcmp.ge.s32.totalorder %v635, 1
        %vm700 = vcmp.ge.s32.totalorder %v636, 1
        %vm701 = vcmp.ge.s32.totalorder %v637, 1
        %vm702 = vcmp.ge.s32.totalorder %v638, 1
        %vm703 = vcmp.ge.s32.totalorder %v639, 1
        %vm704 = vcmp.ge.s32.totalorder %v640, 1
        %vm705 = vcmp.ge.s32.totalorder %v641, 1
        %vm706 = vcmp.ge.s32.totalorder %v642, 1
        %vm707 = vcmp.ge.s32.totalorder %v643, 1
        %vm708 = vcmp.ge.s32.totalorder %v644, 1
        %vm709 = vcmp.ge.s32.totalorder %v645, 1
        %vm710 = vcmp.ge.s32.totalorder %v646, 1
        %vm711 = vcmp.ge.s32.totalorder %v647, 1
        %vm712 = vcmp.ge.s32.totalorder %v648, 1
        %vm713 = vcmp.le.s32.totalorder %v617, 14
        %vm714 = vcmp.le.s32.totalorder %v618, 14
        %vm715 = vcmp.le.s32.totalorder %v619, 14
        %vm716 = vcmp.le.s32.totalorder %v620, 14
        %vm717 = vcmp.le.s32.totalorder %v621, 14
        %vm718 = vcmp.le.s32.totalorder %v622, 14
        %vm719 = vcmp.le.s32.totalorder %v623, 14
        %vm720 = vcmp.le.s32.totalorder %v624, 14
        %vm721 = vcmp.le.s32.totalorder %v625, 14
        %vm722 = vcmp.le.s32.totalorder %v626, 14
        %vm723 = vcmp.le.s32.totalorder %v627, 14
        %vm724 = vcmp.le.s32.totalorder %v628, 14
        %vm725 = vcmp.le.s32.totalorder %v629, 14
        %vm726 = vcmp.le.s32.totalorder %v630, 14
        %vm727 = vcmp.le.s32.totalorder %v631, 14
        %vm728 = vcmp.le.s32.totalorder %v632, 14
        %vm729 = vcmp.le.s32.totalorder %v633, 14
        %vm730 = vcmp.le.s32.totalorder %v634, 14
        %vm731 = vcmp.le.s32.totalorder %v635, 14
        %vm732 = vcmp.le.s32.totalorder %v636, 14
        %vm733 = vcmp.le.s32.totalorder %v637, 14
        %vm734 = vcmp.le.s32.totalorder %v638, 14
        %vm735 = vcmp.le.s32.totalorder %v639, 14
        %vm736 = vcmp.le.s32.totalorder %v640, 14
        %vm737 = vcmp.le.s32.totalorder %v641, 14
        %vm738 = vcmp.le.s32.totalorder %v642, 14
        %vm739 = vcmp.le.s32.totalorder %v643, 14
        %vm740 = vcmp.le.s32.totalorder %v644, 14
        %vm741 = vcmp.le.s32.totalorder %v645, 14
        %vm742 = vcmp.le.s32.totalorder %v646, 14
        %vm743 = vcmp.le.s32.totalorder %v647, 14
        %vm744 = vcmp.le.s32.totalorder %v648, 14
        %vm745 = vcmp.ge.s32.totalorder %v649, 1
        %vm746 = vcmp.ge.s32.totalorder %v650, 1
        %vm747 = vcmp.ge.s32.totalorder %v651, 1
        %vm748 = vcmp.ge.s32.totalorder %v652, 1
        %vm749 = vcmp.ge.s32.totalorder %v653, 1
        %vm750 = vcmp.ge.s32.totalorder %v654, 1
        %vm751 = vcmp.ge.s32.totalorder %v655, 1
        %vm752 = vcmp.ge.s32.totalorder %v656, 1
        %vm753 = vcmp.ge.s32.totalorder %v657, 1
        %vm754 = vcmp.ge.s32.totalorder %v658, 1
        %vm755 = vcmp.ge.s32.totalorder %v659, 1
        %vm756 = vcmp.ge.s32.totalorder %v660, 1
        %vm757 = vcmp.ge.s32.totalorder %v661, 1
        %vm758 = vcmp.ge.s32.totalorder %v662, 1
        %vm759 = vcmp.ge.s32.totalorder %v663, 1
        %vm760 = vcmp.ge.s32.totalorder %v664, 1
        %vm761 = vcmp.ge.s32.totalorder %v665, 1
        %vm762 = vcmp.ge.s32.totalorder %v666, 1
        %vm763 = vcmp.ge.s32.totalorder %v667, 1
        %vm764 = vcmp.ge.s32.totalorder %v668, 1
        %vm765 = vcmp.ge.s32.totalorder %v669, 1
        %vm766 = vcmp.ge.s32.totalorder %v670, 1
        %vm767 = vcmp.ge.s32.totalorder %v671, 1
        %vm768 = vcmp.ge.s32.totalorder %v672, 1
        %vm769 = vcmp.ge.s32.totalorder %v673, 1
        %vm770 = vcmp.ge.s32.totalorder %v674, 1
        %vm771 = vcmp.ge.s32.totalorder %v675, 1
        %vm772 = vcmp.ge.s32.totalorder %v676, 1
        %vm773 = vcmp.ge.s32.totalorder %v677, 1
        %vm774 = vcmp.ge.s32.totalorder %v678, 1
        %vm775 = vcmp.ge.s32.totalorder %v679, 1
        %vm776 = vcmp.ge.s32.totalorder %v680, 1
        %vm777 = vcmp.le.s32.totalorder %v649, 14
        %vm778 = vcmp.le.s32.totalorder %v650, 14
        %vm779 = vcmp.le.s32.totalorder %v651, 14
        %vm780 = vcmp.le.s32.totalorder %v652, 14
        %vm781 = vcmp.le.s32.totalorder %v653, 14
        %vm782 = vcmp.le.s32.totalorder %v654, 14
        %vm783 = vcmp.le.s32.totalorder %v655, 14
        %vm784 = vcmp.le.s32.totalorder %v656, 14
        %vm785 = vcmp.le.s32.totalorder %v657, 14
        %vm786 = vcmp.le.s32.totalorder %v658, 14
        %vm787 = vcmp.le.s32.totalorder %v659, 14
        %vm788 = vcmp.le.s32.totalorder %v660, 14
        %vm789 = vcmp.le.s32.totalorder %v661, 14
        %vm790 = vcmp.le.s32.totalorder %v662, 14
        %vm791 = vcmp.le.s32.totalorder %v663, 14
        %vm792 = vcmp.le.s32.totalorder %v664, 14
        %vm793 = vcmp.le.s32.totalorder %v665, 14
        %vm794 = vcmp.le.s32.totalorder %v666, 14
        %vm795 = vcmp.le.s32.totalorder %v667, 14
        %vm796 = vcmp.le.s32.totalorder %v668, 14
        %vm797 = vcmp.le.s32.totalorder %v669, 14
        %vm798 = vcmp.le.s32.totalorder %v670, 14
        %vm799 = vcmp.le.s32.totalorder %v671, 14
        %vm800 = vcmp.le.s32.totalorder %v672, 14
        %vm801 = vcmp.le.s32.totalorder %v673, 14
        %vm802 = vcmp.le.s32.totalorder %v674, 14
        %vm803 = vcmp.le.s32.totalorder %v675, 14
        %vm804 = vcmp.le.s32.totalorder %v676, 14
        %vm805 = vcmp.le.s32.totalorder %v677, 14
        %vm806 = vcmp.le.s32.totalorder %v678, 14
        %vm807 = vcmp.le.s32.totalorder %v679, 14
        %vm808 = vcmp.le.s32.totalorder %v680, 14
        %v809 = vrot.slane %v585, 7
        %v810 = vrot.slane %v586, 7
        %v811 = vrot.slane %v587, 7
        %v812 = vrot.slane %v588, 7
        %v813 = vrot.slane %v589, 7
        %v814 = vrot.slane %v590, 7
        %v815 = vrot.slane %v591, 7
        %v816 = vrot.slane %v592, 7
        %v817 = vrot.slane %v593, 7
        %v818 = vrot.slane %v594, 7
        %v819 = vrot.slane %v595, 7
        %v820 = vrot.slane %v596, 7
        %v821 = vrot.slane %v597, 7
        %v822 = vrot.slane %v598, 7
        %v823 = vrot.slane %v599, 7
        %v824 = vrot.slane %v600, 7
        %v825 = vrot.slane %v601, 7
        %v826 = vrot.slane %v602, 7
        %v827 = vrot.slane %v603, 7
        %v828 = vrot.slane %v604, 7
        %v829 = vrot.slane %v605, 7
        %v830 = vrot.slane %v606, 7
        %v831 = vrot.slane %v607, 7
        %v832 = vrot.slane %v608, 7
        %v833 = vrot.slane %v609, 7
        %v834 = vrot.slane %v610, 7
        %v835 = vrot.slane %v611, 7
        %v836 = vrot.slane %v612, 7
        %v837 = vrot.slane %v613, 7
        %v838 = vrot.slane %v614, 7
        %v839 = vrot.slane %v615, 7
        %v840 = vrot.slane %v616, 7
        %v841 = vlaneseq
        %v842 = vshrl.u32 %v841, 7
        %vm843 = vcmp.lt.s32.totalorder %v842, 1
        %v844 = vsel %vm843, %v839, %v840
        %v845 = vsel %vm843, %v838, %v839
        %v846 = vsel %vm843, %v837, %v838
        %v847 = vsel %vm843, %v836, %v837
        %v848 = vsel %vm843, %v835, %v836
        %v849 = vsel %vm843, %v834, %v835
        %v850 = vsel %vm843, %v833, %v834
        %v851 = vsel %vm843, %v832, %v833
        %v852 = vsel %vm843, %v831, %v832
        %v853 = vsel %vm843, %v830, %v831
        %v854 = vsel %vm843, %v829, %v830
        %v855 = vsel %vm843, %v828, %v829
        %v856 = vsel %vm843, %v827, %v828
        %v857 = vsel %vm843, %v826, %v827
        %v858 = vsel %vm843, %v825, %v826
        %v859 = vsel %vm843, %v824, %v825
        %v860 = vsel %vm843, %v823, %v824
        %v861 = vsel %vm843, %v822, %v823
        %v862 = vsel %vm843, %v821, %v822
        %v863 = vsel %vm843, %v820, %v821
        %v864 = vsel %vm843, %v819, %v820
        %v865 = vsel %vm843, %v818, %v819
        %v866 = vsel %vm843, %v817, %v818
        %v867 = vsel %vm843, %v816, %v817
        %v868 = vsel %vm843, %v815, %v816
        %v869 = vsel %vm843, %v814, %v815
        %v870 = vsel %vm843, %v813, %v814
        %v871 = vsel %vm843, %v812, %v813
        %v872 = vsel %vm843, %v811, %v812
        %v873 = vsel %vm843, %v810, %v811
        %v874 = vsel %vm843, %v809, %v810
        %v875 = vsel %vm843, %v840, %v809
        %vm876 = vmand %vm681, %vm745
        %vm877 = vmand %vm682, %vm746
        %vm878 = vmand %vm683, %vm747
        %vm879 = vmand %vm684, %vm748
        %vm880 = vmand %vm685, %vm749
        %vm881 = vmand %vm686, %vm750
        %vm882 = vmand %vm687, %vm751
        %vm883 = vmand %vm688, %vm752
        %vm884 = vmand %vm689, %vm753
        %vm885 = vmand %vm690, %vm754
        %vm886 = vmand %vm691, %vm755
        %vm887 = vmand %vm692, %vm756
        %vm888 = vmand %vm693, %vm757
        %vm889 = vmand %vm694, %vm758
        %vm890 = vmand %vm695, %vm759
        %vm891 = vmand %vm696, %vm760
        %vm892 = vmand %vm697, %vm761
        %vm893 = vmand %vm698, %vm762
        %vm894 = vmand %vm699, %vm763
        %vm895 = vmand %vm700, %vm764
        %vm896 = vmand %vm701, %vm765
        %vm897 = vmand %vm702, %vm766
        %vm898 = vmand %vm703, %vm767
        %vm899 = vmand %vm704, %vm768
        %vm900 = vmand %vm705, %vm769
        %vm901 = vmand %vm706, %vm770
        %vm902 = vmand %vm707, %vm771
        %vm903 = vmand %vm708, %vm772
        %vm904 = vmand %vm709, %vm773
        %vm905 = vmand %vm710, %vm774
        %vm906 = vmand %vm711, %vm775
        %vm907 = vmand %vm712, %vm776
        %v908 = vsel %vm876, 1, 0
        %v909 = vsel %vm877, 1, 0
        %v910 = vsel %vm878, 1, 0
        %v911 = vsel %vm879, 1, 0
        %v912 = vsel %vm880, 1, 0
        %v913 = vsel %vm881, 1, 0
        %v914 = vsel %vm882, 1, 0
        %v915 = vsel %vm883, 1, 0
        %v916 = vsel %vm884, 1, 0
        %v917 = vsel %vm885, 1, 0
        %v918 = vsel %vm886, 1, 0
        %v919 = vsel %vm887, 1, 0
        %v920 = vsel %vm888, 1, 0
        %v921 = vsel %vm889, 1, 0
        %v922 = vsel %vm890, 1, 0
        %v923 = vsel %vm891, 1, 0
        %v924 = vsel %vm892, 1, 0
        %v925 = vsel %vm893, 1, 0
        %v926 = vsel %vm894, 1, 0
        %v927 = vsel %vm895, 1, 0
        %v928 = vsel %vm896, 1, 0
        %v929 = vsel %vm897, 1, 0
        %v930 = vsel %vm898, 1, 0
        %v931 = vsel %vm899, 1, 0
        %v932 = vsel %vm900, 1, 0
        %v933 = vsel %vm901, 1, 0
        %v934 = vsel %vm902, 1, 0
        %v935 = vsel %vm903, 1, 0
        %v936 = vsel %vm904, 1, 0
        %v937 = vsel %vm905, 1, 0
        %v938 = vsel %vm906, 1, 0
        %v939 = vsel %vm907, 1, 0
        %940 = vset.pattern.permute.xlu0 0
        %941 = vperm.xlu0 %940, %v908
        %v942 = vpop.permute.xlu0 %941
        %943 = vset.pattern.permute.xlu0 0
        %944 = vperm.xlu0 %943, %v909
        %v945 = vpop.permute.xlu0 %944
        %946 = vset.pattern.permute.xlu0 0
        %947 = vperm.xlu0 %946, %v910
        %v948 = vpop.permute.xlu0 %947
        %949 = vset.pattern.permute.xlu0 0
        %950 = vperm.xlu0 %949, %v911
        %v951 = vpop.permute.xlu0 %950
        %952 = vset.pattern.permute.xlu0 0
        %953 = vperm.xlu0 %952, %v912
        %v954 = vpop.permute.xlu0 %953
        %955 = vset.pattern.permute.xlu0 0
        %956 = vperm.xlu0 %955, %v913
        %v957 = vpop.permute.xlu0 %956
        %958 = vset.pattern.permute.xlu0 0
        %959 = vperm.xlu0 %958, %v914
        %v960 = vpop.permute.xlu0 %959
        %961 = vset.pattern.permute.xlu0 0
        %962 = vperm.xlu0 %961, %v915
        %v963 = vpop.permute.xlu0 %962
        %964 = vset.pattern.permute.xlu0 0
        %965 = vperm.xlu0 %964, %v916
        %v966 = vpop.permute.xlu0 %965
        %967 = vset.pattern.permute.xlu0 0
        %968 = vperm.xlu0 %967, %v917
        %v969 = vpop.permute.xlu0 %968
        %970 = vset.pattern.permute.xlu0 0
        %971 = vperm.xlu0 %970, %v918
        %v972 = vpop.permute.xlu0 %971
        %973 = vset.pattern.permute.xlu0 0
        %974 = vperm.xlu0 %973, %v919
        %v975 = vpop.permute.xlu0 %974
        %976 = vset.pattern.permute.xlu0 0
        %977 = vperm.xlu0 %976, %v920
        %v978 = vpop.permute.xlu0 %977
        %979 = vset.pattern.permute.xlu0 0
        %980 = vperm.xlu0 %979, %v921
        %v981 = vpop.permute.xlu0 %980
        %982 = vset.pattern.permute.xlu0 0
        %983 = vperm.xlu0 %982, %v922
        %v984 = vpop.permute.xlu0 %983
        %985 = vset.pattern.permute.xlu0 0
        %986 = vperm.xlu0 %985, %v923
        %v987 = vpop.permute.xlu0 %986
        %988 = vset.pattern.permute.xlu0 0
        %989 = vperm.xlu0 %988, %v924
        %v990 = vpop.permute.xlu0 %989
        %991 = vset.pattern.permute.xlu0 0
        %992 = vperm.xlu0 %991, %v925
        %v993 = vpop.permute.xlu0 %992
        %994 = vset.pattern.permute.xlu0 0
        %995 = vperm.xlu0 %994, %v926
        %v996 = vpop.permute.xlu0 %995
        %997 = vset.pattern.permute.xlu0 0
        %998 = vperm.xlu0 %997, %v927
        %v999 = vpop.permute.xlu0 %998
        %1000 = vset.pattern.permute.xlu0 0
        %1001 = vperm.xlu0 %1000, %v928
        %v1002 = vpop.permute.xlu0 %1001
        %1003 = vset.pattern.permute.xlu0 0
        %1004 = vperm.xlu0 %1003, %v929
        %v1005 = vpop.permute.xlu0 %1004
        %1006 = vset.pattern.permute.xlu0 0
        %1007 = vperm.xlu0 %1006, %v930
        %v1008 = vpop.permute.xlu0 %1007
        %1009 = vset.pattern.permute.xlu0 0
        %1010 = vperm.xlu0 %1009, %v931
        %v1011 = vpop.permute.xlu0 %1010
        %1012 = vset.pattern.permute.xlu0 0
        %1013 = vperm.xlu0 %1012, %v932
        %v1014 = vpop.permute.xlu0 %1013
        %1015 = vset.pattern.permute.xlu0 0
        %1016 = vperm.xlu0 %1015, %v933
        %v1017 = vpop.permute.xlu0 %1016
        %1018 = vset.pattern.permute.xlu0 0
        %1019 = vperm.xlu0 %1018, %v934
        %v1020 = vpop.permute.xlu0 %1019
        %1021 = vset.pattern.permute.xlu0 0
        %1022 = vperm.xlu0 %1021, %v935
        %v1023 = vpop.permute.xlu0 %1022
        %1024 = vset.pattern.permute.xlu0 0
        %1025 = vperm.xlu0 %1024, %v936
        %v1026 = vpop.permute.xlu0 %1025
        %1027 = vset.pattern.permute.xlu0 0
        %1028 = vperm.xlu0 %1027, %v937
        %v1029 = vpop.permute.xlu0 %1028
        %1030 = vset.pattern.permute.xlu0 0
        %1031 = vperm.xlu0 %1030, %v938
        %v1032 = vpop.permute.xlu0 %1031
        %1033 = vset.pattern.permute.xlu0 0
        %1034 = vperm.xlu0 %1033, %v939
        %v1035 = vpop.permute.xlu0 %1034
        %vm1036 = vcmp.eq.s32.totalorder %v942, 1
        %vm1037 = vcmp.eq.s32.totalorder %v945, 1
        %vm1038 = vcmp.eq.s32.totalorder %v948, 1
        %vm1039 = vcmp.eq.s32.totalorder %v951, 1
        %vm1040 = vcmp.eq.s32.totalorder %v954, 1
        %vm1041 = vcmp.eq.s32.totalorder %v957, 1
        %vm1042 = vcmp.eq.s32.totalorder %v960, 1
        %vm1043 = vcmp.eq.s32.totalorder %v963, 1
        %vm1044 = vcmp.eq.s32.totalorder %v966, 1
        %vm1045 = vcmp.eq.s32.totalorder %v969, 1
        %vm1046 = vcmp.eq.s32.totalorder %v972, 1
        %vm1047 = vcmp.eq.s32.totalorder %v975, 1
        %vm1048 = vcmp.eq.s32.totalorder %v978, 1
        %vm1049 = vcmp.eq.s32.totalorder %v981, 1
        %vm1050 = vcmp.eq.s32.totalorder %v984, 1
        %vm1051 = vcmp.eq.s32.totalorder %v987, 1
        %vm1052 = vcmp.eq.s32.totalorder %v990, 1
        %vm1053 = vcmp.eq.s32.totalorder %v993, 1
        %vm1054 = vcmp.eq.s32.totalorder %v996, 1
        %vm1055 = vcmp.eq.s32.totalorder %v999, 1
        %vm1056 = vcmp.eq.s32.totalorder %v1002, 1
        %vm1057 = vcmp.eq.s32.totalorder %v1005, 1
        %vm1058 = vcmp.eq.s32.totalorder %v1008, 1
        %vm1059 = vcmp.eq.s32.totalorder %v1011, 1
        %vm1060 = vcmp.eq.s32.totalorder %v1014, 1
        %vm1061 = vcmp.eq.s32.totalorder %v1017, 1
        %vm1062 = vcmp.eq.s32.totalorder %v1020, 1
        %vm1063 = vcmp.eq.s32.totalorder %v1023, 1
        %vm1064 = vcmp.eq.s32.totalorder %v1026, 1
        %vm1065 = vcmp.eq.s32.totalorder %v1029, 1
        %vm1066 = vcmp.eq.s32.totalorder %v1032, 1
        %vm1067 = vcmp.eq.s32.totalorder %v1035, 1
        %v1068 = vsel %vm1036, %v845, 0.0
        %v1069 = vsel %vm1037, %v844, 0.0
        %v1070 = vsel %vm1038, %v875, 0.0
        %v1071 = vsel %vm1039, %v874, 0.0
        %v1072 = vsel %vm1040, %v873, 0.0
        %v1073 = vsel %vm1041, %v872, 0.0
        %v1074 = vsel %vm1042, %v871, 0.0
        %v1075 = vsel %vm1043, %v870, 0.0
        %v1076 = vsel %vm1044, %v869, 0.0
        %v1077 = vsel %vm1045, %v868, 0.0
        %v1078 = vsel %vm1046, %v867, 0.0
        %v1079 = vsel %vm1047, %v866, 0.0
        %v1080 = vsel %vm1048, %v865, 0.0
        %v1081 = vsel %vm1049, %v864, 0.0
        %v1082 = vsel %vm1050, %v863, 0.0
        %v1083 = vsel %vm1051, %v862, 0.0
        %v1084 = vsel %vm1052, %v861, 0.0
        %v1085 = vsel %vm1053, %v860, 0.0
        %v1086 = vsel %vm1054, %v859, 0.0
        %v1087 = vsel %vm1055, %v858, 0.0
        %v1088 = vsel %vm1056, %v857, 0.0
        %v1089 = vsel %vm1057, %v856, 0.0
        %v1090 = vsel %vm1058, %v855, 0.0
        %v1091 = vsel %vm1059, %v854, 0.0
        %v1092 = vsel %vm1060, %v853, 0.0
        %v1093 = vsel %vm1061, %v852, 0.0
        %v1094 = vsel %vm1062, %v851, 0.0
        %v1095 = vsel %vm1063, %v850, 0.0
        %v1096 = vsel %vm1064, %v849, 0.0
        %v1097 = vsel %vm1065, %v848, 0.0
        %v1098 = vsel %vm1066, %v847, 0.0
        %v1099 = vsel %vm1067, %v846, 0.0
        %vm1100 = vcmask 130048
        %1101 = vst.msk [vmem:[#allocation2] sm:$0xff] %vm1100, %v1068
        %1102 = vst.msk [vmem:[#allocation2 + $0x10] sm:$0xff] %vm1100, %v1069
        %1103 = vst.msk [vmem:[#allocation2 + $0x20] sm:$0xff] %vm1100, %v1070
        %1104 = vst.msk [vmem:[#allocation2 + $0x30] sm:$0xff] %vm1100, %v1071
        %1105 = vst.msk [vmem:[#allocation2 + $0x40] sm:$0xff] %vm1100, %v1072
        %1106 = vst.msk [vmem:[#allocation2 + $0x50] sm:$0xff] %vm1100, %v1073
        %1107 = vst.msk [vmem:[#allocation2 + $0x60] sm:$0xff] %vm1100, %v1074
        %1108 = vst.msk [vmem:[#allocation2 + $0x70] sm:$0xff] %vm1100, %v1075
        %1109 = vst.msk [vmem:[#allocation2 + $0x80] sm:$0xff] %vm1100, %v1076
        %1110 = vst.msk [vmem:[#allocation2 + $0x90] sm:$0xff] %vm1100, %v1077
        %1111 = vst.msk [vmem:[#allocation2 + $0xa0] sm:$0xff] %vm1100, %v1078
        %1112 = vst.msk [vmem:[#allocation2 + $0xb0] sm:$0xff] %vm1100, %v1079
        %1113 = vst.msk [vmem:[#allocation2 + $0xc0] sm:$0xff] %vm1100, %v1080
        %1114 = vst.msk [vmem:[#allocation2 + $0xd0] sm:$0xff] %vm1100, %v1081
        %1115 = vst.msk [vmem:[#allocation2 + $0xe0] sm:$0xff] %vm1100, %v1082
        %1116 = vst.msk [vmem:[#allocation2 + $0xf0] sm:$0xff] %vm1100, %v1083
        %1117 = vst.msk [vmem:[#allocation2 + $0x100] sm:$0xff] %vm1100, %v1084
        %1118 = vst.msk [vmem:[#allocation2 + $0x110] sm:$0xff] %vm1100, %v1085
        %1119 = vst.msk [vmem:[#allocation2 + $0x120] sm:$0xff] %vm1100, %v1086
        %1120 = vst.msk [vmem:[#allocation2 + $0x130] sm:$0xff] %vm1100, %v1087
        %1121 = vst.msk [vmem:[#allocation2 + $0x140] sm:$0xff] %vm1100, %v1088
        %1122 = vst.msk [vmem:[#allocation2 + $0x150] sm:$0xff] %vm1100, %v1089
        %1123 = vst.msk [vmem:[#allocation2 + $0x160] sm:$0xff] %vm1100, %v1090
        %1124 = vst.msk [vmem:[#allocation2 + $0x170] sm:$0xff] %vm1100, %v1091
        %1125 = vst.msk [vmem:[#allocation2 + $0x180] sm:$0xff] %vm1100, %v1092
        %1126 = vst.msk [vmem:[#allocation2 + $0x190] sm:$0xff] %vm1100, %v1093
        %1127 = vst.msk [vmem:[#allocation2 + $0x1a0] sm:$0xff] %vm1100, %v1094
        %1128 = vst.msk [vmem:[#allocation2 + $0x1b0] sm:$0xff] %vm1100, %v1095
        %1129 = vst.msk [vmem:[#allocation2 + $0x1c0] sm:$0xff] %vm1100, %v1096
        %1130 = vst.msk [vmem:[#allocation2 + $0x1d0] sm:$0xff] %vm1100, %v1097
        %1131 = vst.msk [vmem:[#allocation2 + $0x1e0] sm:$0xff] %vm1100, %v1098
        %1132 = vst.msk [vmem:[#allocation2 + $0x1f0] sm:$0xff] %vm1100, %v1099
        %v1133 = vsel %vm681, 1, 0
        %v1134 = vsel %vm682, 1, 0
        %v1135 = vsel %vm683, 1, 0
        %v1136 = vsel %vm684, 1, 0
        %v1137 = vsel %vm685, 1, 0
        %v1138 = vsel %vm686, 1, 0
        %v1139 = vsel %vm687, 1, 0
        %v1140 = vsel %vm688, 1, 0
        %v1141 = vsel %vm689, 1, 0
        %v1142 = vsel %vm690, 1, 0
        %v1143 = vsel %vm691, 1, 0
        %v1144 = vsel %vm692, 1, 0
        %v1145 = vsel %vm693, 1, 0
        %v1146 = vsel %vm694, 1, 0
        %v1147 = vsel %vm695, 1, 0
        %v1148 = vsel %vm696, 1, 0
        %v1149 = vsel %vm697, 1, 0
        %v1150 = vsel %vm698, 1, 0
        %v1151 = vsel %vm699, 1, 0
        %v1152 = vsel %vm700, 1, 0
        %v1153 = vsel %vm701, 1, 0
        %v1154 = vsel %vm702, 1, 0
        %v1155 = vsel %vm703, 1, 0
        %v1156 = vsel %vm704, 1, 0
        %v1157 = vsel %vm705, 1, 0
        %v1158 = vsel %vm706, 1, 0
        %v1159 = vsel %vm707, 1, 0
        %v1160 = vsel %vm708, 1, 0
        %v1161 = vsel %vm709, 1, 0
        %v1162 = vsel %vm710, 1, 0
        %v1163 = vsel %vm711, 1, 0
        %v1164 = vsel %vm712, 1, 0
        %1165 = vset.pattern.permute.xlu0 0
        %1166 = vperm.xlu0 %1165, %v1133
        %v1167 = vpop.permute.xlu0 %1166
        %1168 = vset.pattern.permute.xlu0 0
        %1169 = vperm.xlu0 %1168, %v1134
        %v1170 = vpop.permute.xlu0 %1169
        %1171 = vset.pattern.permute.xlu0 0
        %1172 = vperm.xlu0 %1171, %v1135
        %v1173 = vpop.permute.xlu0 %1172
        %1174 = vset.pattern.permute.xlu0 0
        %1175 = vperm.xlu0 %1174, %v1136
        %v1176 = vpop.permute.xlu0 %1175
        %1177 = vset.pattern.permute.xlu0 0
        %1178 = vperm.xlu0 %1177, %v1137
        %v1179 = vpop.permute.xlu0 %1178
        %1180 = vset.pattern.permute.xlu0 0
        %1181 = vperm.xlu0 %1180, %v1138
        %v1182 = vpop.permute.xlu0 %1181
        %1183 = vset.pattern.permute.xlu0 0
        %1184 = vperm.xlu0 %1183, %v1139
        %v1185 = vpop.permute.xlu0 %1184
        %1186 = vset.pattern.permute.xlu0 0
        %1187 = vperm.xlu0 %1186, %v1140
        %v1188 = vpop.permute.xlu0 %1187
        %1189 = vset.pattern.permute.xlu0 0
        %1190 = vperm.xlu0 %1189, %v1141
        %v1191 = vpop.permute.xlu0 %1190
        %1192 = vset.pattern.permute.xlu0 0
        %1193 = vperm.xlu0 %1192, %v1142
        %v1194 = vpop.permute.xlu0 %1193
        %1195 = vset.pattern.permute.xlu0 0
        %1196 = vperm.xlu0 %1195, %v1143
        %v1197 = vpop.permute.xlu0 %1196
        %1198 = vset.pattern.permute.xlu0 0
        %1199 = vperm.xlu0 %1198, %v1144
        %v1200 = vpop.permute.xlu0 %1199
        %1201 = vset.pattern.permute.xlu0 0
        %1202 = vperm.xlu0 %1201, %v1145
        %v1203 = vpop.permute.xlu0 %1202
        %1204 = vset.pattern.permute.xlu0 0
        %1205 = vperm.xlu0 %1204, %v1146
        %v1206 = vpop.permute.xlu0 %1205
        %1207 = vset.pattern.permute.xlu0 0
        %1208 = vperm.xlu0 %1207, %v1147
        %v1209 = vpop.permute.xlu0 %1208
        %1210 = vset.pattern.permute.xlu0 0
        %1211 = vperm.xlu0 %1210, %v1148
        %v1212 = vpop.permute.xlu0 %1211
        %1213 = vset.pattern.permute.xlu0 0
        %1214 = vperm.xlu0 %1213, %v1149
        %v1215 = vpop.permute.xlu0 %1214
        %1216 = vset.pattern.permute.xlu0 0
        %1217 = vperm.xlu0 %1216, %v1150
        %v1218 = vpop.permute.xlu0 %1217
        %1219 = vset.pattern.permute.xlu0 0
        %1220 = vperm.xlu0 %1219, %v1151
        %v1221 = vpop.permute.xlu0 %1220
        %1222 = vset.pattern.permute.xlu0 0
        %1223 = vperm.xlu0 %1222, %v1152
        %v1224 = vpop.permute.xlu0 %1223
        %1225 = vset.pattern.permute.xlu0 0
        %1226 = vperm.xlu0 %1225, %v1153
        %v1227 = vpop.permute.xlu0 %1226
        %1228 = vset.pattern.permute.xlu0 0
        %1229 = vperm.xlu0 %1228, %v1154
        %v1230 = vpop.permute.xlu0 %1229
        %1231 = vset.pattern.permute.xlu0 0
        %1232 = vperm.xlu0 %1231, %v1155
        %v1233 = vpop.permute.xlu0 %1232
        %1234 = vset.pattern.permute.xlu0 0
        %1235 = vperm.xlu0 %1234, %v1156
        %v1236 = vpop.permute.xlu0 %1235
        %1237 = vset.pattern.permute.xlu0 0
        %1238 = vperm.xlu0 %1237, %v1157
        %v1239 = vpop.permute.xlu0 %1238
        %1240 = vset.pattern.permute.xlu0 0
        %1241 = vperm.xlu0 %1240, %v1158
        %v1242 = vpop.permute.xlu0 %1241
        %1243 = vset.pattern.permute.xlu0 0
        %1244 = vperm.xlu0 %1243, %v1159
        %v1245 = vpop.permute.xlu0 %1244
        %1246 = vset.pattern.permute.xlu0 0
        %1247 = vperm.xlu0 %1246, %v1160
        %v1248 = vpop.permute.xlu0 %1247
        %1249 = vset.pattern.permute.xlu0 0
        %1250 = vperm.xlu0 %1249, %v1161
        %v1251 = vpop.permute.xlu0 %1250
        %1252 = vset.pattern.permute.xlu0 0
        %1253 = vperm.xlu0 %1252, %v1162
        %v1254 = vpop.permute.xlu0 %1253
        %1255 = vset.pattern.permute.xlu0 0
        %1256 = vperm.xlu0 %1255, %v1163
        %v1257 = vpop.permute.xlu0 %1256
        %1258 = vset.pattern.permute.xlu0 0
        %1259 = vperm.xlu0 %1258, %v1164
        %v1260 = vpop.permute.xlu0 %1259
        %vm1261 = vcmp.eq.s32.totalorder %v1167, 1
        %vm1262 = vcmp.eq.s32.totalorder %v1170, 1
        %vm1263 = vcmp.eq.s32.totalorder %v1173, 1
        %vm1264 = vcmp.eq.s32.totalorder %v1176, 1
        %vm1265 = vcmp.eq.s32.totalorder %v1179, 1
        %vm1266 = vcmp.eq.s32.totalorder %v1182, 1
        %vm1267 = vcmp.eq.s32.totalorder %v1185, 1
        %vm1268 = vcmp.eq.s32.totalorder %v1188, 1
        %vm1269 = vcmp.eq.s32.totalorder %v1191, 1
        %vm1270 = vcmp.eq.s32.totalorder %v1194, 1
        %vm1271 = vcmp.eq.s32.totalorder %v1197, 1
        %vm1272 = vcmp.eq.s32.totalorder %v1200, 1
        %vm1273 = vcmp.eq.s32.totalorder %v1203, 1
        %vm1274 = vcmp.eq.s32.totalorder %v1206, 1
        %vm1275 = vcmp.eq.s32.totalorder %v1209, 1
        %vm1276 = vcmp.eq.s32.totalorder %v1212, 1
        %vm1277 = vcmp.eq.s32.totalorder %v1215, 1
        %vm1278 = vcmp.eq.s32.totalorder %v1218, 1
        %vm1279 = vcmp.eq.s32.totalorder %v1221, 1
        %vm1280 = vcmp.eq.s32.totalorder %v1224, 1
        %vm1281 = vcmp.eq.s32.totalorder %v1227, 1
        %vm1282 = vcmp.eq.s32.totalorder %v1230, 1
        %vm1283 = vcmp.eq.s32.totalorder %v1233, 1
        %vm1284 = vcmp.eq.s32.totalorder %v1236, 1
        %vm1285 = vcmp.eq.s32.totalorder %v1239, 1
        %vm1286 = vcmp.eq.s32.totalorder %v1242, 1
        %vm1287 = vcmp.eq.s32.totalorder %v1245, 1
        %vm1288 = vcmp.eq.s32.totalorder %v1248, 1
        %vm1289 = vcmp.eq.s32.totalorder %v1251, 1
        %vm1290 = vcmp.eq.s32.totalorder %v1254, 1
        %vm1291 = vcmp.eq.s32.totalorder %v1257, 1
        %vm1292 = vcmp.eq.s32.totalorder %v1260, 1
        %v1293 = vsel %vm1261, %v615, 0.0
        %v1294 = vsel %vm1262, %v616, 0.0
        %v1295 = vsel %vm1263, %v585, 0.0
        %v1296 = vsel %vm1264, %v586, 0.0
        %v1297 = vsel %vm1265, %v587, 0.0
        %v1298 = vsel %vm1266, %v588, 0.0
        %v1299 = vsel %vm1267, %v589, 0.0
        %v1300 = vsel %vm1268, %v590, 0.0
        %v1301 = vsel %vm1269, %v591, 0.0
        %v1302 = vsel %vm1270, %v592, 0.0
        %v1303 = vsel %vm1271, %v593, 0.0
        %v1304 = vsel %vm1272, %v594, 0.0
        %v1305 = vsel %vm1273, %v595, 0.0
        %v1306 = vsel %vm1274, %v596, 0.0
        %v1307 = vsel %vm1275, %v597, 0.0
        %v1308 = vsel %vm1276, %v598, 0.0
        %v1309 = vsel %vm1277, %v599, 0.0
        %v1310 = vsel %vm1278, %v600, 0.0
        %v1311 = vsel %vm1279, %v601, 0.0
        %v1312 = vsel %vm1280, %v602, 0.0
        %v1313 = vsel %vm1281, %v603, 0.0
        %v1314 = vsel %vm1282, %v604, 0.0
        %v1315 = vsel %vm1283, %v605, 0.0
        %v1316 = vsel %vm1284, %v606, 0.0
        %v1317 = vsel %vm1285, %v607, 0.0
        %v1318 = vsel %vm1286, %v608, 0.0
        %v1319 = vsel %vm1287, %v609, 0.0
        %v1320 = vsel %vm1288, %v610, 0.0
        %v1321 = vsel %vm1289, %v611, 0.0
        %v1322 = vsel %vm1290, %v612, 0.0
        %v1323 = vsel %vm1291, %v613, 0.0
        %v1324 = vsel %vm1292, %v614, 0.0
        %1357 = vrot.lane.b32.xlu0 %v1293, 16
        %v1358 = vpop.permute.xlu0 %1357
        %1359 = vrot.lane.b32.xlu0 %v1294, 16
        %v1360 = vpop.permute.xlu0 %1359
        %1361 = vrot.lane.b32.xlu0 %v1295, 16
        %v1362 = vpop.permute.xlu0 %1361
        %1363 = vrot.lane.b32.xlu0 %v1296, 16
        %v1364 = vpop.permute.xlu0 %1363
        %1365 = vrot.lane.b32.xlu0 %v1297, 16
        %v1366 = vpop.permute.xlu0 %1365
        %1367 = vrot.lane.b32.xlu0 %v1298, 16
        %v1368 = vpop.permute.xlu0 %1367
        %1369 = vrot.lane.b32.xlu0 %v1299, 16
        %v1370 = vpop.permute.xlu0 %1369
        %1371 = vrot.lane.b32.xlu0 %v1300, 16
        %v1372 = vpop.permute.xlu0 %1371
        %1373 = vrot.lane.b32.xlu0 %v1301, 16
        %v1374 = vpop.permute.xlu0 %1373
        %1375 = vrot.lane.b32.xlu0 %v1302, 16
        %v1376 = vpop.permute.xlu0 %1375
        %1377 = vrot.lane.b32.xlu0 %v1303, 16
        %v1378 = vpop.permute.xlu0 %1377
        %1379 = vrot.lane.b32.xlu0 %v1304, 16
        %v1380 = vpop.permute.xlu0 %1379
        %1381 = vrot.lane.b32.xlu0 %v1305, 16
        %v1382 = vpop.permute.xlu0 %1381
        %1383 = vrot.lane.b32.xlu0 %v1306, 16
        %v1384 = vpop.permute.xlu0 %1383
        %1385 = vrot.lane.b32.xlu0 %v1307, 16
        %v1386 = vpop.permute.xlu0 %1385
        %1387 = vrot.lane.b32.xlu0 %v1308, 16
        %v1388 = vpop.permute.xlu0 %1387
        %1389 = vrot.lane.b32.xlu0 %v1309, 16
        %v1390 = vpop.permute.xlu0 %1389
        %1391 = vrot.lane.b32.xlu0 %v1310, 16
        %v1392 = vpop.permute.xlu0 %1391
        %1393 = vrot.lane.b32.xlu0 %v1311, 16
        %v1394 = vpop.permute.xlu0 %1393
        %1395 = vrot.lane.b32.xlu0 %v1312, 16
        %v1396 = vpop.permute.xlu0 %1395
        %1397 = vrot.lane.b32.xlu0 %v1313, 16
        %v1398 = vpop.permute.xlu0 %1397
        %1399 = vrot.lane.b32.xlu0 %v1314, 16
        %v1400 = vpop.permute.xlu0 %1399
        %1401 = vrot.lane.b32.xlu0 %v1315, 16
        %v1402 = vpop.permute.xlu0 %1401
        %1403 = vrot.lane.b32.xlu0 %v1316, 16
        %v1404 = vpop.permute.xlu0 %1403
        %1405 = vrot.lane.b32.xlu0 %v1317, 16
        %v1406 = vpop.permute.xlu0 %1405
        %1407 = vrot.lane.b32.xlu0 %v1318, 16
        %v1408 = vpop.permute.xlu0 %1407
        %1409 = vrot.lane.b32.xlu0 %v1319, 16
        %v1410 = vpop.permute.xlu0 %1409
        %1411 = vrot.lane.b32.xlu0 %v1320, 16
        %v1412 = vpop.permute.xlu0 %1411
        %1413 = vrot.lane.b32.xlu0 %v1321, 16
        %v1414 = vpop.permute.xlu0 %1413
        %1415 = vrot.lane.b32.xlu0 %v1322, 16
        %v1416 = vpop.permute.xlu0 %1415
        %1417 = vrot.lane.b32.xlu0 %v1323, 16
        %v1418 = vpop.permute.xlu0 %1417
        %1419 = vrot.lane.b32.xlu0 %v1324, 16
        %v1420 = vpop.permute.xlu0 %1419
        %vm1453 = vcmask 261248
        %1454 = vst.msk [vmem:[#allocation2] sm:$0xff] %vm1453, %v1358
        %1455 = vst.msk [vmem:[#allocation2 + $0x10] sm:$0xff] %vm1453, %v1360
        %1456 = vst.msk [vmem:[#allocation2 + $0x20] sm:$0xff] %vm1453, %v1362
        %1457 = vst.msk [vmem:[#allocation2 + $0x30] sm:$0xff] %vm1453, %v1364
        %1458 = vst.msk [vmem:[#allocation2 + $0x40] sm:$0xff] %vm1453, %v1366
        %1459 = vst.msk [vmem:[#allocation2 + $0x50] sm:$0xff] %vm1453, %v1368
        %1460 = vst.msk [vmem:[#allocation2 + $0x60] sm:$0xff] %vm1453, %v1370
        %1461 = vst.msk [vmem:[#allocation2 + $0x70] sm:$0xff] %vm1453, %v1372
        %1462 = vst.msk [vmem:[#allocation2 + $0x80] sm:$0xff] %vm1453, %v1374
        %1463 = vst.msk [vmem:[#allocation2 + $0x90] sm:$0xff] %vm1453, %v1376
        %1464 = vst.msk [vmem:[#allocation2 + $0xa0] sm:$0xff] %vm1453, %v1378
        %1465 = vst.msk [vmem:[#allocation2 + $0xb0] sm:$0xff] %vm1453, %v1380
        %1466 = vst.msk [vmem:[#allocation2 + $0xc0] sm:$0xff] %vm1453, %v1382
        %1467 = vst.msk [vmem:[#allocation2 + $0xd0] sm:$0xff] %vm1453, %v1384
        %1468 = vst.msk [vmem:[#allocation2 + $0xe0] sm:$0xff] %vm1453, %v1386
        %1469 = vst.msk [vmem:[#allocation2 + $0xf0] sm:$0xff] %vm1453, %v1388
        %1470 = vst.msk [vmem:[#allocation2 + $0x100] sm:$0xff] %vm1453, %v1390
        %1471 = vst.msk [vmem:[#allocation2 + $0x110] sm:$0xff] %vm1453, %v1392
        %1472 = vst.msk [vmem:[#allocation2 + $0x120] sm:$0xff] %vm1453, %v1394
        %1473 = vst.msk [vmem:[#allocation2 + $0x130] sm:$0xff] %vm1453, %v1396
        %1474 = vst.msk [vmem:[#allocation2 + $0x140] sm:$0xff] %vm1453, %v1398
        %1475 = vst.msk [vmem:[#allocation2 + $0x150] sm:$0xff] %vm1453, %v1400
        %1476 = vst.msk [vmem:[#allocation2 + $0x160] sm:$0xff] %vm1453, %v1402
        %1477 = vst.msk [vmem:[#allocation2 + $0x170] sm:$0xff] %vm1453, %v1404
        %1478 = vst.msk [vmem:[#allocation2 + $0x180] sm:$0xff] %vm1453, %v1406
        %1479 = vst.msk [vmem:[#allocation2 + $0x190] sm:$0xff] %vm1453, %v1408
        %1480 = vst.msk [vmem:[#allocation2 + $0x1a0] sm:$0xff] %vm1453, %v1410
        %1481 = vst.msk [vmem:[#allocation2 + $0x1b0] sm:$0xff] %vm1453, %v1412
        %1482 = vst.msk [vmem:[#allocation2 + $0x1c0] sm:$0xff] %vm1453, %v1414
        %1483 = vst.msk [vmem:[#allocation2 + $0x1d0] sm:$0xff] %vm1453, %v1416
        %1484 = vst.msk [vmem:[#allocation2 + $0x1e0] sm:$0xff] %vm1453, %v1418
        %1485 = vst.msk [vmem:[#allocation2 + $0x1f0] sm:$0xff] %vm1453, %v1420
        %v1486 = vrot.slane %v585, 1
        %v1487 = vrot.slane %v586, 1
        %v1488 = vrot.slane %v587, 1
        %v1489 = vrot.slane %v588, 1
        %v1490 = vrot.slane %v589, 1
        %v1491 = vrot.slane %v590, 1
        %v1492 = vrot.slane %v591, 1
        %v1493 = vrot.slane %v592, 1
        %v1494 = vrot.slane %v593, 1
        %v1495 = vrot.slane %v594, 1
        %v1496 = vrot.slane %v595, 1
        %v1497 = vrot.slane %v596, 1
        %v1498 = vrot.slane %v597, 1
        %v1499 = vrot.slane %v598, 1
        %v1500 = vrot.slane %v599, 1
        %v1501 = vrot.slane %v600, 1
        %v1502 = vrot.slane %v601, 1
        %v1503 = vrot.slane %v602, 1
        %v1504 = vrot.slane %v603, 1
        %v1505 = vrot.slane %v604, 1
        %v1506 = vrot.slane %v605, 1
        %v1507 = vrot.slane %v606, 1
        %v1508 = vrot.slane %v607, 1
        %v1509 = vrot.slane %v608, 1
        %v1510 = vrot.slane %v609, 1
        %v1511 = vrot.slane %v610, 1
        %v1512 = vrot.slane %v611, 1
        %v1513 = vrot.slane %v612, 1
        %v1514 = vrot.slane %v613, 1
        %v1515 = vrot.slane %v614, 1
        %v1516 = vrot.slane %v615, 1
        %v1517 = vrot.slane %v616, 1
        %vm1518 = vcmp.lt.s32.totalorder %v842, 7
        %v1519 = vsel %vm1518, %v1516, %v1517
        %v1520 = vsel %vm1518, %v1515, %v1516
        %v1521 = vsel %vm1518, %v1514, %v1515
        %v1522 = vsel %vm1518, %v1513, %v1514
        %v1523 = vsel %vm1518, %v1512, %v1513
        %v1524 = vsel %vm1518, %v1511, %v1512
        %v1525 = vsel %vm1518, %v1510, %v1511
        %v1526 = vsel %vm1518, %v1509, %v1510
        %v1527 = vsel %vm1518, %v1508, %v1509
        %v1528 = vsel %vm1518, %v1507, %v1508
        %v1529 = vsel %vm1518, %v1506, %v1507
        %v1530 = vsel %vm1518, %v1505, %v1506
        %v1531 = vsel %vm1518, %v1504, %v1505
        %v1532 = vsel %vm1518, %v1503, %v1504
        %v1533 = vsel %vm1518, %v1502, %v1503
        %v1534 = vsel %vm1518, %v1501, %v1502
        %v1535 = vsel %vm1518, %v1500, %v1501
        %v1536 = vsel %vm1518, %v1499, %v1500
        %v1537 = vsel %vm1518, %v1498, %v1499
        %v1538 = vsel %vm1518, %v1497, %v1498
        %v1539 = vsel %vm1518, %v1496, %v1497
        %v1540 = vsel %vm1518, %v1495, %v1496
        %v1541 = vsel %vm1518, %v1494, %v1495
        %v1542 = vsel %vm1518, %v1493, %v1494
        %v1543 = vsel %vm1518, %v1492, %v1493
        %v1544 = vsel %vm1518, %v1491, %v1492
        %v1545 = vsel %vm1518, %v1490, %v1491
        %v1546 = vsel %vm1518, %v1489, %v1490
        %v1547 = vsel %vm1518, %v1488, %v1489
        %v1548 = vsel %vm1518, %v1487, %v1488
        %v1549 = vsel %vm1518, %v1486, %v1487
        %v1550 = vsel %vm1518, %v1517, %v1486
        %vm1551 = vmand %vm681, %vm777
        %vm1552 = vmand %vm682, %vm778
        %vm1553 = vmand %vm683, %vm779
        %vm1554 = vmand %vm684, %vm780
        %vm1555 = vmand %vm685, %vm781
        %vm1556 = vmand %vm686, %vm782
        %vm1557 = vmand %vm687, %vm783
        %vm1558 = vmand %vm688, %vm784
        %vm1559 = vmand %vm689, %vm785
        %vm1560 = vmand %vm690, %vm786
        %vm1561 = vmand %vm691, %vm787
        %vm1562 = vmand %vm692, %vm788
        %vm1563 = vmand %vm693, %vm789
        %vm1564 = vmand %vm694, %vm790
        %vm1565 = vmand %vm695, %vm791
        %vm1566 = vmand %vm696, %vm792
        %vm1567 = vmand %vm697, %vm793
        %vm1568 = vmand %vm698, %vm794
        %vm1569 = vmand %vm699, %vm795
        %vm1570 = vmand %vm700, %vm796
        %vm1571 = vmand %vm701, %vm797
        %vm1572 = vmand %vm702, %vm798
        %vm1573 = vmand %vm703, %vm799
        %vm1574 = vmand %vm704, %vm800
        %vm1575 = vmand %vm705, %vm801
        %vm1576 = vmand %vm706, %vm802
        %vm1577 = vmand %vm707, %vm803
        %vm1578 = vmand %vm708, %vm804
        %vm1579 = vmand %vm709, %vm805
        %vm1580 = vmand %vm710, %vm806
        %vm1581 = vmand %vm711, %vm807
        %vm1582 = vmand %vm712, %vm808
        %v1583 = vsel %vm1551, 1, 0
        %v1584 = vsel %vm1552, 1, 0
        %v1585 = vsel %vm1553, 1, 0
        %v1586 = vsel %vm1554, 1, 0
        %v1587 = vsel %vm1555, 1, 0
        %v1588 = vsel %vm1556, 1, 0
        %v1589 = vsel %vm1557, 1, 0
        %v1590 = vsel %vm1558, 1, 0
        %v1591 = vsel %vm1559, 1, 0
        %v1592 = vsel %vm1560, 1, 0
        %v1593 = vsel %vm1561, 1, 0
        %v1594 = vsel %vm1562, 1, 0
        %v1595 = vsel %vm1563, 1, 0
        %v1596 = vsel %vm1564, 1, 0
        %v1597 = vsel %vm1565, 1, 0
        %v1598 = vsel %vm1566, 1, 0
        %v1599 = vsel %vm1567, 1, 0
        %v1600 = vsel %vm1568, 1, 0
        %v1601 = vsel %vm1569, 1, 0
        %v1602 = vsel %vm1570, 1, 0
        %v1603 = vsel %vm1571, 1, 0
        %v1604 = vsel %vm1572, 1, 0
        %v1605 = vsel %vm1573, 1, 0
        %v1606 = vsel %vm1574, 1, 0
        %v1607 = vsel %vm1575, 1, 0
        %v1608 = vsel %vm1576, 1, 0
        %v1609 = vsel %vm1577, 1, 0
        %v1610 = vsel %vm1578, 1, 0
        %v1611 = vsel %vm1579, 1, 0
        %v1612 = vsel %vm1580, 1, 0
        %v1613 = vsel %vm1581, 1, 0
        %v1614 = vsel %vm1582, 1, 0
        %1615 = vset.pattern.permute.xlu0 0
        %1616 = vperm.xlu0 %1615, %v1583
        %v1617 = vpop.permute.xlu0 %1616
        %1618 = vset.pattern.permute.xlu0 0
        %1619 = vperm.xlu0 %1618, %v1584
        %v1620 = vpop.permute.xlu0 %1619
        %1621 = vset.pattern.permute.xlu0 0
        %1622 = vperm.xlu0 %1621, %v1585
        %v1623 = vpop.permute.xlu0 %1622
        %1624 = vset.pattern.permute.xlu0 0
        %1625 = vperm.xlu0 %1624, %v1586
        %v1626 = vpop.permute.xlu0 %1625
        %1627 = vset.pattern.permute.xlu0 0
        %1628 = vperm.xlu0 %1627, %v1587
        %v1629 = vpop.permute.xlu0 %1628
        %1630 = vset.pattern.permute.xlu0 0
        %1631 = vperm.xlu0 %1630, %v1588
        %v1632 = vpop.permute.xlu0 %1631
        %1633 = vset.pattern.permute.xlu0 0
        %1634 = vperm.xlu0 %1633, %v1589
        %v1635 = vpop.permute.xlu0 %1634
        %1636 = vset.pattern.permute.xlu0 0
        %1637 = vperm.xlu0 %1636, %v1590
        %v1638 = vpop.permute.xlu0 %1637
        %1639 = vset.pattern.permute.xlu0 0
        %1640 = vperm.xlu0 %1639, %v1591
        %v1641 = vpop.permute.xlu0 %1640
        %1642 = vset.pattern.permute.xlu0 0
        %1643 = vperm.xlu0 %1642, %v1592
        %v1644 = vpop.permute.xlu0 %1643
        %1645 = vset.pattern.permute.xlu0 0
        %1646 = vperm.xlu0 %1645, %v1593
        %v1647 = vpop.permute.xlu0 %1646
        %1648 = vset.pattern.permute.xlu0 0
        %1649 = vperm.xlu0 %1648, %v1594
        %v1650 = vpop.permute.xlu0 %1649
        %1651 = vset.pattern.permute.xlu0 0
        %1652 = vperm.xlu0 %1651, %v1595
        %v1653 = vpop.permute.xlu0 %1652
        %1654 = vset.pattern.permute.xlu0 0
        %1655 = vperm.xlu0 %1654, %v1596
        %v1656 = vpop.permute.xlu0 %1655
        %1657 = vset.pattern.permute.xlu0 0
        %1658 = vperm.xlu0 %1657, %v1597
        %v1659 = vpop.permute.xlu0 %1658
        %1660 = vset.pattern.permute.xlu0 0
        %1661 = vperm.xlu0 %1660, %v1598
        %v1662 = vpop.permute.xlu0 %1661
        %1663 = vset.pattern.permute.xlu0 0
        %1664 = vperm.xlu0 %1663, %v1599
        %v1665 = vpop.permute.xlu0 %1664
        %1666 = vset.pattern.permute.xlu0 0
        %1667 = vperm.xlu0 %1666, %v1600
        %v1668 = vpop.permute.xlu0 %1667
        %1669 = vset.pattern.permute.xlu0 0
        %1670 = vperm.xlu0 %1669, %v1601
        %v1671 = vpop.permute.xlu0 %1670
        %1672 = vset.pattern.permute.xlu0 0
        %1673 = vperm.xlu0 %1672, %v1602
        %v1674 = vpop.permute.xlu0 %1673
        %1675 = vset.pattern.permute.xlu0 0
        %1676 = vperm.xlu0 %1675, %v1603
        %v1677 = vpop.permute.xlu0 %1676
        %1678 = vset.pattern.permute.xlu0 0
        %1679 = vperm.xlu0 %1678, %v1604
        %v1680 = vpop.permute.xlu0 %1679
        %1681 = vset.pattern.permute.xlu0 0
        %1682 = vperm.xlu0 %1681, %v1605
        %v1683 = vpop.permute.xlu0 %1682
        %1684 = vset.pattern.permute.xlu0 0
        %1685 = vperm.xlu0 %1684, %v1606
        %v1686 = vpop.permute.xlu0 %1685
        %1687 = vset.pattern.permute.xlu0 0
        %1688 = vperm.xlu0 %1687, %v1607
        %v1689 = vpop.permute.xlu0 %1688
        %1690 = vset.pattern.permute.xlu0 0
        %1691 = vperm.xlu0 %1690, %v1608
        %v1692 = vpop.permute.xlu0 %1691
        %1693 = vset.pattern.permute.xlu0 0
        %1694 = vperm.xlu0 %1693, %v1609
        %v1695 = vpop.permute.xlu0 %1694
        %1696 = vset.pattern.permute.xlu0 0
        %1697 = vperm.xlu0 %1696, %v1610
        %v1698 = vpop.permute.xlu0 %1697
        %1699 = vset.pattern.permute.xlu0 0
        %1700 = vperm.xlu0 %1699, %v1611
        %v1701 = vpop.permute.xlu0 %1700
        %1702 = vset.pattern.permute.xlu0 0
        %1703 = vperm.xlu0 %1702, %v1612
        %v1704 = vpop.permute.xlu0 %1703
        %1705 = vset.pattern.permute.xlu0 0
        %1706 = vperm.xlu0 %1705, %v1613
        %v1707 = vpop.permute.xlu0 %1706
        %1708 = vset.pattern.permute.xlu0 0
        %1709 = vperm.xlu0 %1708, %v1614
        %v1710 = vpop.permute.xlu0 %1709
        %vm1711 = vcmp.eq.s32.totalorder %v1617, 1
        %vm1712 = vcmp.eq.s32.totalorder %v1620, 1
        %vm1713 = vcmp.eq.s32.totalorder %v1623, 1
        %vm1714 = vcmp.eq.s32.totalorder %v1626, 1
        %vm1715 = vcmp.eq.s32.totalorder %v1629, 1
        %vm1716 = vcmp.eq.s32.totalorder %v1632, 1
        %vm1717 = vcmp.eq.s32.totalorder %v1635, 1
        %vm1718 = vcmp.eq.s32.totalorder %v1638, 1
        %vm1719 = vcmp.eq.s32.totalorder %v1641, 1
        %vm1720 = vcmp.eq.s32.totalorder %v1644, 1
        %vm1721 = vcmp.eq.s32.totalorder %v1647, 1
        %vm1722 = vcmp.eq.s32.totalorder %v1650, 1
        %vm1723 = vcmp.eq.s32.totalorder %v1653, 1
        %vm1724 = vcmp.eq.s32.totalorder %v1656, 1
        %vm1725 = vcmp.eq.s32.totalorder %v1659, 1
        %vm1726 = vcmp.eq.s32.totalorder %v1662, 1
        %vm1727 = vcmp.eq.s32.totalorder %v1665, 1
        %vm1728 = vcmp.eq.s32.totalorder %v1668, 1
        %vm1729 = vcmp.eq.s32.totalorder %v1671, 1
        %vm1730 = vcmp.eq.s32.totalorder %v1674, 1
        %vm1731 = vcmp.eq.s32.totalorder %v1677, 1
        %vm1732 = vcmp.eq.s32.totalorder %v1680, 1
        %vm1733 = vcmp.eq.s32.totalorder %v1683, 1
        %vm1734 = vcmp.eq.s32.totalorder %v1686, 1
        %vm1735 = vcmp.eq.s32.totalorder %v1689, 1
        %vm1736 = vcmp.eq.s32.totalorder %v1692, 1
        %vm1737 = vcmp.eq.s32.totalorder %v1695, 1
        %vm1738 = vcmp.eq.s32.totalorder %v1698, 1
        %vm1739 = vcmp.eq.s32.totalorder %v1701, 1
        %vm1740 = vcmp.eq.s32.totalorder %v1704, 1
        %vm1741 = vcmp.eq.s32.totalorder %v1707, 1
        %vm1742 = vcmp.eq.s32.totalorder %v1710, 1
        %v1743 = vsel %vm1711, %v1519, 0.0
        %v1744 = vsel %vm1712, %v1550, 0.0
        %v1745 = vsel %vm1713, %v1549, 0.0
        %v1746 = vsel %vm1714, %v1548, 0.0
        %v1747 = vsel %vm1715, %v1547, 0.0
        %v1748 = vsel %vm1716, %v1546, 0.0
        %v1749 = vsel %vm1717, %v1545, 0.0
        %v1750 = vsel %vm1718, %v1544, 0.0
        %v1751 = vsel %vm1719, %v1543, 0.0
        %v1752 = vsel %vm1720, %v1542, 0.0
        %v1753 = vsel %vm1721, %v1541, 0.0
        %v1754 = vsel %vm1722, %v1540, 0.0
        %v1755 = vsel %vm1723, %v1539, 0.0
        %v1756 = vsel %vm1724, %v1538, 0.0
        %v1757 = vsel %vm1725, %v1537, 0.0
        %v1758 = vsel %vm1726, %v1536, 0.0
        %v1759 = vsel %vm1727, %v1535, 0.0
        %v1760 = vsel %vm1728, %v1534, 0.0
        %v1761 = vsel %vm1729, %v1533, 0.0
        %v1762 = vsel %vm1730, %v1532, 0.0
        %v1763 = vsel %vm1731, %v1531, 0.0
        %v1764 = vsel %vm1732, %v1530, 0.0
        %v1765 = vsel %vm1733, %v1529, 0.0
        %v1766 = vsel %vm1734, %v1528, 0.0
        %v1767 = vsel %vm1735, %v1527, 0.0
        %v1768 = vsel %vm1736, %v1526, 0.0
        %v1769 = vsel %vm1737, %v1525, 0.0
        %v1770 = vsel %vm1738, %v1524, 0.0
        %v1771 = vsel %vm1739, %v1523, 0.0
        %v1772 = vsel %vm1740, %v1522, 0.0
        %v1773 = vsel %vm1741, %v1521, 0.0
        %v1774 = vsel %vm1742, %v1520, 0.0
        %1807 = vrot.lane.b32.xlu0 %v1743, 32
        %v1808 = vpop.permute.xlu0 %1807
        %1809 = vrot.lane.b32.xlu0 %v1744, 32
        %v1810 = vpop.permute.xlu0 %1809
        %1811 = vrot.lane.b32.xlu0 %v1745, 32
        %v1812 = vpop.permute.xlu0 %1811
        %1813 = vrot.lane.b32.xlu0 %v1746, 32
        %v1814 = vpop.permute.xlu0 %1813
        %1815 = vrot.lane.b32.xlu0 %v1747, 32
        %v1816 = vpop.permute.xlu0 %1815
        %1817 = vrot.lane.b32.xlu0 %v1748, 32
        %v1818 = vpop.permute.xlu0 %1817
        %1819 = vrot.lane.b32.xlu0 %v1749, 32
        %v1820 = vpop.permute.xlu0 %1819
        %1821 = vrot.lane.b32.xlu0 %v1750, 32
        %v1822 = vpop.permute.xlu0 %1821
        %1823 = vrot.lane.b32.xlu0 %v1751, 32
        %v1824 = vpop.permute.xlu0 %1823
        %1825 = vrot.lane.b32.xlu0 %v1752, 32
        %v1826 = vpop.permute.xlu0 %1825
        %1827 = vrot.lane.b32.xlu0 %v1753, 32
        %v1828 = vpop.permute.xlu0 %1827
        %1829 = vrot.lane.b32.xlu0 %v1754, 32
        %v1830 = vpop.permute.xlu0 %1829
        %1831 = vrot.lane.b32.xlu0 %v1755, 32
        %v1832 = vpop.permute.xlu0 %1831
        %1833 = vrot.lane.b32.xlu0 %v1756, 32
        %v1834 = vpop.permute.xlu0 %1833
        %1835 = vrot.lane.b32.xlu0 %v1757, 32
        %v1836 = vpop.permute.xlu0 %1835
        %1837 = vrot.lane.b32.xlu0 %v1758, 32
        %v1838 = vpop.permute.xlu0 %1837
        %1839 = vrot.lane.b32.xlu0 %v1759, 32
        %v1840 = vpop.permute.xlu0 %1839
        %1841 = vrot.lane.b32.xlu0 %v1760, 32
        %v1842 = vpop.permute.xlu0 %1841
        %1843 = vrot.lane.b32.xlu0 %v1761, 32
        %v1844 = vpop.permute.xlu0 %1843
        %1845 = vrot.lane.b32.xlu0 %v1762, 32
        %v1846 = vpop.permute.xlu0 %1845
        %1847 = vrot.lane.b32.xlu0 %v1763, 32
        %v1848 = vpop.permute.xlu0 %1847
        %1849 = vrot.lane.b32.xlu0 %v1764, 32
        %v1850 = vpop.permute.xlu0 %1849
        %1851 = vrot.lane.b32.xlu0 %v1765, 32
        %v1852 = vpop.permute.xlu0 %1851
        %1853 = vrot.lane.b32.xlu0 %v1766, 32
        %v1854 = vpop.permute.xlu0 %1853
        %1855 = vrot.lane.b32.xlu0 %v1767, 32
        %v1856 = vpop.permute.xlu0 %1855
        %1857 = vrot.lane.b32.xlu0 %v1768, 32
        %v1858 = vpop.permute.xlu0 %1857
        %1859 = vrot.lane.b32.xlu0 %v1769, 32
        %v1860 = vpop.permute.xlu0 %1859
        %1861 = vrot.lane.b32.xlu0 %v1770, 32
        %v1862 = vpop.permute.xlu0 %1861
        %1863 = vrot.lane.b32.xlu0 %v1771, 32
        %v1864 = vpop.permute.xlu0 %1863
        %1865 = vrot.lane.b32.xlu0 %v1772, 32
        %v1866 = vpop.permute.xlu0 %1865
        %1867 = vrot.lane.b32.xlu0 %v1773, 32
        %v1868 = vpop.permute.xlu0 %1867
        %1869 = vrot.lane.b32.xlu0 %v1774, 32
        %v1870 = vpop.permute.xlu0 %1869
        %vm1903 = vcmask 392448
        %1904 = vst.msk [vmem:[#allocation2] sm:$0xff] %vm1903, %v1808
        %1905 = vst.msk [vmem:[#allocation2 + $0x10] sm:$0xff] %vm1903, %v1810
        %1906 = vst.msk [vmem:[#allocation2 + $0x20] sm:$0xff] %vm1903, %v1812
        %1907 = vst.msk [vmem:[#allocation2 + $0x30] sm:$0xff] %vm1903, %v1814
        %1908 = vst.msk [vmem:[#allocation2 + $0x40] sm:$0xff] %vm1903, %v1816
        %1909 = vst.msk [vmem:[#allocation2 + $0x50] sm:$0xff] %vm1903, %v1818
        %1910 = vst.msk [vmem:[#allocation2 + $0x60] sm:$0xff] %vm1903, %v1820
        %1911 = vst.msk [vmem:[#allocation2 + $0x70] sm:$0xff] %vm1903, %v1822
        %1912 = vst.msk [vmem:[#allocation2 + $0x80] sm:$0xff] %vm1903, %v1824
        %1913 = vst.msk [vmem:[#allocation2 + $0x90] sm:$0xff] %vm1903, %v1826
        %1914 = vst.msk [vmem:[#allocation2 + $0xa0] sm:$0xff] %vm1903, %v1828
        %1915 = vst.msk [vmem:[#allocation2 + $0xb0] sm:$0xff] %vm1903, %v1830
        %1916 = vst.msk [vmem:[#allocation2 + $0xc0] sm:$0xff] %vm1903, %v1832
        %1917 = vst.msk [vmem:[#allocation2 + $0xd0] sm:$0xff] %vm1903, %v1834
        %1918 = vst.msk [vmem:[#allocation2 + $0xe0] sm:$0xff] %vm1903, %v1836
        %1919 = vst.msk [vmem:[#allocation2 + $0xf0] sm:$0xff] %vm1903, %v1838
        %1920 = vst.msk [vmem:[#allocation2 + $0x100] sm:$0xff] %vm1903, %v1840
        %1921 = vst.msk [vmem:[#allocation2 + $0x110] sm:$0xff] %vm1903, %v1842
        %1922 = vst.msk [vmem:[#allocation2 + $0x120] sm:$0xff] %vm1903, %v1844
        %1923 = vst.msk [vmem:[#allocation2 + $0x130] sm:$0xff] %vm1903, %v1846
        %1924 = vst.msk [vmem:[#allocation2 + $0x140] sm:$0xff] %vm1903, %v1848
        %1925 = vst.msk [vmem:[#allocation2 + $0x150] sm:$0xff] %vm1903, %v1850
        %1926 = vst.msk [vmem:[#allocation2 + $0x160] sm:$0xff] %vm1903, %v1852
        %1927 = vst.msk [vmem:[#allocation2 + $0x170] sm:$0xff] %vm1903, %v1854
        %1928 = vst.msk [vmem:[#allocation2 + $0x180] sm:$0xff] %vm1903, %v1856
        %1929 = vst.msk [vmem:[#allocation2 + $0x190] sm:$0xff] %vm1903, %v1858
        %1930 = vst.msk [vmem:[#allocation2 + $0x1a0] sm:$0xff] %vm1903, %v1860
        %1931 = vst.msk [vmem:[#allocation2 + $0x1b0] sm:$0xff] %vm1903, %v1862
        %1932 = vst.msk [vmem:[#allocation2 + $0x1c0] sm:$0xff] %vm1903, %v1864
        %1933 = vst.msk [vmem:[#allocation2 + $0x1d0] sm:$0xff] %vm1903, %v1866
        %1934 = vst.msk [vmem:[#allocation2 + $0x1e0] sm:$0xff] %vm1903, %v1868
        %1935 = vst.msk [vmem:[#allocation2 + $0x1f0] sm:$0xff] %vm1903, %v1870
        %v1936 = vsel %vm745, 1, 0
        %v1937 = vsel %vm746, 1, 0
        %v1938 = vsel %vm747, 1, 0
        %v1939 = vsel %vm748, 1, 0
        %v1940 = vsel %vm749, 1, 0
        %v1941 = vsel %vm750, 1, 0
        %v1942 = vsel %vm751, 1, 0
        %v1943 = vsel %vm752, 1, 0
        %v1944 = vsel %vm753, 1, 0
        %v1945 = vsel %vm754, 1, 0
        %v1946 = vsel %vm755, 1, 0
        %v1947 = vsel %vm756, 1, 0
        %v1948 = vsel %vm757, 1, 0
        %v1949 = vsel %vm758, 1, 0
        %v1950 = vsel %vm759, 1, 0
        %v1951 = vsel %vm760, 1, 0
        %v1952 = vsel %vm761, 1, 0
        %v1953 = vsel %vm762, 1, 0
        %v1954 = vsel %vm763, 1, 0
        %v1955 = vsel %vm764, 1, 0
        %v1956 = vsel %vm765, 1, 0
        %v1957 = vsel %vm766, 1, 0
        %v1958 = vsel %vm767, 1, 0
        %v1959 = vsel %vm768, 1, 0
        %v1960 = vsel %vm769, 1, 0
        %v1961 = vsel %vm770, 1, 0
        %v1962 = vsel %vm771, 1, 0
        %v1963 = vsel %vm772, 1, 0
        %v1964 = vsel %vm773, 1, 0
        %v1965 = vsel %vm774, 1, 0
        %v1966 = vsel %vm775, 1, 0
        %v1967 = vsel %vm776, 1, 0
        %1968 = vset.pattern.permute.xlu0 0
        %1969 = vperm.xlu0 %1968, %v1936
        %v1970 = vpop.permute.xlu0 %1969
        %1971 = vset.pattern.permute.xlu0 0
        %1972 = vperm.xlu0 %1971, %v1937
        %v1973 = vpop.permute.xlu0 %1972
        %1974 = vset.pattern.permute.xlu0 0
        %1975 = vperm.xlu0 %1974, %v1938
        %v1976 = vpop.permute.xlu0 %1975
        %1977 = vset.pattern.permute.xlu0 0
        %1978 = vperm.xlu0 %1977, %v1939
        %v1979 = vpop.permute.xlu0 %1978
        %1980 = vset.pattern.permute.xlu0 0
        %1981 = vperm.xlu0 %1980, %v1940
        %v1982 = vpop.permute.xlu0 %1981
        %1983 = vset.pattern.permute.xlu0 0
        %1984 = vperm.xlu0 %1983, %v1941
        %v1985 = vpop.permute.xlu0 %1984
        %1986 = vset.pattern.permute.xlu0 0
        %1987 = vperm.xlu0 %1986, %v1942
        %v1988 = vpop.permute.xlu0 %1987
        %1989 = vset.pattern.permute.xlu0 0
        %1990 = vperm.xlu0 %1989, %v1943
        %v1991 = vpop.permute.xlu0 %1990
        %1992 = vset.pattern.permute.xlu0 0
        %1993 = vperm.xlu0 %1992, %v1944
        %v1994 = vpop.permute.xlu0 %1993
        %1995 = vset.pattern.permute.xlu0 0
        %1996 = vperm.xlu0 %1995, %v1945
        %v1997 = vpop.permute.xlu0 %1996
        %1998 = vset.pattern.permute.xlu0 0
        %1999 = vperm.xlu0 %1998, %v1946
        %v2000 = vpop.permute.xlu0 %1999
        %2001 = vset.pattern.permute.xlu0 0
        %2002 = vperm.xlu0 %2001, %v1947
        %v2003 = vpop.permute.xlu0 %2002
        %2004 = vset.pattern.permute.xlu0 0
        %2005 = vperm.xlu0 %2004, %v1948
        %v2006 = vpop.permute.xlu0 %2005
        %2007 = vset.pattern.permute.xlu0 0
        %2008 = vperm.xlu0 %2007, %v1949
        %v2009 = vpop.permute.xlu0 %2008
        %2010 = vset.pattern.permute.xlu0 0
        %2011 = vperm.xlu0 %2010, %v1950
        %v2012 = vpop.permute.xlu0 %2011
        %2013 = vset.pattern.permute.xlu0 0
        %2014 = vperm.xlu0 %2013, %v1951
        %v2015 = vpop.permute.xlu0 %2014
        %2016 = vset.pattern.permute.xlu0 0
        %2017 = vperm.xlu0 %2016, %v1952
        %v2018 = vpop.permute.xlu0 %2017
        %2019 = vset.pattern.permute.xlu0 0
        %2020 = vperm.xlu0 %2019, %v1953
        %v2021 = vpop.permute.xlu0 %2020
        %2022 = vset.pattern.permute.xlu0 0
        %2023 = vperm.xlu0 %2022, %v1954
        %v2024 = vpop.permute.xlu0 %2023
        %2025 = vset.pattern.permute.xlu0 0
        %2026 = vperm.xlu0 %2025, %v1955
        %v2027 = vpop.permute.xlu0 %2026
        %2028 = vset.pattern.permute.xlu0 0
        %2029 = vperm.xlu0 %2028, %v1956
        %v2030 = vpop.permute.xlu0 %2029
        %2031 = vset.pattern.permute.xlu0 0
        %2032 = vperm.xlu0 %2031, %v1957
        %v2033 = vpop.permute.xlu0 %2032
        %2034 = vset.pattern.permute.xlu0 0
        %2035 = vperm.xlu0 %2034, %v1958
        %v2036 = vpop.permute.xlu0 %2035
        %2037 = vset.pattern.permute.xlu0 0
        %2038 = vperm.xlu0 %2037, %v1959
        %v2039 = vpop.permute.xlu0 %2038
        %2040 = vset.pattern.permute.xlu0 0
        %2041 = vperm.xlu0 %2040, %v1960
        %v2042 = vpop.permute.xlu0 %2041
        %2043 = vset.pattern.permute.xlu0 0
        %2044 = vperm.xlu0 %2043, %v1961
        %v2045 = vpop.permute.xlu0 %2044
        %2046 = vset.pattern.permute.xlu0 0
        %2047 = vperm.xlu0 %2046, %v1962
        %v2048 = vpop.permute.xlu0 %2047
        %2049 = vset.pattern.permute.xlu0 0
        %2050 = vperm.xlu0 %2049, %v1963
        %v2051 = vpop.permute.xlu0 %2050
        %2052 = vset.pattern.permute.xlu0 0
        %2053 = vperm.xlu0 %2052, %v1964
        %v2054 = vpop.permute.xlu0 %2053
        %2055 = vset.pattern.permute.xlu0 0
        %2056 = vperm.xlu0 %2055, %v1965
        %v2057 = vpop.permute.xlu0 %2056
        %2058 = vset.pattern.permute.xlu0 0
        %2059 = vperm.xlu0 %2058, %v1966
        %v2060 = vpop.permute.xlu0 %2059
        %2061 = vset.pattern.permute.xlu0 0
        %2062 = vperm.xlu0 %2061, %v1967
        %v2063 = vpop.permute.xlu0 %2062
        %vm2064 = vcmp.eq.s32.totalorder %v1970, 1
        %vm2065 = vcmp.eq.s32.totalorder %v1973, 1
        %vm2066 = vcmp.eq.s32.totalorder %v1976, 1
        %vm2067 = vcmp.eq.s32.totalorder %v1979, 1
        %vm2068 = vcmp.eq.s32.totalorder %v1982, 1
        %vm2069 = vcmp.eq.s32.totalorder %v1985, 1
        %vm2070 = vcmp.eq.s32.totalorder %v1988, 1
        %vm2071 = vcmp.eq.s32.totalorder %v1991, 1
        %vm2072 = vcmp.eq.s32.totalorder %v1994, 1
        %vm2073 = vcmp.eq.s32.totalorder %v1997, 1
        %vm2074 = vcmp.eq.s32.totalorder %v2000, 1
        %vm2075 = vcmp.eq.s32.totalorder %v2003, 1
        %vm2076 = vcmp.eq.s32.totalorder %v2006, 1
        %vm2077 = vcmp.eq.s32.totalorder %v2009, 1
        %vm2078 = vcmp.eq.s32.totalorder %v2012, 1
        %vm2079 = vcmp.eq.s32.totalorder %v2015, 1
        %vm2080 = vcmp.eq.s32.totalorder %v2018, 1
        %vm2081 = vcmp.eq.s32.totalorder %v2021, 1
        %vm2082 = vcmp.eq.s32.totalorder %v2024, 1
        %vm2083 = vcmp.eq.s32.totalorder %v2027, 1
        %vm2084 = vcmp.eq.s32.totalorder %v2030, 1
        %vm2085 = vcmp.eq.s32.totalorder %v2033, 1
        %vm2086 = vcmp.eq.s32.totalorder %v2036, 1
        %vm2087 = vcmp.eq.s32.totalorder %v2039, 1
        %vm2088 = vcmp.eq.s32.totalorder %v2042, 1
        %vm2089 = vcmp.eq.s32.totalorder %v2045, 1
        %vm2090 = vcmp.eq.s32.totalorder %v2048, 1
        %vm2091 = vcmp.eq.s32.totalorder %v2051, 1
        %vm2092 = vcmp.eq.s32.totalorder %v2054, 1
        %vm2093 = vcmp.eq.s32.totalorder %v2057, 1
        %vm2094 = vcmp.eq.s32.totalorder %v2060, 1
        %vm2095 = vcmp.eq.s32.totalorder %v2063, 1
        %v2096 = vsel %vm2064, %v875, 0.0
        %v2097 = vsel %vm2065, %v874, 0.0
        %v2098 = vsel %vm2066, %v873, 0.0
        %v2099 = vsel %vm2067, %v872, 0.0
        %v2100 = vsel %vm2068, %v871, 0.0
        %v2101 = vsel %vm2069, %v870, 0.0
        %v2102 = vsel %vm2070, %v869, 0.0
        %v2103 = vsel %vm2071, %v868, 0.0
        %v2104 = vsel %vm2072, %v867, 0.0
        %v2105 = vsel %vm2073, %v866, 0.0
        %v2106 = vsel %vm2074, %v865, 0.0
        %v2107 = vsel %vm2075, %v864, 0.0
        %v2108 = vsel %vm2076, %v863, 0.0
        %v2109 = vsel %vm2077, %v862, 0.0
        %v2110 = vsel %vm2078, %v861, 0.0
        %v2111 = vsel %vm2079, %v860, 0.0
        %v2112 = vsel %vm2080, %v859, 0.0
        %v2113 = vsel %vm2081, %v858, 0.0
        %v2114 = vsel %vm2082, %v857, 0.0
        %v2115 = vsel %vm2083, %v856, 0.0
        %v2116 = vsel %vm2084, %v855, 0.0
        %v2117 = vsel %vm2085, %v854, 0.0
        %v2118 = vsel %vm2086, %v853, 0.0
        %v2119 = vsel %vm2087, %v852, 0.0
        %v2120 = vsel %vm2088, %v851, 0.0
        %v2121 = vsel %vm2089, %v850, 0.0
        %v2122 = vsel %vm2090, %v849, 0.0
        %v2123 = vsel %vm2091, %v848, 0.0
        %v2124 = vsel %vm2092, %v847, 0.0
        %v2125 = vsel %vm2093, %v846, 0.0
        %v2126 = vsel %vm2094, %v845, 0.0
        %v2127 = vsel %vm2095, %v844, 0.0
        %2160 = vrot.lane.b32.xlu0 %v2096, 48
        %v2161 = vpop.permute.xlu0 %2160
        %2162 = vrot.lane.b32.xlu0 %v2097, 48
        %v2163 = vpop.permute.xlu0 %2162
        %2164 = vrot.lane.b32.xlu0 %v2098, 48
        %v2165 = vpop.permute.xlu0 %2164
        %2166 = vrot.lane.b32.xlu0 %v2099, 48
        %v2167 = vpop.permute.xlu0 %2166
        %2168 = vrot.lane.b32.xlu0 %v2100, 48
        %v2169 = vpop.permute.xlu0 %2168
        %2170 = vrot.lane.b32.xlu0 %v2101, 48
        %v2171 = vpop.permute.xlu0 %2170
        %2172 = vrot.lane.b32.xlu0 %v2102, 48
        %v2173 = vpop.permute.xlu0 %2172
        %2174 = vrot.lane.b32.xlu0 %v2103, 48
        %v2175 = vpop.permute.xlu0 %2174
        %2176 = vrot.lane.b32.xlu0 %v2104, 48
        %v2177 = vpop.permute.xlu0 %2176
        %2178 = vrot.lane.b32.xlu0 %v2105, 48
        %v2179 = vpop.permute.xlu0 %2178
        %2180 = vrot.lane.b32.xlu0 %v2106, 48
        %v2181 = vpop.permute.xlu0 %2180
        %2182 = vrot.lane.b32.xlu0 %v2107, 48
        %v2183 = vpop.permute.xlu0 %2182
        %2184 = vrot.lane.b32.xlu0 %v2108, 48
        %v2185 = vpop.permute.xlu0 %2184
        %2186 = vrot.lane.b32.xlu0 %v2109, 48
        %v2187 = vpop.permute.xlu0 %2186
        %2188 = vrot.lane.b32.xlu0 %v2110, 48
        %v2189 = vpop.permute.xlu0 %2188
        %2190 = vrot.lane.b32.xlu0 %v2111, 48
        %v2191 = vpop.permute.xlu0 %2190
        %2192 = vrot.lane.b32.xlu0 %v2112, 48
        %v2193 = vpop.permute.xlu0 %2192
        %2194 = vrot.lane.b32.xlu0 %v2113, 48
        %v2195 = vpop.permute.xlu0 %2194
        %2196 = vrot.lane.b32.xlu0 %v2114, 48
        %v2197 = vpop.permute.xlu0 %2196
        %2198 = vrot.lane.b32.xlu0 %v2115, 48
        %v2199 = vpop.permute.xlu0 %2198
        %2200 = vrot.lane.b32.xlu0 %v2116, 48
        %v2201 = vpop.permute.xlu0 %2200
        %2202 = vrot.lane.b32.xlu0 %v2117, 48
        %v2203 = vpop.permute.xlu0 %2202
        %2204 = vrot.lane.b32.xlu0 %v2118, 48
        %v2205 = vpop.permute.xlu0 %2204
        %2206 = vrot.lane.b32.xlu0 %v2119, 48
        %v2207 = vpop.permute.xlu0 %2206
        %2208 = vrot.lane.b32.xlu0 %v2120, 48
        %v2209 = vpop.permute.xlu0 %2208
        %2210 = vrot.lane.b32.xlu0 %v2121, 48
        %v2211 = vpop.permute.xlu0 %2210
        %2212 = vrot.lane.b32.xlu0 %v2122, 48
        %v2213 = vpop.permute.xlu0 %2212
        %2214 = vrot.lane.b32.xlu0 %v2123, 48
        %v2215 = vpop.permute.xlu0 %2214
        %2216 = vrot.lane.b32.xlu0 %v2124, 48
        %v2217 = vpop.permute.xlu0 %2216
        %2218 = vrot.lane.b32.xlu0 %v2125, 48
        %v2219 = vpop.permute.xlu0 %2218
        %2220 = vrot.lane.b32.xlu0 %v2126, 48
        %v2221 = vpop.permute.xlu0 %2220
        %2222 = vrot.lane.b32.xlu0 %v2127, 48
        %v2223 = vpop.permute.xlu0 %2222
        %vm2256 = vcmask 523648
        %2257 = vst.msk [vmem:[#allocation2] sm:$0xff] %vm2256, %v2161
        %2258 = vst.msk [vmem:[#allocation2 + $0x10] sm:$0xff] %vm2256, %v2163
        %2259 = vst.msk [vmem:[#allocation2 + $0x20] sm:$0xff] %vm2256, %v2165
        %2260 = vst.msk [vmem:[#allocation2 + $0x30] sm:$0xff] %vm2256, %v2167
        %2261 = vst.msk [vmem:[#allocation2 + $0x40] sm:$0xff] %vm2256, %v2169
        %2262 = vst.msk [vmem:[#allocation2 + $0x50] sm:$0xff] %vm2256, %v2171
        %2263 = vst.msk [vmem:[#allocation2 + $0x60] sm:$0xff] %vm2256, %v2173
        %2264 = vst.msk [vmem:[#allocation2 + $0x70] sm:$0xff] %vm2256, %v2175
        %2265 = vst.msk [vmem:[#allocation2 + $0x80] sm:$0xff] %vm2256, %v2177
        %2266 = vst.msk [vmem:[#allocation2 + $0x90] sm:$0xff] %vm2256, %v2179
        %2267 = vst.msk [vmem:[#allocation2 + $0xa0] sm:$0xff] %vm2256, %v2181
        %2268 = vst.msk [vmem:[#allocation2 + $0xb0] sm:$0xff] %vm2256, %v2183
        %2269 = vst.msk [vmem:[#allocation2 + $0xc0] sm:$0xff] %vm2256, %v2185
        %2270 = vst.msk [vmem:[#allocation2 + $0xd0] sm:$0xff] %vm2256, %v2187
        %2271 = vst.msk [vmem:[#allocation2 + $0xe0] sm:$0xff] %vm2256, %v2189
        %2272 = vst.msk [vmem:[#allocation2 + $0xf0] sm:$0xff] %vm2256, %v2191
        %2273 = vst.msk [vmem:[#allocation2 + $0x100] sm:$0xff] %vm2256, %v2193
        %2274 = vst.msk [vmem:[#allocation2 + $0x110] sm:$0xff] %vm2256, %v2195
        %2275 = vst.msk [vmem:[#allocation2 + $0x120] sm:$0xff] %vm2256, %v2197
        %2276 = vst.msk [vmem:[#allocation2 + $0x130] sm:$0xff] %vm2256, %v2199
        %2277 = vst.msk [vmem:[#allocation2 + $0x140] sm:$0xff] %vm2256, %v2201
        %2278 = vst.msk [vmem:[#allocation2 + $0x150] sm:$0xff] %vm2256, %v2203
        %2279 = vst.msk [vmem:[#allocation2 + $0x160] sm:$0xff] %vm2256, %v2205
        %2280 = vst.msk [vmem:[#allocation2 + $0x170] sm:$0xff] %vm2256, %v2207
        %2281 = vst.msk [vmem:[#allocation2 + $0x180] sm:$0xff] %vm2256, %v2209
        %2282 = vst.msk [vmem:[#allocation2 + $0x190] sm:$0xff] %vm2256, %v2211
        %2283 = vst.msk [vmem:[#allocation2 + $0x1a0] sm:$0xff] %vm2256, %v2213
        %2284 = vst.msk [vmem:[#allocation2 + $0x1b0] sm:$0xff] %vm2256, %v2215
        %2285 = vst.msk [vmem:[#allocation2 + $0x1c0] sm:$0xff] %vm2256, %v2217
        %2286 = vst.msk [vmem:[#allocation2 + $0x1d0] sm:$0xff] %vm2256, %v2219
        %2287 = vst.msk [vmem:[#allocation2 + $0x1e0] sm:$0xff] %vm2256, %v2221
        %2288 = vst.msk [vmem:[#allocation2 + $0x1f0] sm:$0xff] %vm2256, %v2223
        %2321 = vrot.lane.b32.xlu0 %v585, 64
        %v2322 = vpop.permute.xlu0 %2321
        %2323 = vrot.lane.b32.xlu0 %v586, 64
        %v2324 = vpop.permute.xlu0 %2323
        %2325 = vrot.lane.b32.xlu0 %v587, 64
        %v2326 = vpop.permute.xlu0 %2325
        %2327 = vrot.lane.b32.xlu0 %v588, 64
        %v2328 = vpop.permute.xlu0 %2327
        %2329 = vrot.lane.b32.xlu0 %v589, 64
        %v2330 = vpop.permute.xlu0 %2329
        %2331 = vrot.lane.b32.xlu0 %v590, 64
        %v2332 = vpop.permute.xlu0 %2331
        %2333 = vrot.lane.b32.xlu0 %v591, 64
        %v2334 = vpop.permute.xlu0 %2333
        %2335 = vrot.lane.b32.xlu0 %v592, 64
        %v2336 = vpop.permute.xlu0 %2335
        %2337 = vrot.lane.b32.xlu0 %v593, 64
        %v2338 = vpop.permute.xlu0 %2337
        %2339 = vrot.lane.b32.xlu0 %v594, 64
        %v2340 = vpop.permute.xlu0 %2339
        %2341 = vrot.lane.b32.xlu0 %v595, 64
        %v2342 = vpop.permute.xlu0 %2341
        %2343 = vrot.lane.b32.xlu0 %v596, 64
        %v2344 = vpop.permute.xlu0 %2343
        %2345 = vrot.lane.b32.xlu0 %v597, 64
        %v2346 = vpop.permute.xlu0 %2345
        %2347 = vrot.lane.b32.xlu0 %v598, 64
        %v2348 = vpop.permute.xlu0 %2347
        %2349 = vrot.lane.b32.xlu0 %v599, 64
        %v2350 = vpop.permute.xlu0 %2349
        %2351 = vrot.lane.b32.xlu0 %v600, 64
        %v2352 = vpop.permute.xlu0 %2351
        %2353 = vrot.lane.b32.xlu0 %v601, 64
        %v2354 = vpop.permute.xlu0 %2353
        %2355 = vrot.lane.b32.xlu0 %v602, 64
        %v2356 = vpop.permute.xlu0 %2355
        %2357 = vrot.lane.b32.xlu0 %v603, 64
        %v2358 = vpop.permute.xlu0 %2357
        %2359 = vrot.lane.b32.xlu0 %v604, 64
        %v2360 = vpop.permute.xlu0 %2359
        %2361 = vrot.lane.b32.xlu0 %v605, 64
        %v2362 = vpop.permute.xlu0 %2361
        %2363 = vrot.lane.b32.xlu0 %v606, 64
        %v2364 = vpop.permute.xlu0 %2363
        %2365 = vrot.lane.b32.xlu0 %v607, 64
        %v2366 = vpop.permute.xlu0 %2365
        %2367 = vrot.lane.b32.xlu0 %v608, 64
        %v2368 = vpop.permute.xlu0 %2367
        %2369 = vrot.lane.b32.xlu0 %v609, 64
        %v2370 = vpop.permute.xlu0 %2369
        %2371 = vrot.lane.b32.xlu0 %v610, 64
        %v2372 = vpop.permute.xlu0 %2371
        %2373 = vrot.lane.b32.xlu0 %v611, 64
        %v2374 = vpop.permute.xlu0 %2373
        %2375 = vrot.lane.b32.xlu0 %v612, 64
        %v2376 = vpop.permute.xlu0 %2375
        %2377 = vrot.lane.b32.xlu0 %v613, 64
        %v2378 = vpop.permute.xlu0 %2377
        %2379 = vrot.lane.b32.xlu0 %v614, 64
        %v2380 = vpop.permute.xlu0 %2379
        %2381 = vrot.lane.b32.xlu0 %v615, 64
        %v2382 = vpop.permute.xlu0 %2381
        %2383 = vrot.lane.b32.xlu0 %v616, 64
        %v2384 = vpop.permute.xlu0 %2383
        %vm2417 = vcmask 654848
        %2418 = vst.msk [vmem:[#allocation2] sm:$0xff] %vm2417, %v2322
        %2419 = vst.msk [vmem:[#allocation2 + $0x10] sm:$0xff] %vm2417, %v2324
        %2420 = vst.msk [vmem:[#allocation2 + $0x20] sm:$0xff] %vm2417, %v2326
        %2421 = vst.msk [vmem:[#allocation2 + $0x30] sm:$0xff] %vm2417, %v2328
        %2422 = vst.msk [vmem:[#allocation2 + $0x40] sm:$0xff] %vm2417, %v2330
        %2423 = vst.msk [vmem:[#allocation2 + $0x50] sm:$0xff] %vm2417, %v2332
        %2424 = vst.msk [vmem:[#allocation2 + $0x60] sm:$0xff] %vm2417, %v2334
        %2425 = vst.msk [vmem:[#allocation2 + $0x70] sm:$0xff] %vm2417, %v2336
        %2426 = vst.msk [vmem:[#allocation2 + $0x80] sm:$0xff] %vm2417, %v2338
        %2427 = vst.msk [vmem:[#allocation2 + $0x90] sm:$0xff] %vm2417, %v2340
        %2428 = vst.msk [vmem:[#allocation2 + $0xa0] sm:$0xff] %vm2417, %v2342
        %2429 = vst.msk [vmem:[#allocation2 + $0xb0] sm:$0xff] %vm2417, %v2344
        %2430 = vst.msk [vmem:[#allocation2 + $0xc0] sm:$0xff] %vm2417, %v2346
        %2431 = vst.msk [vmem:[#allocation2 + $0xd0] sm:$0xff] %vm2417, %v2348
        %2432 = vst.msk [vmem:[#allocation2 + $0xe0] sm:$0xff] %vm2417, %v2350
        %2433 = vst.msk [vmem:[#allocation2 + $0xf0] sm:$0xff] %vm2417, %v2352
        %2434 = vst.msk [vmem:[#allocation2 + $0x100] sm:$0xff] %vm2417, %v2354
        %2435 = vst.msk [vmem:[#allocation2 + $0x110] sm:$0xff] %vm2417, %v2356
        %2436 = vst.msk [vmem:[#allocation2 + $0x120] sm:$0xff] %vm2417, %v2358
        %2437 = vst.msk [vmem:[#allocation2 + $0x130] sm:$0xff] %vm2417, %v2360
        %2438 = vst.msk [vmem:[#allocation2 + $0x140] sm:$0xff] %vm2417, %v2362
        %2439 = vst.msk [vmem:[#allocation2 + $0x150] sm:$0xff] %vm2417, %v2364
        %2440 = vst.msk [vmem:[#allocation2 + $0x160] sm:$0xff] %vm2417, %v2366
        %2441 = vst.msk [vmem:[#allocation2 + $0x170] sm:$0xff] %vm2417, %v2368
        %2442 = vst.msk [vmem:[#allocation2 + $0x180] sm:$0xff] %vm2417, %v2370
        %2443 = vst.msk [vmem:[#allocation2 + $0x190] sm:$0xff] %vm2417, %v2372
        %2444 = vst.msk [vmem:[#allocation2 + $0x1a0] sm:$0xff] %vm2417, %v2374
        %2445 = vst.msk [vmem:[#allocation2 + $0x1b0] sm:$0xff] %vm2417, %v2376
        %2446 = vst.msk [vmem:[#allocation2 + $0x1c0] sm:$0xff] %vm2417, %v2378
        %2447 = vst.msk [vmem:[#allocation2 + $0x1d0] sm:$0xff] %vm2417, %v2380
        %2448 = vst.msk [vmem:[#allocation2 + $0x1e0] sm:$0xff] %vm2417, %v2382
        %2449 = vst.msk [vmem:[#allocation2 + $0x1f0] sm:$0xff] %vm2417, %v2384
        %v2450 = vsel %vm777, 1, 0
        %v2451 = vsel %vm778, 1, 0
        %v2452 = vsel %vm779, 1, 0
        %v2453 = vsel %vm780, 1, 0
        %v2454 = vsel %vm781, 1, 0
        %v2455 = vsel %vm782, 1, 0
        %v2456 = vsel %vm783, 1, 0
        %v2457 = vsel %vm784, 1, 0
        %v2458 = vsel %vm785, 1, 0
        %v2459 = vsel %vm786, 1, 0
        %v2460 = vsel %vm787, 1, 0
        %v2461 = vsel %vm788, 1, 0
        %v2462 = vsel %vm789, 1, 0
        %v2463 = vsel %vm790, 1, 0
        %v2464 = vsel %vm791, 1, 0
        %v2465 = vsel %vm792, 1, 0
        %v2466 = vsel %vm793, 1, 0
        %v2467 = vsel %vm794, 1, 0
        %v2468 = vsel %vm795, 1, 0
        %v2469 = vsel %vm796, 1, 0
        %v2470 = vsel %vm797, 1, 0
        %v2471 = vsel %vm798, 1, 0
        %v2472 = vsel %vm799, 1, 0
        %v2473 = vsel %vm800, 1, 0
        %v2474 = vsel %vm801, 1, 0
        %v2475 = vsel %vm802, 1, 0
        %v2476 = vsel %vm803, 1, 0
        %v2477 = vsel %vm804, 1, 0
        %v2478 = vsel %vm805, 1, 0
        %v2479 = vsel %vm806, 1, 0
        %v2480 = vsel %vm807, 1, 0
        %v2481 = vsel %vm808, 1, 0
        %2482 = vset.pattern.permute.xlu0 0
        %2483 = vperm.xlu0 %2482, %v2450
        %v2484 = vpop.permute.xlu0 %2483
        %2485 = vset.pattern.permute.xlu0 0
        %2486 = vperm.xlu0 %2485, %v2451
        %v2487 = vpop.permute.xlu0 %2486
        %2488 = vset.pattern.permute.xlu0 0
        %2489 = vperm.xlu0 %2488, %v2452
        %v2490 = vpop.permute.xlu0 %2489
        %2491 = vset.pattern.permute.xlu0 0
        %2492 = vperm.xlu0 %2491, %v2453
        %v2493 = vpop.permute.xlu0 %2492
        %2494 = vset.pattern.permute.xlu0 0
        %2495 = vperm.xlu0 %2494, %v2454
        %v2496 = vpop.permute.xlu0 %2495
        %2497 = vset.pattern.permute.xlu0 0
        %2498 = vperm.xlu0 %2497, %v2455
        %v2499 = vpop.permute.xlu0 %2498
        %2500 = vset.pattern.permute.xlu0 0
        %2501 = vperm.xlu0 %2500, %v2456
        %v2502 = vpop.permute.xlu0 %2501
        %2503 = vset.pattern.permute.xlu0 0
        %2504 = vperm.xlu0 %2503, %v2457
        %v2505 = vpop.permute.xlu0 %2504
        %2506 = vset.pattern.permute.xlu0 0
        %2507 = vperm.xlu0 %2506, %v2458
        %v2508 = vpop.permute.xlu0 %2507
        %2509 = vset.pattern.permute.xlu0 0
        %2510 = vperm.xlu0 %2509, %v2459
        %v2511 = vpop.permute.xlu0 %2510
        %2512 = vset.pattern.permute.xlu0 0
        %2513 = vperm.xlu0 %2512, %v2460
        %v2514 = vpop.permute.xlu0 %2513
        %2515 = vset.pattern.permute.xlu0 0
        %2516 = vperm.xlu0 %2515, %v2461
        %v2517 = vpop.permute.xlu0 %2516
        %2518 = vset.pattern.permute.xlu0 0
        %2519 = vperm.xlu0 %2518, %v2462
        %v2520 = vpop.permute.xlu0 %2519
        %2521 = vset.pattern.permute.xlu0 0
        %2522 = vperm.xlu0 %2521, %v2463
        %v2523 = vpop.permute.xlu0 %2522
        %2524 = vset.pattern.permute.xlu0 0
        %2525 = vperm.xlu0 %2524, %v2464
        %v2526 = vpop.permute.xlu0 %2525
        %2527 = vset.pattern.permute.xlu0 0
        %2528 = vperm.xlu0 %2527, %v2465
        %v2529 = vpop.permute.xlu0 %2528
        %2530 = vset.pattern.permute.xlu0 0
        %2531 = vperm.xlu0 %2530, %v2466
        %v2532 = vpop.permute.xlu0 %2531
        %2533 = vset.pattern.permute.xlu0 0
        %2534 = vperm.xlu0 %2533, %v2467
        %v2535 = vpop.permute.xlu0 %2534
        %2536 = vset.pattern.permute.xlu0 0
        %2537 = vperm.xlu0 %2536, %v2468
        %v2538 = vpop.permute.xlu0 %2537
        %2539 = vset.pattern.permute.xlu0 0
        %2540 = vperm.xlu0 %2539, %v2469
        %v2541 = vpop.permute.xlu0 %2540
        %2542 = vset.pattern.permute.xlu0 0
        %2543 = vperm.xlu0 %2542, %v2470
        %v2544 = vpop.permute.xlu0 %2543
        %2545 = vset.pattern.permute.xlu0 0
        %2546 = vperm.xlu0 %2545, %v2471
        %v2547 = vpop.permute.xlu0 %2546
        %2548 = vset.pattern.permute.xlu0 0
        %2549 = vperm.xlu0 %2548, %v2472
        %v2550 = vpop.permute.xlu0 %2549
        %2551 = vset.pattern.permute.xlu0 0
        %2552 = vperm.xlu0 %2551, %v2473
        %v2553 = vpop.permute.xlu0 %2552
        %2554 = vset.pattern.permute.xlu0 0
        %2555 = vperm.xlu0 %2554, %v2474
        %v2556 = vpop.permute.xlu0 %2555
        %2557 = vset.pattern.permute.xlu0 0
        %2558 = vperm.xlu0 %2557, %v2475
        %v2559 = vpop.permute.xlu0 %2558
        %2560 = vset.pattern.permute.xlu0 0
        %2561 = vperm.xlu0 %2560, %v2476
        %v2562 = vpop.permute.xlu0 %2561
        %2563 = vset.pattern.permute.xlu0 0
        %2564 = vperm.xlu0 %2563, %v2477
        %v2565 = vpop.permute.xlu0 %2564
        %2566 = vset.pattern.permute.xlu0 0
        %2567 = vperm.xlu0 %2566, %v2478
        %v2568 = vpop.permute.xlu0 %2567
        %2569 = vset.pattern.permute.xlu0 0
        %2570 = vperm.xlu0 %2569, %v2479
        %v2571 = vpop.permute.xlu0 %2570
        %2572 = vset.pattern.permute.xlu0 0
        %2573 = vperm.xlu0 %2572, %v2480
        %v2574 = vpop.permute.xlu0 %2573
        %2575 = vset.pattern.permute.xlu0 0
        %2576 = vperm.xlu0 %2575, %v2481
        %v2577 = vpop.permute.xlu0 %2576
        %vm2578 = vcmp.eq.s32.totalorder %v2484, 1
        %vm2579 = vcmp.eq.s32.totalorder %v2487, 1
        %vm2580 = vcmp.eq.s32.totalorder %v2490, 1
        %vm2581 = vcmp.eq.s32.totalorder %v2493, 1
        %vm2582 = vcmp.eq.s32.totalorder %v2496, 1
        %vm2583 = vcmp.eq.s32.totalorder %v2499, 1
        %vm2584 = vcmp.eq.s32.totalorder %v2502, 1
        %vm2585 = vcmp.eq.s32.totalorder %v2505, 1
        %vm2586 = vcmp.eq.s32.totalorder %v2508, 1
        %vm2587 = vcmp.eq.s32.totalorder %v2511, 1
        %vm2588 = vcmp.eq.s32.totalorder %v2514, 1
        %vm2589 = vcmp.eq.s32.totalorder %v2517, 1
        %vm2590 = vcmp.eq.s32.totalorder %v2520, 1
        %vm2591 = vcmp.eq.s32.totalorder %v2523, 1
        %vm2592 = vcmp.eq.s32.totalorder %v2526, 1
        %vm2593 = vcmp.eq.s32.totalorder %v2529, 1
        %vm2594 = vcmp.eq.s32.totalorder %v2532, 1
        %vm2595 = vcmp.eq.s32.totalorder %v2535, 1
        %vm2596 = vcmp.eq.s32.totalorder %v2538, 1
        %vm2597 = vcmp.eq.s32.totalorder %v2541, 1
        %vm2598 = vcmp.eq.s32.totalorder %v2544, 1
        %vm2599 = vcmp.eq.s32.totalorder %v2547, 1
        %vm2600 = vcmp.eq.s32.totalorder %v2550, 1
        %vm2601 = vcmp.eq.s32.totalorder %v2553, 1
        %vm2602 = vcmp.eq.s32.totalorder %v2556, 1
        %vm2603 = vcmp.eq.s32.totalorder %v2559, 1
        %vm2604 = vcmp.eq.s32.totalorder %v2562, 1
        %vm2605 = vcmp.eq.s32.totalorder %v2565, 1
        %vm2606 = vcmp.eq.s32.totalorder %v2568, 1
        %vm2607 = vcmp.eq.s32.totalorder %v2571, 1
        %vm2608 = vcmp.eq.s32.totalorder %v2574, 1
        %vm2609 = vcmp.eq.s32.totalorder %v2577, 1
        %v2610 = vsel %vm2578, %v1549, 0.0
        %v2611 = vsel %vm2579, %v1548, 0.0
        %v2612 = vsel %vm2580, %v1547, 0.0
        %v2613 = vsel %vm2581, %v1546, 0.0
        %v2614 = vsel %vm2582, %v1545, 0.0
        %v2615 = vsel %vm2583, %v1544, 0.0
        %v2616 = vsel %vm2584, %v1543, 0.0
        %v2617 = vsel %vm2585, %v1542, 0.0
        %v2618 = vsel %vm2586, %v1541, 0.0
        %v2619 = vsel %vm2587, %v1540, 0.0
        %v2620 = vsel %vm2588, %v1539, 0.0
        %v2621 = vsel %vm2589, %v1538, 0.0
        %v2622 = vsel %vm2590, %v1537, 0.0
        %v2623 = vsel %vm2591, %v1536, 0.0
        %v2624 = vsel %vm2592, %v1535, 0.0
        %v2625 = vsel %vm2593, %v1534, 0.0
        %v2626 = vsel %vm2594, %v1533, 0.0
        %v2627 = vsel %vm2595, %v1532, 0.0
        %v2628 = vsel %vm2596, %v1531, 0.0
        %v2629 = vsel %vm2597, %v1530, 0.0
        %v2630 = vsel %vm2598, %v1529, 0.0
        %v2631 = vsel %vm2599, %v1528, 0.0
        %v2632 = vsel %vm2600, %v1527, 0.0
        %v2633 = vsel %vm2601, %v1526, 0.0
        %v2634 = vsel %vm2602, %v1525, 0.0
        %v2635 = vsel %vm2603, %v1524, 0.0
        %v2636 = vsel %vm2604, %v1523, 0.0
        %v2637 = vsel %vm2605, %v1522, 0.0
        %v2638 = vsel %vm2606, %v1521, 0.0
        %v2639 = vsel %vm2607, %v1520, 0.0
        %v2640 = vsel %vm2608, %v1519, 0.0
        %v2641 = vsel %vm2609, %v1550, 0.0
        %2674 = vrot.lane.b32.xlu0 %v2610, 80
        %v2675 = vpop.permute.xlu0 %2674
        %2676 = vrot.lane.b32.xlu0 %v2611, 80
        %v2677 = vpop.permute.xlu0 %2676
        %2678 = vrot.lane.b32.xlu0 %v2612, 80
        %v2679 = vpop.permute.xlu0 %2678
        %2680 = vrot.lane.b32.xlu0 %v2613, 80
        %v2681 = vpop.permute.xlu0 %2680
        %2682 = vrot.lane.b32.xlu0 %v2614, 80
        %v2683 = vpop.permute.xlu0 %2682
        %2684 = vrot.lane.b32.xlu0 %v2615, 80
        %v2685 = vpop.permute.xlu0 %2684
        %2686 = vrot.lane.b32.xlu0 %v2616, 80
        %v2687 = vpop.permute.xlu0 %2686
        %2688 = vrot.lane.b32.xlu0 %v2617, 80
        %v2689 = vpop.permute.xlu0 %2688
        %2690 = vrot.lane.b32.xlu0 %v2618, 80
        %v2691 = vpop.permute.xlu0 %2690
        %2692 = vrot.lane.b32.xlu0 %v2619, 80
        %v2693 = vpop.permute.xlu0 %2692
        %2694 = vrot.lane.b32.xlu0 %v2620, 80
        %v2695 = vpop.permute.xlu0 %2694
        %2696 = vrot.lane.b32.xlu0 %v2621, 80
        %v2697 = vpop.permute.xlu0 %2696
        %2698 = vrot.lane.b32.xlu0 %v2622, 80
        %v2699 = vpop.permute.xlu0 %2698
        %2700 = vrot.lane.b32.xlu0 %v2623, 80
        %v2701 = vpop.permute.xlu0 %2700
        %2702 = vrot.lane.b32.xlu0 %v2624, 80
        %v2703 = vpop.permute.xlu0 %2702
        %2704 = vrot.lane.b32.xlu0 %v2625, 80
        %v2705 = vpop.permute.xlu0 %2704
        %2706 = vrot.lane.b32.xlu0 %v2626, 80
        %v2707 = vpop.permute.xlu0 %2706
        %2708 = vrot.lane.b32.xlu0 %v2627, 80
        %v2709 = vpop.permute.xlu0 %2708
        %2710 = vrot.lane.b32.xlu0 %v2628, 80
        %v2711 = vpop.permute.xlu0 %2710
        %2712 = vrot.lane.b32.xlu0 %v2629, 80
        %v2713 = vpop.permute.xlu0 %2712
        %2714 = vrot.lane.b32.xlu0 %v2630, 80
        %v2715 = vpop.permute.xlu0 %2714
        %2716 = vrot.lane.b32.xlu0 %v2631, 80
        %v2717 = vpop.permute.xlu0 %2716
        %2718 = vrot.lane.b32.xlu0 %v2632, 80
        %v2719 = vpop.permute.xlu0 %2718
        %2720 = vrot.lane.b32.xlu0 %v2633, 80
        %v2721 = vpop.permute.xlu0 %2720
        %2722 = vrot.lane.b32.xlu0 %v2634, 80
        %v2723 = vpop.permute.xlu0 %2722
        %2724 = vrot.lane.b32.xlu0 %v2635, 80
        %v2725 = vpop.permute.xlu0 %2724
        %2726 = vrot.lane.b32.xlu0 %v2636, 80
        %v2727 = vpop.permute.xlu0 %2726
        %2728 = vrot.lane.b32.xlu0 %v2637, 80
        %v2729 = vpop.permute.xlu0 %2728
        %2730 = vrot.lane.b32.xlu0 %v2638, 80
        %v2731 = vpop.permute.xlu0 %2730
        %2732 = vrot.lane.b32.xlu0 %v2639, 80
        %v2733 = vpop.permute.xlu0 %2732
        %2734 = vrot.lane.b32.xlu0 %v2640, 80
        %v2735 = vpop.permute.xlu0 %2734
        %2736 = vrot.lane.b32.xlu0 %v2641, 80
        %v2737 = vpop.permute.xlu0 %2736
        %vm2770 = vcmask 786048
        %2771 = vst.msk [vmem:[#allocation2] sm:$0xff] %vm2770, %v2675
        %2772 = vst.msk [vmem:[#allocation2 + $0x10] sm:$0xff] %vm2770, %v2677
        %2773 = vst.msk [vmem:[#allocation2 + $0x20] sm:$0xff] %vm2770, %v2679
        %2774 = vst.msk [vmem:[#allocation2 + $0x30] sm:$0xff] %vm2770, %v2681
        %2775 = vst.msk [vmem:[#allocation2 + $0x40] sm:$0xff] %vm2770, %v2683
        %2776 = vst.msk [vmem:[#allocation2 + $0x50] sm:$0xff] %vm2770, %v2685
        %2777 = vst.msk [vmem:[#allocation2 + $0x60] sm:$0xff] %vm2770, %v2687
        %2778 = vst.msk [vmem:[#allocation2 + $0x70] sm:$0xff] %vm2770, %v2689
        %2779 = vst.msk [vmem:[#allocation2 + $0x80] sm:$0xff] %vm2770, %v2691
        %2780 = vst.msk [vmem:[#allocation2 + $0x90] sm:$0xff] %vm2770, %v2693
        %2781 = vst.msk [vmem:[#allocation2 + $0xa0] sm:$0xff] %vm2770, %v2695
        %2782 = vst.msk [vmem:[#allocation2 + $0xb0] sm:$0xff] %vm2770, %v2697
        %2783 = vst.msk [vmem:[#allocation2 + $0xc0] sm:$0xff] %vm2770, %v2699
        %2784 = vst.msk [vmem:[#allocation2 + $0xd0] sm:$0xff] %vm2770, %v2701
        %2785 = vst.msk [vmem:[#allocation2 + $0xe0] sm:$0xff] %vm2770, %v2703
        %2786 = vst.msk [vmem:[#allocation2 + $0xf0] sm:$0xff] %vm2770, %v2705
        %2787 = vst.msk [vmem:[#allocation2 + $0x100] sm:$0xff] %vm2770, %v2707
        %2788 = vst.msk [vmem:[#allocation2 + $0x110] sm:$0xff] %vm2770, %v2709
        %2789 = vst.msk [vmem:[#allocation2 + $0x120] sm:$0xff] %vm2770, %v2711
        %2790 = vst.msk [vmem:[#allocation2 + $0x130] sm:$0xff] %vm2770, %v2713
        %2791 = vst.msk [vmem:[#allocation2 + $0x140] sm:$0xff] %vm2770, %v2715
        %2792 = vst.msk [vmem:[#allocation2 + $0x150] sm:$0xff] %vm2770, %v2717
        %2793 = vst.msk [vmem:[#allocation2 + $0x160] sm:$0xff] %vm2770, %v2719
        %2794 = vst.msk [vmem:[#allocation2 + $0x170] sm:$0xff] %vm2770, %v2721
        %2795 = vst.msk [vmem:[#allocation2 + $0x180] sm:$0xff] %vm2770, %v2723
        %2796 = vst.msk [vmem:[#allocation2 + $0x190] sm:$0xff] %vm2770, %v2725
        %2797 = vst.msk [vmem:[#allocation2 + $0x1a0] sm:$0xff] %vm2770, %v2727
        %2798 = vst.msk [vmem:[#allocation2 + $0x1b0] sm:$0xff] %vm2770, %v2729
        %2799 = vst.msk [vmem:[#allocation2 + $0x1c0] sm:$0xff] %vm2770, %v2731
        %2800 = vst.msk [vmem:[#allocation2 + $0x1d0] sm:$0xff] %vm2770, %v2733
        %2801 = vst.msk [vmem:[#allocation2 + $0x1e0] sm:$0xff] %vm2770, %v2735
        %2802 = vst.msk [vmem:[#allocation2 + $0x1f0] sm:$0xff] %vm2770, %v2737
        %vm2803 = vmand %vm713, %vm745
        %vm2804 = vmand %vm714, %vm746
        %vm2805 = vmand %vm715, %vm747
        %vm2806 = vmand %vm716, %vm748
        %vm2807 = vmand %vm717, %vm749
        %vm2808 = vmand %vm718, %vm750
        %vm2809 = vmand %vm719, %vm751
        %vm2810 = vmand %vm720, %vm752
        %vm2811 = vmand %vm721, %vm753
        %vm2812 = vmand %vm722, %vm754
        %vm2813 = vmand %vm723, %vm755
        %vm2814 = vmand %vm724, %vm756
        %vm2815 = vmand %vm725, %vm757
        %vm2816 = vmand %vm726, %vm758
        %vm2817 = vmand %vm727, %vm759
        %vm2818 = vmand %vm728, %vm760
        %vm2819 = vmand %vm729, %vm761
        %vm2820 = vmand %vm730, %vm762
        %vm2821 = vmand %vm731, %vm763
        %vm2822 = vmand %vm732, %vm764
        %vm2823 = vmand %vm733, %vm765
        %vm2824 = vmand %vm734, %vm766
        %vm2825 = vmand %vm735, %vm767
        %vm2826 = vmand %vm736, %vm768
        %vm2827 = vmand %vm737, %vm769
        %vm2828 = vmand %vm738, %vm770
        %vm2829 = vmand %vm739, %vm771
        %vm2830 = vmand %vm740, %vm772
        %vm2831 = vmand %vm741, %vm773
        %vm2832 = vmand %vm742, %vm774
        %vm2833 = vmand %vm743, %vm775
        %vm2834 = vmand %vm744, %vm776
        %v2835 = vsel %vm2803, 1, 0
        %v2836 = vsel %vm2804, 1, 0
        %v2837 = vsel %vm2805, 1, 0
        %v2838 = vsel %vm2806, 1, 0
        %v2839 = vsel %vm2807, 1, 0
        %v2840 = vsel %vm2808, 1, 0
        %v2841 = vsel %vm2809, 1, 0
        %v2842 = vsel %vm2810, 1, 0
        %v2843 = vsel %vm2811, 1, 0
        %v2844 = vsel %vm2812, 1, 0
        %v2845 = vsel %vm2813, 1, 0
        %v2846 = vsel %vm2814, 1, 0
        %v2847 = vsel %vm2815, 1, 0
        %v2848 = vsel %vm2816, 1, 0
        %v2849 = vsel %vm2817, 1, 0
        %v2850 = vsel %vm2818, 1, 0
        %v2851 = vsel %vm2819, 1, 0
        %v2852 = vsel %vm2820, 1, 0
        %v2853 = vsel %vm2821, 1, 0
        %v2854 = vsel %vm2822, 1, 0
        %v2855 = vsel %vm2823, 1, 0
        %v2856 = vsel %vm2824, 1, 0
        %v2857 = vsel %vm2825, 1, 0
        %v2858 = vsel %vm2826, 1, 0
        %v2859 = vsel %vm2827, 1, 0
        %v2860 = vsel %vm2828, 1, 0
        %v2861 = vsel %vm2829, 1, 0
        %v2862 = vsel %vm2830, 1, 0
        %v2863 = vsel %vm2831, 1, 0
        %v2864 = vsel %vm2832, 1, 0
        %v2865 = vsel %vm2833, 1, 0
        %v2866 = vsel %vm2834, 1, 0
        %2867 = vset.pattern.permute.xlu0 0
        %2868 = vperm.xlu0 %2867, %v2835
        %v2869 = vpop.permute.xlu0 %2868
        %2870 = vset.pattern.permute.xlu0 0
        %2871 = vperm.xlu0 %2870, %v2836
        %v2872 = vpop.permute.xlu0 %2871
        %2873 = vset.pattern.permute.xlu0 0
        %2874 = vperm.xlu0 %2873, %v2837
        %v2875 = vpop.permute.xlu0 %2874
        %2876 = vset.pattern.permute.xlu0 0
        %2877 = vperm.xlu0 %2876, %v2838
        %v2878 = vpop.permute.xlu0 %2877
        %2879 = vset.pattern.permute.xlu0 0
        %2880 = vperm.xlu0 %2879, %v2839
        %v2881 = vpop.permute.xlu0 %2880
        %2882 = vset.pattern.permute.xlu0 0
        %2883 = vperm.xlu0 %2882, %v2840
        %v2884 = vpop.permute.xlu0 %2883
        %2885 = vset.pattern.permute.xlu0 0
        %2886 = vperm.xlu0 %2885, %v2841
        %v2887 = vpop.permute.xlu0 %2886
        %2888 = vset.pattern.permute.xlu0 0
        %2889 = vperm.xlu0 %2888, %v2842
        %v2890 = vpop.permute.xlu0 %2889
        %2891 = vset.pattern.permute.xlu0 0
        %2892 = vperm.xlu0 %2891, %v2843
        %v2893 = vpop.permute.xlu0 %2892
        %2894 = vset.pattern.permute.xlu0 0
        %2895 = vperm.xlu0 %2894, %v2844
        %v2896 = vpop.permute.xlu0 %2895
        %2897 = vset.pattern.permute.xlu0 0
        %2898 = vperm.xlu0 %2897, %v2845
        %v2899 = vpop.permute.xlu0 %2898
        %2900 = vset.pattern.permute.xlu0 0
        %2901 = vperm.xlu0 %2900, %v2846
        %v2902 = vpop.permute.xlu0 %2901
        %2903 = vset.pattern.permute.xlu0 0
        %2904 = vperm.xlu0 %2903, %v2847
        %v2905 = vpop.permute.xlu0 %2904
        %2906 = vset.pattern.permute.xlu0 0
        %2907 = vperm.xlu0 %2906, %v2848
        %v2908 = vpop.permute.xlu0 %2907
        %2909 = vset.pattern.permute.xlu0 0
        %2910 = vperm.xlu0 %2909, %v2849
        %v2911 = vpop.permute.xlu0 %2910
        %2912 = vset.pattern.permute.xlu0 0
        %2913 = vperm.xlu0 %2912, %v2850
        %v2914 = vpop.permute.xlu0 %2913
        %2915 = vset.pattern.permute.xlu0 0
        %2916 = vperm.xlu0 %2915, %v2851
        %v2917 = vpop.permute.xlu0 %2916
        %2918 = vset.pattern.permute.xlu0 0
        %2919 = vperm.xlu0 %2918, %v2852
        %v2920 = vpop.permute.xlu0 %2919
        %2921 = vset.pattern.permute.xlu0 0
        %2922 = vperm.xlu0 %2921, %v2853
        %v2923 = vpop.permute.xlu0 %2922
        %2924 = vset.pattern.permute.xlu0 0
        %2925 = vperm.xlu0 %2924, %v2854
        %v2926 = vpop.permute.xlu0 %2925
        %2927 = vset.pattern.permute.xlu0 0
        %2928 = vperm.xlu0 %2927, %v2855
        %v2929 = vpop.permute.xlu0 %2928
        %2930 = vset.pattern.permute.xlu0 0
        %2931 = vperm.xlu0 %2930, %v2856
        %v2932 = vpop.permute.xlu0 %2931
        %2933 = vset.pattern.permute.xlu0 0
        %2934 = vperm.xlu0 %2933, %v2857
        %v2935 = vpop.permute.xlu0 %2934
        %2936 = vset.pattern.permute.xlu0 0
        %2937 = vperm.xlu0 %2936, %v2858
        %v2938 = vpop.permute.xlu0 %2937
        %2939 = vset.pattern.permute.xlu0 0
        %2940 = vperm.xlu0 %2939, %v2859
        %v2941 = vpop.permute.xlu0 %2940
        %2942 = vset.pattern.permute.xlu0 0
        %2943 = vperm.xlu0 %2942, %v2860
        %v2944 = vpop.permute.xlu0 %2943
        %2945 = vset.pattern.permute.xlu0 0
        %2946 = vperm.xlu0 %2945, %v2861
        %v2947 = vpop.permute.xlu0 %2946
        %2948 = vset.pattern.permute.xlu0 0
        %2949 = vperm.xlu0 %2948, %v2862
        %v2950 = vpop.permute.xlu0 %2949
        %2951 = vset.pattern.permute.xlu0 0
        %2952 = vperm.xlu0 %2951, %v2863
        %v2953 = vpop.permute.xlu0 %2952
        %2954 = vset.pattern.permute.xlu0 0
        %2955 = vperm.xlu0 %2954, %v2864
        %v2956 = vpop.permute.xlu0 %2955
        %2957 = vset.pattern.permute.xlu0 0
        %2958 = vperm.xlu0 %2957, %v2865
        %v2959 = vpop.permute.xlu0 %2958
        %2960 = vset.pattern.permute.xlu0 0
        %2961 = vperm.xlu0 %2960, %v2866
        %v2962 = vpop.permute.xlu0 %2961
        %vm2963 = vcmp.eq.s32.totalorder %v2869, 1
        %vm2964 = vcmp.eq.s32.totalorder %v2872, 1
        %vm2965 = vcmp.eq.s32.totalorder %v2875, 1
        %vm2966 = vcmp.eq.s32.totalorder %v2878, 1
        %vm2967 = vcmp.eq.s32.totalorder %v2881, 1
        %vm2968 = vcmp.eq.s32.totalorder %v2884, 1
        %vm2969 = vcmp.eq.s32.totalorder %v2887, 1
        %vm2970 = vcmp.eq.s32.totalorder %v2890, 1
        %vm2971 = vcmp.eq.s32.totalorder %v2893, 1
        %vm2972 = vcmp.eq.s32.totalorder %v2896, 1
        %vm2973 = vcmp.eq.s32.totalorder %v2899, 1
        %vm2974 = vcmp.eq.s32.totalorder %v2902, 1
        %vm2975 = vcmp.eq.s32.totalorder %v2905, 1
        %vm2976 = vcmp.eq.s32.totalorder %v2908, 1
        %vm2977 = vcmp.eq.s32.totalorder %v2911, 1
        %vm2978 = vcmp.eq.s32.totalorder %v2914, 1
        %vm2979 = vcmp.eq.s32.totalorder %v2917, 1
        %vm2980 = vcmp.eq.s32.totalorder %v2920, 1
        %vm2981 = vcmp.eq.s32.totalorder %v2923, 1
        %vm2982 = vcmp.eq.s32.totalorder %v2926, 1
        %vm2983 = vcmp.eq.s32.totalorder %v2929, 1
        %vm2984 = vcmp.eq.s32.totalorder %v2932, 1
        %vm2985 = vcmp.eq.s32.totalorder %v2935, 1
        %vm2986 = vcmp.eq.s32.totalorder %v2938, 1
        %vm2987 = vcmp.eq.s32.totalorder %v2941, 1
        %vm2988 = vcmp.eq.s32.totalorder %v2944, 1
        %vm2989 = vcmp.eq.s32.totalorder %v2947, 1
        %vm2990 = vcmp.eq.s32.totalorder %v2950, 1
        %vm2991 = vcmp.eq.s32.totalorder %v2953, 1
        %vm2992 = vcmp.eq.s32.totalorder %v2956, 1
        %vm2993 = vcmp.eq.s32.totalorder %v2959, 1
        %vm2994 = vcmp.eq.s32.totalorder %v2962, 1
        %v2995 = vsel %vm2963, %v873, 0.0
        %v2996 = vsel %vm2964, %v872, 0.0
        %v2997 = vsel %vm2965, %v871, 0.0
        %v2998 = vsel %vm2966, %v870, 0.0
        %v2999 = vsel %vm2967, %v869, 0.0
        %v3000 = vsel %vm2968, %v868, 0.0
        %v3001 = vsel %vm2969, %v867, 0.0
        %v3002 = vsel %vm2970, %v866, 0.0
        %v3003 = vsel %vm2971, %v865, 0.0
        %v3004 = vsel %vm2972, %v864, 0.0
        %v3005 = vsel %vm2973, %v863, 0.0
        %v3006 = vsel %vm2974, %v862, 0.0
        %v3007 = vsel %vm2975, %v861, 0.0
        %v3008 = vsel %vm2976, %v860, 0.0
        %v3009 = vsel %vm2977, %v859, 0.0
        %v3010 = vsel %vm2978, %v858, 0.0
        %v3011 = vsel %vm2979, %v857, 0.0
        %v3012 = vsel %vm2980, %v856, 0.0
        %v3013 = vsel %vm2981, %v855, 0.0
        %v3014 = vsel %vm2982, %v854, 0.0
        %v3015 = vsel %vm2983, %v853, 0.0
        %v3016 = vsel %vm2984, %v852, 0.0
        %v3017 = vsel %vm2985, %v851, 0.0
        %v3018 = vsel %vm2986, %v850, 0.0
        %v3019 = vsel %vm2987, %v849, 0.0
        %v3020 = vsel %vm2988, %v848, 0.0
        %v3021 = vsel %vm2989, %v847, 0.0
        %v3022 = vsel %vm2990, %v846, 0.0
        %v3023 = vsel %vm2991, %v845, 0.0
        %v3024 = vsel %vm2992, %v844, 0.0
        %v3025 = vsel %vm2993, %v875, 0.0
        %v3026 = vsel %vm2994, %v874, 0.0
        %3059 = vrot.lane.b32.xlu0 %v2995, 96
        %v3060 = vpop.permute.xlu0 %3059
        %3061 = vrot.lane.b32.xlu0 %v2996, 96
        %v3062 = vpop.permute.xlu0 %3061
        %3063 = vrot.lane.b32.xlu0 %v2997, 96
        %v3064 = vpop.permute.xlu0 %3063
        %3065 = vrot.lane.b32.xlu0 %v2998, 96
        %v3066 = vpop.permute.xlu0 %3065
        %3067 = vrot.lane.b32.xlu0 %v2999, 96
        %v3068 = vpop.permute.xlu0 %3067
        %3069 = vrot.lane.b32.xlu0 %v3000, 96
        %v3070 = vpop.permute.xlu0 %3069
        %3071 = vrot.lane.b32.xlu0 %v3001, 96
        %v3072 = vpop.permute.xlu0 %3071
        %3073 = vrot.lane.b32.xlu0 %v3002, 96
        %v3074 = vpop.permute.xlu0 %3073
        %3075 = vrot.lane.b32.xlu0 %v3003, 96
        %v3076 = vpop.permute.xlu0 %3075
        %3077 = vrot.lane.b32.xlu0 %v3004, 96
        %v3078 = vpop.permute.xlu0 %3077
        %3079 = vrot.lane.b32.xlu0 %v3005, 96
        %v3080 = vpop.permute.xlu0 %3079
        %3081 = vrot.lane.b32.xlu0 %v3006, 96
        %v3082 = vpop.permute.xlu0 %3081
        %3083 = vrot.lane.b32.xlu0 %v3007, 96
        %v3084 = vpop.permute.xlu0 %3083
        %3085 = vrot.lane.b32.xlu0 %v3008, 96
        %v3086 = vpop.permute.xlu0 %3085
        %3087 = vrot.lane.b32.xlu0 %v3009, 96
        %v3088 = vpop.permute.xlu0 %3087
        %3089 = vrot.lane.b32.xlu0 %v3010, 96
        %v3090 = vpop.permute.xlu0 %3089
        %3091 = vrot.lane.b32.xlu0 %v3011, 96
        %v3092 = vpop.permute.xlu0 %3091
        %3093 = vrot.lane.b32.xlu0 %v3012, 96
        %v3094 = vpop.permute.xlu0 %3093
        %3095 = vrot.lane.b32.xlu0 %v3013, 96
        %v3096 = vpop.permute.xlu0 %3095
        %3097 = vrot.lane.b32.xlu0 %v3014, 96
        %v3098 = vpop.permute.xlu0 %3097
        %3099 = vrot.lane.b32.xlu0 %v3015, 96
        %v3100 = vpop.permute.xlu0 %3099
        %3101 = vrot.lane.b32.xlu0 %v3016, 96
        %v3102 = vpop.permute.xlu0 %3101
        %3103 = vrot.lane.b32.xlu0 %v3017, 96
        %v3104 = vpop.permute.xlu0 %3103
        %3105 = vrot.lane.b32.xlu0 %v3018, 96
        %v3106 = vpop.permute.xlu0 %3105
        %3107 = vrot.lane.b32.xlu0 %v3019, 96
        %v3108 = vpop.permute.xlu0 %3107
        %3109 = vrot.lane.b32.xlu0 %v3020, 96
        %v3110 = vpop.permute.xlu0 %3109
        %3111 = vrot.lane.b32.xlu0 %v3021, 96
        %v3112 = vpop.permute.xlu0 %3111
        %3113 = vrot.lane.b32.xlu0 %v3022, 96
        %v3114 = vpop.permute.xlu0 %3113
        %3115 = vrot.lane.b32.xlu0 %v3023, 96
        %v3116 = vpop.permute.xlu0 %3115
        %3117 = vrot.lane.b32.xlu0 %v3024, 96
        %v3118 = vpop.permute.xlu0 %3117
        %3119 = vrot.lane.b32.xlu0 %v3025, 96
        %v3120 = vpop.permute.xlu0 %3119
        %3121 = vrot.lane.b32.xlu0 %v3026, 96
        %v3122 = vpop.permute.xlu0 %3121
        %vm3155 = vcmask 917248
        %3156 = vst.msk [vmem:[#allocation2] sm:$0xff] %vm3155, %v3060
        %3157 = vst.msk [vmem:[#allocation2 + $0x10] sm:$0xff] %vm3155, %v3062
        %3158 = vst.msk [vmem:[#allocation2 + $0x20] sm:$0xff] %vm3155, %v3064
        %3159 = vst.msk [vmem:[#allocation2 + $0x30] sm:$0xff] %vm3155, %v3066
        %3160 = vst.msk [vmem:[#allocation2 + $0x40] sm:$0xff] %vm3155, %v3068
        %3161 = vst.msk [vmem:[#allocation2 + $0x50] sm:$0xff] %vm3155, %v3070
        %3162 = vst.msk [vmem:[#allocation2 + $0x60] sm:$0xff] %vm3155, %v3072
        %3163 = vst.msk [vmem:[#allocation2 + $0x70] sm:$0xff] %vm3155, %v3074
        %3164 = vst.msk [vmem:[#allocation2 + $0x80] sm:$0xff] %vm3155, %v3076
        %3165 = vst.msk [vmem:[#allocation2 + $0x90] sm:$0xff] %vm3155, %v3078
        %3166 = vst.msk [vmem:[#allocation2 + $0xa0] sm:$0xff] %vm3155, %v3080
        %3167 = vst.msk [vmem:[#allocation2 + $0xb0] sm:$0xff] %vm3155, %v3082
        %3168 = vst.msk [vmem:[#allocation2 + $0xc0] sm:$0xff] %vm3155, %v3084
        %3169 = vst.msk [vmem:[#allocation2 + $0xd0] sm:$0xff] %vm3155, %v3086
        %3170 = vst.msk [vmem:[#allocation2 + $0xe0] sm:$0xff] %vm3155, %v3088
        %3171 = vst.msk [vmem:[#allocation2 + $0xf0] sm:$0xff] %vm3155, %v3090
        %3172 = vst.msk [vmem:[#allocation2 + $0x100] sm:$0xff] %vm3155, %v3092
        %3173 = vst.msk [vmem:[#allocation2 + $0x110] sm:$0xff] %vm3155, %v3094
        %3174 = vst.msk [vmem:[#allocation2 + $0x120] sm:$0xff] %vm3155, %v3096
        %3175 = vst.msk [vmem:[#allocation2 + $0x130] sm:$0xff] %vm3155, %v3098
        %3176 = vst.msk [vmem:[#allocation2 + $0x140] sm:$0xff] %vm3155, %v3100
        %3177 = vst.msk [vmem:[#allocation2 + $0x150] sm:$0xff] %vm3155, %v3102
        %3178 = vst.msk [vmem:[#allocation2 + $0x160] sm:$0xff] %vm3155, %v3104
        %3179 = vst.msk [vmem:[#allocation2 + $0x170] sm:$0xff] %vm3155, %v3106
        %3180 = vst.msk [vmem:[#allocation2 + $0x180] sm:$0xff] %vm3155, %v3108
        %3181 = vst.msk [vmem:[#allocation2 + $0x190] sm:$0xff] %vm3155, %v3110
        %3182 = vst.msk [vmem:[#allocation2 + $0x1a0] sm:$0xff] %vm3155, %v3112
        %3183 = vst.msk [vmem:[#allocation2 + $0x1b0] sm:$0xff] %vm3155, %v3114
        %3184 = vst.msk [vmem:[#allocation2 + $0x1c0] sm:$0xff] %vm3155, %v3116
        %3185 = vst.msk [vmem:[#allocation2 + $0x1d0] sm:$0xff] %vm3155, %v3118
        %3186 = vst.msk [vmem:[#allocation2 + $0x1e0] sm:$0xff] %vm3155, %v3120
        %3187 = vst.msk [vmem:[#allocation2 + $0x1f0] sm:$0xff] %vm3155, %v3122
        %v3188 = vsel %vm713, 1, 0
        %v3189 = vsel %vm714, 1, 0
        %v3190 = vsel %vm715, 1, 0
        %v3191 = vsel %vm716, 1, 0
        %v3192 = vsel %vm717, 1, 0
        %v3193 = vsel %vm718, 1, 0
        %v3194 = vsel %vm719, 1, 0
        %v3195 = vsel %vm720, 1, 0
        %v3196 = vsel %vm721, 1, 0
        %v3197 = vsel %vm722, 1, 0
        %v3198 = vsel %vm723, 1, 0
        %v3199 = vsel %vm724, 1, 0
        %v3200 = vsel %vm725, 1, 0
        %v3201 = vsel %vm726, 1, 0
        %v3202 = vsel %vm727, 1, 0
        %v3203 = vsel %vm728, 1, 0
        %v3204 = vsel %vm729, 1, 0
        %v3205 = vsel %vm730, 1, 0
        %v3206 = vsel %vm731, 1, 0
        %v3207 = vsel %vm732, 1, 0
        %v3208 = vsel %vm733, 1, 0
        %v3209 = vsel %vm734, 1, 0
        %v3210 = vsel %vm735, 1, 0
        %v3211 = vsel %vm736, 1, 0
        %v3212 = vsel %vm737, 1, 0
        %v3213 = vsel %vm738, 1, 0
        %v3214 = vsel %vm739, 1, 0
        %v3215 = vsel %vm740, 1, 0
        %v3216 = vsel %vm741, 1, 0
        %v3217 = vsel %vm742, 1, 0
        %v3218 = vsel %vm743, 1, 0
        %v3219 = vsel %vm744, 1, 0
        %3220 = vset.pattern.permute.xlu0 0
        %3221 = vperm.xlu0 %3220, %v3188
        %v3222 = vpop.permute.xlu0 %3221
        %3223 = vset.pattern.permute.xlu0 0
        %3224 = vperm.xlu0 %3223, %v3189
        %v3225 = vpop.permute.xlu0 %3224
        %3226 = vset.pattern.permute.xlu0 0
        %3227 = vperm.xlu0 %3226, %v3190
        %v3228 = vpop.permute.xlu0 %3227
        %3229 = vset.pattern.permute.xlu0 0
        %3230 = vperm.xlu0 %3229, %v3191
        %v3231 = vpop.permute.xlu0 %3230
        %3232 = vset.pattern.permute.xlu0 0
        %3233 = vperm.xlu0 %3232, %v3192
        %v3234 = vpop.permute.xlu0 %3233
        %3235 = vset.pattern.permute.xlu0 0
        %3236 = vperm.xlu0 %3235, %v3193
        %v3237 = vpop.permute.xlu0 %3236
        %3238 = vset.pattern.permute.xlu0 0
        %3239 = vperm.xlu0 %3238, %v3194
        %v3240 = vpop.permute.xlu0 %3239
        %3241 = vset.pattern.permute.xlu0 0
        %3242 = vperm.xlu0 %3241, %v3195
        %v3243 = vpop.permute.xlu0 %3242
        %3244 = vset.pattern.permute.xlu0 0
        %3245 = vperm.xlu0 %3244, %v3196
        %v3246 = vpop.permute.xlu0 %3245
        %3247 = vset.pattern.permute.xlu0 0
        %3248 = vperm.xlu0 %3247, %v3197
        %v3249 = vpop.permute.xlu0 %3248
        %3250 = vset.pattern.permute.xlu0 0
        %3251 = vperm.xlu0 %3250, %v3198
        %v3252 = vpop.permute.xlu0 %3251
        %3253 = vset.pattern.permute.xlu0 0
        %3254 = vperm.xlu0 %3253, %v3199
        %v3255 = vpop.permute.xlu0 %3254
        %3256 = vset.pattern.permute.xlu0 0
        %3257 = vperm.xlu0 %3256, %v3200
        %v3258 = vpop.permute.xlu0 %3257
        %3259 = vset.pattern.permute.xlu0 0
        %3260 = vperm.xlu0 %3259, %v3201
        %v3261 = vpop.permute.xlu0 %3260
        %3262 = vset.pattern.permute.xlu0 0
        %3263 = vperm.xlu0 %3262, %v3202
        %v3264 = vpop.permute.xlu0 %3263
        %3265 = vset.pattern.permute.xlu0 0
        %3266 = vperm.xlu0 %3265, %v3203
        %v3267 = vpop.permute.xlu0 %3266
        %3268 = vset.pattern.permute.xlu0 0
        %3269 = vperm.xlu0 %3268, %v3204
        %v3270 = vpop.permute.xlu0 %3269
        %3271 = vset.pattern.permute.xlu0 0
        %3272 = vperm.xlu0 %3271, %v3205
        %v3273 = vpop.permute.xlu0 %3272
        %3274 = vset.pattern.permute.xlu0 0
        %3275 = vperm.xlu0 %3274, %v3206
        %v3276 = vpop.permute.xlu0 %3275
        %3277 = vset.pattern.permute.xlu0 0
        %3278 = vperm.xlu0 %3277, %v3207
        %v3279 = vpop.permute.xlu0 %3278
        %3280 = vset.pattern.permute.xlu0 0
        %3281 = vperm.xlu0 %3280, %v3208
        %v3282 = vpop.permute.xlu0 %3281
        %3283 = vset.pattern.permute.xlu0 0
        %3284 = vperm.xlu0 %3283, %v3209
        %v3285 = vpop.permute.xlu0 %3284
        %3286 = vset.pattern.permute.xlu0 0
        %3287 = vperm.xlu0 %3286, %v3210
        %v3288 = vpop.permute.xlu0 %3287
        %3289 = vset.pattern.permute.xlu0 0
        %3290 = vperm.xlu0 %3289, %v3211
        %v3291 = vpop.permute.xlu0 %3290
        %3292 = vset.pattern.permute.xlu0 0
        %3293 = vperm.xlu0 %3292, %v3212
        %v3294 = vpop.permute.xlu0 %3293
        %3295 = vset.pattern.permute.xlu0 0
        %3296 = vperm.xlu0 %3295, %v3213
        %v3297 = vpop.permute.xlu0 %3296
        %3298 = vset.pattern.permute.xlu0 0
        %3299 = vperm.xlu0 %3298, %v3214
        %v3300 = vpop.permute.xlu0 %3299
        %3301 = vset.pattern.permute.xlu0 0
        %3302 = vperm.xlu0 %3301, %v3215
        %v3303 = vpop.permute.xlu0 %3302
        %3304 = vset.pattern.permute.xlu0 0
        %3305 = vperm.xlu0 %3304, %v3216
        %v3306 = vpop.permute.xlu0 %3305
        %3307 = vset.pattern.permute.xlu0 0
        %3308 = vperm.xlu0 %3307, %v3217
        %v3309 = vpop.permute.xlu0 %3308
        %3310 = vset.pattern.permute.xlu0 0
        %3311 = vperm.xlu0 %3310, %v3218
        %v3312 = vpop.permute.xlu0 %3311
        %3313 = vset.pattern.permute.xlu0 0
        %3314 = vperm.xlu0 %3313, %v3219
        %v3315 = vpop.permute.xlu0 %3314
        %vm3316 = vcmp.eq.s32.totalorder %v3222, 1
        %vm3317 = vcmp.eq.s32.totalorder %v3225, 1
        %vm3318 = vcmp.eq.s32.totalorder %v3228, 1
        %vm3319 = vcmp.eq.s32.totalorder %v3231, 1
        %vm3320 = vcmp.eq.s32.totalorder %v3234, 1
        %vm3321 = vcmp.eq.s32.totalorder %v3237, 1
        %vm3322 = vcmp.eq.s32.totalorder %v3240, 1
        %vm3323 = vcmp.eq.s32.totalorder %v3243, 1
        %vm3324 = vcmp.eq.s32.totalorder %v3246, 1
        %vm3325 = vcmp.eq.s32.totalorder %v3249, 1
        %vm3326 = vcmp.eq.s32.totalorder %v3252, 1
        %vm3327 = vcmp.eq.s32.totalorder %v3255, 1
        %vm3328 = vcmp.eq.s32.totalorder %v3258, 1
        %vm3329 = vcmp.eq.s32.totalorder %v3261, 1
        %vm3330 = vcmp.eq.s32.totalorder %v3264, 1
        %vm3331 = vcmp.eq.s32.totalorder %v3267, 1
        %vm3332 = vcmp.eq.s32.totalorder %v3270, 1
        %vm3333 = vcmp.eq.s32.totalorder %v3273, 1
        %vm3334 = vcmp.eq.s32.totalorder %v3276, 1
        %vm3335 = vcmp.eq.s32.totalorder %v3279, 1
        %vm3336 = vcmp.eq.s32.totalorder %v3282, 1
        %vm3337 = vcmp.eq.s32.totalorder %v3285, 1
        %vm3338 = vcmp.eq.s32.totalorder %v3288, 1
        %vm3339 = vcmp.eq.s32.totalorder %v3291, 1
        %vm3340 = vcmp.eq.s32.totalorder %v3294, 1
        %vm3341 = vcmp.eq.s32.totalorder %v3297, 1
        %vm3342 = vcmp.eq.s32.totalorder %v3300, 1
        %vm3343 = vcmp.eq.s32.totalorder %v3303, 1
        %vm3344 = vcmp.eq.s32.totalorder %v3306, 1
        %vm3345 = vcmp.eq.s32.totalorder %v3309, 1
        %vm3346 = vcmp.eq.s32.totalorder %v3312, 1
        %vm3347 = vcmp.eq.s32.totalorder %v3315, 1
        %v3348 = vsel %vm3316, %v587, 0.0
        %v3349 = vsel %vm3317, %v588, 0.0
        %v3350 = vsel %vm3318, %v589, 0.0
        %v3351 = vsel %vm3319, %v590, 0.0
        %v3352 = vsel %vm3320, %v591, 0.0
        %v3353 = vsel %vm3321, %v592, 0.0
        %v3354 = vsel %vm3322, %v593, 0.0
        %v3355 = vsel %vm3323, %v594, 0.0
        %v3356 = vsel %vm3324, %v595, 0.0
        %v3357 = vsel %vm3325, %v596, 0.0
        %v3358 = vsel %vm3326, %v597, 0.0
        %v3359 = vsel %vm3327, %v598, 0.0
        %v3360 = vsel %vm3328, %v599, 0.0
        %v3361 = vsel %vm3329, %v600, 0.0
        %v3362 = vsel %vm3330, %v601, 0.0
        %v3363 = vsel %vm3331, %v602, 0.0
        %v3364 = vsel %vm3332, %v603, 0.0
        %v3365 = vsel %vm3333, %v604, 0.0
        %v3366 = vsel %vm3334, %v605, 0.0
        %v3367 = vsel %vm3335, %v606, 0.0
        %v3368 = vsel %vm3336, %v607, 0.0
        %v3369 = vsel %vm3337, %v608, 0.0
        %v3370 = vsel %vm3338, %v609, 0.0
        %v3371 = vsel %vm3339, %v610, 0.0
        %v3372 = vsel %vm3340, %v611, 0.0
        %v3373 = vsel %vm3341, %v612, 0.0
        %v3374 = vsel %vm3342, %v613, 0.0
        %v3375 = vsel %vm3343, %v614, 0.0
        %v3376 = vsel %vm3344, %v615, 0.0
        %v3377 = vsel %vm3345, %v616, 0.0
        %v3378 = vsel %vm3346, %v585, 0.0
        %v3379 = vsel %vm3347, %v586, 0.0
        %3412 = vrot.lane.b32.xlu0 %v3348, 112
        %v3413 = vpop.permute.xlu0 %3412
        %3414 = vrot.lane.b32.xlu0 %v3349, 112
        %v3415 = vpop.permute.xlu0 %3414
        %3416 = vrot.lane.b32.xlu0 %v3350, 112
        %v3417 = vpop.permute.xlu0 %3416
        %3418 = vrot.lane.b32.xlu0 %v3351, 112
        %v3419 = vpop.permute.xlu0 %3418
        %3420 = vrot.lane.b32.xlu0 %v3352, 112
        %v3421 = vpop.permute.xlu0 %3420
        %3422 = vrot.lane.b32.xlu0 %v3353, 112
        %v3423 = vpop.permute.xlu0 %3422
        %3424 = vrot.lane.b32.xlu0 %v3354, 112
        %v3425 = vpop.permute.xlu0 %3424
        %3426 = vrot.lane.b32.xlu0 %v3355, 112
        %v3427 = vpop.permute.xlu0 %3426
        %3428 = vrot.lane.b32.xlu0 %v3356, 112
        %v3429 = vpop.permute.xlu0 %3428
        %3430 = vrot.lane.b32.xlu0 %v3357, 112
        %v3431 = vpop.permute.xlu0 %3430
        %3432 = vrot.lane.b32.xlu0 %v3358, 112
        %v3433 = vpop.permute.xlu0 %3432
        %3434 = vrot.lane.b32.xlu0 %v3359, 112
        %v3435 = vpop.permute.xlu0 %3434
        %3436 = vrot.lane.b32.xlu0 %v3360, 112
        %v3437 = vpop.permute.xlu0 %3436
        %3438 = vrot.lane.b32.xlu0 %v3361, 112
        %v3439 = vpop.permute.xlu0 %3438
        %3440 = vrot.lane.b32.xlu0 %v3362, 112
        %v3441 = vpop.permute.xlu0 %3440
        %3442 = vrot.lane.b32.xlu0 %v3363, 112
        %v3443 = vpop.permute.xlu0 %3442
        %3444 = vrot.lane.b32.xlu0 %v3364, 112
        %v3445 = vpop.permute.xlu0 %3444
        %3446 = vrot.lane.b32.xlu0 %v3365, 112
        %v3447 = vpop.permute.xlu0 %3446
        %3448 = vrot.lane.b32.xlu0 %v3366, 112
        %v3449 = vpop.permute.xlu0 %3448
        %3450 = vrot.lane.b32.xlu0 %v3367, 112
        %v3451 = vpop.permute.xlu0 %3450
        %3452 = vrot.lane.b32.xlu0 %v3368, 112
        %v3453 = vpop.permute.xlu0 %3452
        %3454 = vrot.lane.b32.xlu0 %v3369, 112
        %v3455 = vpop.permute.xlu0 %3454
        %3456 = vrot.lane.b32.xlu0 %v3370, 112
        %v3457 = vpop.permute.xlu0 %3456
        %3458 = vrot.lane.b32.xlu0 %v3371, 112
        %v3459 = vpop.permute.xlu0 %3458
        %3460 = vrot.lane.b32.xlu0 %v3372, 112
        %v3461 = vpop.permute.xlu0 %3460
        %3462 = vrot.lane.b32.xlu0 %v3373, 112
        %v3463 = vpop.permute.xlu0 %3462
        %3464 = vrot.lane.b32.xlu0 %v3374, 112
        %v3465 = vpop.permute.xlu0 %3464
        %3466 = vrot.lane.b32.xlu0 %v3375, 112
        %v3467 = vpop.permute.xlu0 %3466
        %3468 = vrot.lane.b32.xlu0 %v3376, 112
        %v3469 = vpop.permute.xlu0 %3468
        %3470 = vrot.lane.b32.xlu0 %v3377, 112
        %v3471 = vpop.permute.xlu0 %3470
        %3472 = vrot.lane.b32.xlu0 %v3378, 112
        %v3473 = vpop.permute.xlu0 %3472
        %3474 = vrot.lane.b32.xlu0 %v3379, 112
        %v3475 = vpop.permute.xlu0 %3474
        %vm3508 = vcmask 1048448
        %3509 = vst.msk [vmem:[#allocation2] sm:$0xff] %vm3508, %v3413
        %3510 = vst.msk [vmem:[#allocation2 + $0x10] sm:$0xff] %vm3508, %v3415
        %3511 = vst.msk [vmem:[#allocation2 + $0x20] sm:$0xff] %vm3508, %v3417
        %3512 = vst.msk [vmem:[#allocation2 + $0x30] sm:$0xff] %vm3508, %v3419
        %3513 = vst.msk [vmem:[#allocation2 + $0x40] sm:$0xff] %vm3508, %v3421
        %3514 = vst.msk [vmem:[#allocation2 + $0x50] sm:$0xff] %vm3508, %v3423
        %3515 = vst.msk [vmem:[#allocation2 + $0x60] sm:$0xff] %vm3508, %v3425
        %3516 = vst.msk [vmem:[#allocation2 + $0x70] sm:$0xff] %vm3508, %v3427
        %3517 = vst.msk [vmem:[#allocation2 + $0x80] sm:$0xff] %vm3508, %v3429
        %3518 = vst.msk [vmem:[#allocation2 + $0x90] sm:$0xff] %vm3508, %v3431
        %3519 = vst.msk [vmem:[#allocation2 + $0xa0] sm:$0xff] %vm3508, %v3433
        %3520 = vst.msk [vmem:[#allocation2 + $0xb0] sm:$0xff] %vm3508, %v3435
        %3521 = vst.msk [vmem:[#allocation2 + $0xc0] sm:$0xff] %vm3508, %v3437
        %3522 = vst.msk [vmem:[#allocation2 + $0xd0] sm:$0xff] %vm3508, %v3439
        %3523 = vst.msk [vmem:[#allocation2 + $0xe0] sm:$0xff] %vm3508, %v3441
        %3524 = vst.msk [vmem:[#allocation2 + $0xf0] sm:$0xff] %vm3508, %v3443
        %3525 = vst.msk [vmem:[#allocation2 + $0x100] sm:$0xff] %vm3508, %v3445
        %3526 = vst.msk [vmem:[#allocation2 + $0x110] sm:$0xff] %vm3508, %v3447
        %3527 = vst.msk [vmem:[#allocation2 + $0x120] sm:$0xff] %vm3508, %v3449
        %3528 = vst.msk [vmem:[#allocation2 + $0x130] sm:$0xff] %vm3508, %v3451
        %3529 = vst.msk [vmem:[#allocation2 + $0x140] sm:$0xff] %vm3508, %v3453
        %3530 = vst.msk [vmem:[#allocation2 + $0x150] sm:$0xff] %vm3508, %v3455
        %3531 = vst.msk [vmem:[#allocation2 + $0x160] sm:$0xff] %vm3508, %v3457
        %3532 = vst.msk [vmem:[#allocation2 + $0x170] sm:$0xff] %vm3508, %v3459
        %3533 = vst.msk [vmem:[#allocation2 + $0x180] sm:$0xff] %vm3508, %v3461
        %3534 = vst.msk [vmem:[#allocation2 + $0x190] sm:$0xff] %vm3508, %v3463
        %3535 = vst.msk [vmem:[#allocation2 + $0x1a0] sm:$0xff] %vm3508, %v3465
        %3536 = vst.msk [vmem:[#allocation2 + $0x1b0] sm:$0xff] %vm3508, %v3467
        %3537 = vst.msk [vmem:[#allocation2 + $0x1c0] sm:$0xff] %vm3508, %v3469
        %3538 = vst.msk [vmem:[#allocation2 + $0x1d0] sm:$0xff] %vm3508, %v3471
        %3539 = vst.msk [vmem:[#allocation2 + $0x1e0] sm:$0xff] %vm3508, %v3473
        %3540 = vst.msk [vmem:[#allocation2 + $0x1f0] sm:$0xff] %vm3508, %v3475
        %vm3541 = vmand %vm713, %vm777
        %vm3542 = vmand %vm714, %vm778
        %vm3543 = vmand %vm715, %vm779
        %vm3544 = vmand %vm716, %vm780
        %vm3545 = vmand %vm717, %vm781
        %vm3546 = vmand %vm718, %vm782
        %vm3547 = vmand %vm719, %vm783
        %vm3548 = vmand %vm720, %vm784
        %vm3549 = vmand %vm721, %vm785
        %vm3550 = vmand %vm722, %vm786
        %vm3551 = vmand %vm723, %vm787
        %vm3552 = vmand %vm724, %vm788
        %vm3553 = vmand %vm725, %vm789
        %vm3554 = vmand %vm726, %vm790
        %vm3555 = vmand %vm727, %vm791
        %vm3556 = vmand %vm728, %vm792
        %vm3557 = vmand %vm729, %vm793
        %vm3558 = vmand %vm730, %vm794
        %vm3559 = vmand %vm731, %vm795
        %vm3560 = vmand %vm732, %vm796
        %vm3561 = vmand %vm733, %vm797
        %vm3562 = vmand %vm734, %vm798
        %vm3563 = vmand %vm735, %vm799
        %vm3564 = vmand %vm736, %vm800
        %vm3565 = vmand %vm737, %vm801
        %vm3566 = vmand %vm738, %vm802
        %vm3567 = vmand %vm739, %vm803
        %vm3568 = vmand %vm740, %vm804
        %vm3569 = vmand %vm741, %vm805
        %vm3570 = vmand %vm742, %vm806
        %vm3571 = vmand %vm743, %vm807
        %vm3572 = vmand %vm744, %vm808
        %v3573 = vsel %vm3541, 1, 0
        %v3574 = vsel %vm3542, 1, 0
        %v3575 = vsel %vm3543, 1, 0
        %v3576 = vsel %vm3544, 1, 0
        %v3577 = vsel %vm3545, 1, 0
        %v3578 = vsel %vm3546, 1, 0
        %v3579 = vsel %vm3547, 1, 0
        %v3580 = vsel %vm3548, 1, 0
        %v3581 = vsel %vm3549, 1, 0
        %v3582 = vsel %vm3550, 1, 0
        %v3583 = vsel %vm3551, 1, 0
        %v3584 = vsel %vm3552, 1, 0
        %v3585 = vsel %vm3553, 1, 0
        %v3586 = vsel %vm3554, 1, 0
        %v3587 = vsel %vm3555, 1, 0
        %v3588 = vsel %vm3556, 1, 0
        %v3589 = vsel %vm3557, 1, 0
        %v3590 = vsel %vm3558, 1, 0
        %v3591 = vsel %vm3559, 1, 0
        %v3592 = vsel %vm3560, 1, 0
        %v3593 = vsel %vm3561, 1, 0
        %v3594 = vsel %vm3562, 1, 0
        %v3595 = vsel %vm3563, 1, 0
        %v3596 = vsel %vm3564, 1, 0
        %v3597 = vsel %vm3565, 1, 0
        %v3598 = vsel %vm3566, 1, 0
        %v3599 = vsel %vm3567, 1, 0
        %v3600 = vsel %vm3568, 1, 0
        %v3601 = vsel %vm3569, 1, 0
        %v3602 = vsel %vm3570, 1, 0
        %v3603 = vsel %vm3571, 1, 0
        %v3604 = vsel %vm3572, 1, 0
        %3605 = vset.pattern.permute.xlu0 0
        %3606 = vperm.xlu0 %3605, %v3573
        %v3607 = vpop.permute.xlu0 %3606
        %3608 = vset.pattern.permute.xlu0 0
        %3609 = vperm.xlu0 %3608, %v3574
        %v3610 = vpop.permute.xlu0 %3609
        %3611 = vset.pattern.permute.xlu0 0
        %3612 = vperm.xlu0 %3611, %v3575
        %v3613 = vpop.permute.xlu0 %3612
        %3614 = vset.pattern.permute.xlu0 0
        %3615 = vperm.xlu0 %3614, %v3576
        %v3616 = vpop.permute.xlu0 %3615
        %3617 = vset.pattern.permute.xlu0 0
        %3618 = vperm.xlu0 %3617, %v3577
        %v3619 = vpop.permute.xlu0 %3618
        %3620 = vset.pattern.permute.xlu0 0
        %3621 = vperm.xlu0 %3620, %v3578
        %v3622 = vpop.permute.xlu0 %3621
        %3623 = vset.pattern.permute.xlu0 0
        %3624 = vperm.xlu0 %3623, %v3579
        %v3625 = vpop.permute.xlu0 %3624
        %3626 = vset.pattern.permute.xlu0 0
        %3627 = vperm.xlu0 %3626, %v3580
        %v3628 = vpop.permute.xlu0 %3627
        %3629 = vset.pattern.permute.xlu0 0
        %3630 = vperm.xlu0 %3629, %v3581
        %v3631 = vpop.permute.xlu0 %3630
        %3632 = vset.pattern.permute.xlu0 0
        %3633 = vperm.xlu0 %3632, %v3582
        %v3634 = vpop.permute.xlu0 %3633
        %3635 = vset.pattern.permute.xlu0 0
        %3636 = vperm.xlu0 %3635, %v3583
        %v3637 = vpop.permute.xlu0 %3636
        %3638 = vset.pattern.permute.xlu0 0
        %3639 = vperm.xlu0 %3638, %v3584
        %v3640 = vpop.permute.xlu0 %3639
        %3641 = vset.pattern.permute.xlu0 0
        %3642 = vperm.xlu0 %3641, %v3585
        %v3643 = vpop.permute.xlu0 %3642
        %3644 = vset.pattern.permute.xlu0 0
        %3645 = vperm.xlu0 %3644, %v3586
        %v3646 = vpop.permute.xlu0 %3645
        %3647 = vset.pattern.permute.xlu0 0
        %3648 = vperm.xlu0 %3647, %v3587
        %v3649 = vpop.permute.xlu0 %3648
        %3650 = vset.pattern.permute.xlu0 0
        %3651 = vperm.xlu0 %3650, %v3588
        %v3652 = vpop.permute.xlu0 %3651
        %3653 = vset.pattern.permute.xlu0 0
        %3654 = vperm.xlu0 %3653, %v3589
        %v3655 = vpop.permute.xlu0 %3654
        %3656 = vset.pattern.permute.xlu0 0
        %3657 = vperm.xlu0 %3656, %v3590
        %v3658 = vpop.permute.xlu0 %3657
        %3659 = vset.pattern.permute.xlu0 0
        %3660 = vperm.xlu0 %3659, %v3591
        %v3661 = vpop.permute.xlu0 %3660
        %3662 = vset.pattern.permute.xlu0 0
        %3663 = vperm.xlu0 %3662, %v3592
        %v3664 = vpop.permute.xlu0 %3663
        %3665 = vset.pattern.permute.xlu0 0
        %3666 = vperm.xlu0 %3665, %v3593
        %v3667 = vpop.permute.xlu0 %3666
        %3668 = vset.pattern.permute.xlu0 0
        %3669 = vperm.xlu0 %3668, %v3594
        %v3670 = vpop.permute.xlu0 %3669
        %3671 = vset.pattern.permute.xlu0 0
        %3672 = vperm.xlu0 %3671, %v3595
        %v3673 = vpop.permute.xlu0 %3672
        %3674 = vset.pattern.permute.xlu0 0
        %3675 = vperm.xlu0 %3674, %v3596
        %v3676 = vpop.permute.xlu0 %3675
        %3677 = vset.pattern.permute.xlu0 0
        %3678 = vperm.xlu0 %3677, %v3597
        %v3679 = vpop.permute.xlu0 %3678
        %3680 = vset.pattern.permute.xlu0 0
        %3681 = vperm.xlu0 %3680, %v3598
        %v3682 = vpop.permute.xlu0 %3681
        %3683 = vset.pattern.permute.xlu0 0
        %3684 = vperm.xlu0 %3683, %v3599
        %v3685 = vpop.permute.xlu0 %3684
        %3686 = vset.pattern.permute.xlu0 0
        %3687 = vperm.xlu0 %3686, %v3600
        %v3688 = vpop.permute.xlu0 %3687
        %3689 = vset.pattern.permute.xlu0 0
        %3690 = vperm.xlu0 %3689, %v3601
        %v3691 = vpop.permute.xlu0 %3690
        %3692 = vset.pattern.permute.xlu0 0
        %3693 = vperm.xlu0 %3692, %v3602
        %v3694 = vpop.permute.xlu0 %3693
        %3695 = vset.pattern.permute.xlu0 0
        %3696 = vperm.xlu0 %3695, %v3603
        %v3697 = vpop.permute.xlu0 %3696
        %3698 = vset.pattern.permute.xlu0 0
        %3699 = vperm.xlu0 %3698, %v3604
        %v3700 = vpop.permute.xlu0 %3699
        %vm3701 = vcmp.eq.s32.totalorder %v3607, 1
        %vm3702 = vcmp.eq.s32.totalorder %v3610, 1
        %vm3703 = vcmp.eq.s32.totalorder %v3613, 1
        %vm3704 = vcmp.eq.s32.totalorder %v3616, 1
        %vm3705 = vcmp.eq.s32.totalorder %v3619, 1
        %vm3706 = vcmp.eq.s32.totalorder %v3622, 1
        %vm3707 = vcmp.eq.s32.totalorder %v3625, 1
        %vm3708 = vcmp.eq.s32.totalorder %v3628, 1
        %vm3709 = vcmp.eq.s32.totalorder %v3631, 1
        %vm3710 = vcmp.eq.s32.totalorder %v3634, 1
        %vm3711 = vcmp.eq.s32.totalorder %v3637, 1
        %vm3712 = vcmp.eq.s32.totalorder %v3640, 1
        %vm3713 = vcmp.eq.s32.totalorder %v3643, 1
        %vm3714 = vcmp.eq.s32.totalorder %v3646, 1
        %vm3715 = vcmp.eq.s32.totalorder %v3649, 1
        %vm3716 = vcmp.eq.s32.totalorder %v3652, 1
        %vm3717 = vcmp.eq.s32.totalorder %v3655, 1
        %vm3718 = vcmp.eq.s32.totalorder %v3658, 1
        %vm3719 = vcmp.eq.s32.totalorder %v3661, 1
        %vm3720 = vcmp.eq.s32.totalorder %v3664, 1
        %vm3721 = vcmp.eq.s32.totalorder %v3667, 1
        %vm3722 = vcmp.eq.s32.totalorder %v3670, 1
        %vm3723 = vcmp.eq.s32.totalorder %v3673, 1
        %vm3724 = vcmp.eq.s32.totalorder %v3676, 1
        %vm3725 = vcmp.eq.s32.totalorder %v3679, 1
        %vm3726 = vcmp.eq.s32.totalorder %v3682, 1
        %vm3727 = vcmp.eq.s32.totalorder %v3685, 1
        %vm3728 = vcmp.eq.s32.totalorder %v3688, 1
        %vm3729 = vcmp.eq.s32.totalorder %v3691, 1
        %vm3730 = vcmp.eq.s32.totalorder %v3694, 1
        %vm3731 = vcmp.eq.s32.totalorder %v3697, 1
        %vm3732 = vcmp.eq.s32.totalorder %v3700, 1
        %v3733 = vsel %vm3701, %v1547, 0.0
        %v3734 = vsel %vm3702, %v1546, 0.0
        %v3735 = vsel %vm3703, %v1545, 0.0
        %v3736 = vsel %vm3704, %v1544, 0.0
        %v3737 = vsel %vm3705, %v1543, 0.0
        %v3738 = vsel %vm3706, %v1542, 0.0
        %v3739 = vsel %vm3707, %v1541, 0.0
        %v3740 = vsel %vm3708, %v1540, 0.0
        %v3741 = vsel %vm3709, %v1539, 0.0
        %v3742 = vsel %vm3710, %v1538, 0.0
        %v3743 = vsel %vm3711, %v1537, 0.0
        %v3744 = vsel %vm3712, %v1536, 0.0
        %v3745 = vsel %vm3713, %v1535, 0.0
        %v3746 = vsel %vm3714, %v1534, 0.0
        %v3747 = vsel %vm3715, %v1533, 0.0
        %v3748 = vsel %vm3716, %v1532, 0.0
        %v3749 = vsel %vm3717, %v1531, 0.0
        %v3750 = vsel %vm3718, %v1530, 0.0
        %v3751 = vsel %vm3719, %v1529, 0.0
        %v3752 = vsel %vm3720, %v1528, 0.0
        %v3753 = vsel %vm3721, %v1527, 0.0
        %v3754 = vsel %vm3722, %v1526, 0.0
        %v3755 = vsel %vm3723, %v1525, 0.0
        %v3756 = vsel %vm3724, %v1524, 0.0
        %v3757 = vsel %vm3725, %v1523, 0.0
        %v3758 = vsel %vm3726, %v1522, 0.0
        %v3759 = vsel %vm3727, %v1521, 0.0
        %v3760 = vsel %vm3728, %v1520, 0.0
        %v3761 = vsel %vm3729, %v1519, 0.0
        %v3762 = vsel %vm3730, %v1550, 0.0
        %v3763 = vsel %vm3731, %v1549, 0.0
        %v3764 = vsel %vm3732, %v1548, 0.0
        %3765 = vst.msk [vmem:[#allocation2 + $0x8] sm:$0xff] %vm1100, %v3733
        %3766 = vst.msk [vmem:[#allocation2 + $0x18] sm:$0xff] %vm1100, %v3734
        %3767 = vst.msk [vmem:[#allocation2 + $0x28] sm:$0xff] %vm1100, %v3735
        %3768 = vst.msk [vmem:[#allocation2 + $0x38] sm:$0xff] %vm1100, %v3736
        %3769 = vst.msk [vmem:[#allocation2 + $0x48] sm:$0xff] %vm1100, %v3737
        %3770 = vst.msk [vmem:[#allocation2 + $0x58] sm:$0xff] %vm1100, %v3738
        %3771 = vst.msk [vmem:[#allocation2 + $0x68] sm:$0xff] %vm1100, %v3739
        %3772 = vst.msk [vmem:[#allocation2 + $0x78] sm:$0xff] %vm1100, %v3740
        %3773 = vst.msk [vmem:[#allocation2 + $0x88] sm:$0xff] %vm1100, %v3741
        %3774 = vst.msk [vmem:[#allocation2 + $0x98] sm:$0xff] %vm1100, %v3742
        %3775 = vst.msk [vmem:[#allocation2 + $0xa8] sm:$0xff] %vm1100, %v3743
        %3776 = vst.msk [vmem:[#allocation2 + $0xb8] sm:$0xff] %vm1100, %v3744
        %3777 = vst.msk [vmem:[#allocation2 + $0xc8] sm:$0xff] %vm1100, %v3745
        %3778 = vst.msk [vmem:[#allocation2 + $0xd8] sm:$0xff] %vm1100, %v3746
        %3779 = vst.msk [vmem:[#allocation2 + $0xe8] sm:$0xff] %vm1100, %v3747
        %3780 = vst.msk [vmem:[#allocation2 + $0xf8] sm:$0xff] %vm1100, %v3748
        %3781 = vst.msk [vmem:[#allocation2 + $0x108] sm:$0xff] %vm1100, %v3749
        %3782 = vst.msk [vmem:[#allocation2 + $0x118] sm:$0xff] %vm1100, %v3750
        %3783 = vst.msk [vmem:[#allocation2 + $0x128] sm:$0xff] %vm1100, %v3751
        %3784 = vst.msk [vmem:[#allocation2 + $0x138] sm:$0xff] %vm1100, %v3752
        %3785 = vst.msk [vmem:[#allocation2 + $0x148] sm:$0xff] %vm1100, %v3753
        %3786 = vst.msk [vmem:[#allocation2 + $0x158] sm:$0xff] %vm1100, %v3754
        %3787 = vst.msk [vmem:[#allocation2 + $0x168] sm:$0xff] %vm1100, %v3755
        %3788 = vst.msk [vmem:[#allocation2 + $0x178] sm:$0xff] %vm1100, %v3756
        %3789 = vst.msk [vmem:[#allocation2 + $0x188] sm:$0xff] %vm1100, %v3757
        %3790 = vst.msk [vmem:[#allocation2 + $0x198] sm:$0xff] %vm1100, %v3758
        %3791 = vst.msk [vmem:[#allocation2 + $0x1a8] sm:$0xff] %vm1100, %v3759
        %3792 = vst.msk [vmem:[#allocation2 + $0x1b8] sm:$0xff] %vm1100, %v3760
        %3793 = vst.msk [vmem:[#allocation2 + $0x1c8] sm:$0xff] %vm1100, %v3761
        %3794 = vst.msk [vmem:[#allocation2 + $0x1d8] sm:$0xff] %vm1100, %v3762
        %3795 = vst.msk [vmem:[#allocation2 + $0x1e8] sm:$0xff] %vm1100, %v3763
        %3796 = vst.msk [vmem:[#allocation2 + $0x1f8] sm:$0xff] %vm1100, %v3764
        %v3797 = vld [vmem:[#allocation2] sm:$0xff]
        %v3798 = vld [vmem:[#allocation2 + $0x8] sm:$0xff]
        %v3799 = vld [vmem:[#allocation2 + $0x10] sm:$0xff]
        %v3800 = vld [vmem:[#allocation2 + $0x18] sm:$0xff]
        %v3801 = vld [vmem:[#allocation2 + $0x20] sm:$0xff]
        %v3802 = vld [vmem:[#allocation2 + $0x28] sm:$0xff]
        %v3803 = vld [vmem:[#allocation2 + $0x30] sm:$0xff]
        %v3804 = vld [vmem:[#allocation2 + $0x38] sm:$0xff]
        %v3805 = vld [vmem:[#allocation2 + $0x40] sm:$0xff]
        %v3806 = vld [vmem:[#allocation2 + $0x48] sm:$0xff]
        %v3807 = vld [vmem:[#allocation2 + $0x50] sm:$0xff]
        %v3808 = vld [vmem:[#allocation2 + $0x58] sm:$0xff]
        %v3809 = vld [vmem:[#allocation2 + $0x60] sm:$0xff]
        %v3810 = vld [vmem:[#allocation2 + $0x68] sm:$0xff]
        %v3811 = vld [vmem:[#allocation2 + $0x70] sm:$0xff]
        %v3812 = vld [vmem:[#allocation2 + $0x78] sm:$0xff]
        %v3813 = vld [vmem:[#allocation2 + $0x80] sm:$0xff]
        %v3814 = vld [vmem:[#allocation2 + $0x88] sm:$0xff]
        %v3815 = vld [vmem:[#allocation2 + $0x90] sm:$0xff]
        %v3816 = vld [vmem:[#allocation2 + $0x98] sm:$0xff]
        %v3817 = vld [vmem:[#allocation2 + $0xa0] sm:$0xff]
        %v3818 = vld [vmem:[#allocation2 + $0xa8] sm:$0xff]
        %v3819 = vld [vmem:[#allocation2 + $0xb0] sm:$0xff]
        %v3820 = vld [vmem:[#allocation2 + $0xb8] sm:$0xff]
        %v3821 = vld [vmem:[#allocation2 + $0xc0] sm:$0xff]
        %v3822 = vld [vmem:[#allocation2 + $0xc8] sm:$0xff]
        %v3823 = vld [vmem:[#allocation2 + $0xd0] sm:$0xff]
        %v3824 = vld [vmem:[#allocation2 + $0xd8] sm:$0xff]
        %v3825 = vld [vmem:[#allocation2 + $0xe0] sm:$0xff]
        %v3826 = vld [vmem:[#allocation2 + $0xe8] sm:$0xff]
        %v3827 = vld [vmem:[#allocation2 + $0xf0] sm:$0xff]
        %v3828 = vld [vmem:[#allocation2 + $0xf8] sm:$0xff]
        %v3829 = vld [vmem:[#allocation2 + $0x100] sm:$0xff]
        %v3830 = vld [vmem:[#allocation2 + $0x108] sm:$0xff]
        %v3831 = vld [vmem:[#allocation2 + $0x110] sm:$0xff]
        %v3832 = vld [vmem:[#allocation2 + $0x118] sm:$0xff]
        %v3833 = vld [vmem:[#allocation2 + $0x120] sm:$0xff]
        %v3834 = vld [vmem:[#allocation2 + $0x128] sm:$0xff]
        %v3835 = vld [vmem:[#allocation2 + $0x130] sm:$0xff]
        %v3836 = vld [vmem:[#allocation2 + $0x138] sm:$0xff]
        %v3837 = vld [vmem:[#allocation2 + $0x140] sm:$0xff]
        %v3838 = vld [vmem:[#allocation2 + $0x148] sm:$0xff]
        %v3839 = vld [vmem:[#allocation2 + $0x150] sm:$0xff]
        %v3840 = vld [vmem:[#allocation2 + $0x158] sm:$0xff]
        %v3841 = vld [vmem:[#allocation2 + $0x160] sm:$0xff]
        %v3842 = vld [vmem:[#allocation2 + $0x168] sm:$0xff]
        %v3843 = vld [vmem:[#allocation2 + $0x170] sm:$0xff]
        %v3844 = vld [vmem:[#allocation2 + $0x178] sm:$0xff]
        %v3845 = vld [vmem:[#allocation2 + $0x180] sm:$0xff]
        %v3846 = vld [vmem:[#allocation2 + $0x188] sm:$0xff]
        %v3847 = vld [vmem:[#allocation2 + $0x190] sm:$0xff]
        %v3848 = vld [vmem:[#allocation2 + $0x198] sm:$0xff]
        %v3849 = vld [vmem:[#allocation2 + $0x1a0] sm:$0xff]
        %v3850 = vld [vmem:[#allocation2 + $0x1a8] sm:$0xff]
        %v3851 = vld [vmem:[#allocation2 + $0x1b0] sm:$0xff]
        %v3852 = vld [vmem:[#allocation2 + $0x1b8] sm:$0xff]
        %v3853 = vld [vmem:[#allocation2 + $0x1c0] sm:$0xff]
        %v3854 = vld [vmem:[#allocation2 + $0x1c8] sm:$0xff]
        %v3855 = vld [vmem:[#allocation2 + $0x1d0] sm:$0xff]
        %v3856 = vld [vmem:[#allocation2 + $0x1d8] sm:$0xff]
        %v3857 = vld [vmem:[#allocation2 + $0x1e0] sm:$0xff]
        %v3858 = vld [vmem:[#allocation2 + $0x1e8] sm:$0xff]
        %v3859 = vld [vmem:[#allocation2 + $0x1f0] sm:$0xff]
        %v3860 = vld [vmem:[#allocation2 + $0x1f8] sm:$0xff]
        %v3861 = vld [vmem:[%s5] sm:$0xff]
        %v3862 = vld [vmem:[%s5 + $0x8] sm:$0xff]
        %v3863 = vld [vmem:[%s5 + $0x10] sm:$0xff]
        %v3864 = vld [vmem:[%s5 + $0x18] sm:$0xff]
        %v3865 = vld [vmem:[%s5 + $0x20] sm:$0xff]
        %v3866 = vld [vmem:[%s5 + $0x28] sm:$0xff]
        %v3867 = vld [vmem:[%s5 + $0x30] sm:$0xff]
        %v3868 = vld [vmem:[%s5 + $0x38] sm:$0xff]
        %v3869 = vld [vmem:[%s5 + $0x40] sm:$0xff]
        %v3870 = vld [vmem:[%s5 + $0x48] sm:$0xff]
        %v3871 = vld [vmem:[%s5 + $0x50] sm:$0xff]
        %v3872 = vld [vmem:[%s5 + $0x58] sm:$0xff]
        %v3873 = vld [vmem:[%s5 + $0x60] sm:$0xff]
        %v3874 = vld [vmem:[%s5 + $0x68] sm:$0xff]
        %v3875 = vld [vmem:[%s5 + $0x70] sm:$0xff]
        %v3876 = vld [vmem:[%s5 + $0x78] sm:$0xff]
        %v3877 = vld [vmem:[%s5 + $0x80] sm:$0xff]
        %v3878 = vld [vmem:[%s5 + $0x88] sm:$0xff]
        %v3879 = vld [vmem:[%s6] sm:$0x1]
        %v3881 = vperm.slane %v3879, 0
        %v3884 = vsel %vm1100, %v3798, 0
        %v3887 = vsel %vm1100, %v3800, 0
        %v3890 = vsel %vm1100, %v3802, 0
        %v3893 = vsel %vm1100, %v3804, 0
        %v3896 = vsel %vm1100, %v3806, 0
        %v3899 = vsel %vm1100, %v3808, 0
        %v3902 = vsel %vm1100, %v3810, 0
        %v3905 = vsel %vm1100, %v3812, 0
        %v3908 = vsel %vm1100, %v3814, 0
        %v3911 = vsel %vm1100, %v3816, 0
        %v3914 = vsel %vm1100, %v3818, 0
        %v3917 = vsel %vm1100, %v3820, 0
        %v3920 = vsel %vm1100, %v3822, 0
        %v3923 = vsel %vm1100, %v3824, 0
        %v3926 = vsel %vm1100, %v3826, 0
        %v3929 = vsel %vm1100, %v3828, 0
        %v3932 = vsel %vm1100, %v3830, 0
        %v3935 = vsel %vm1100, %v3832, 0
        %v3938 = vsel %vm1100, %v3834, 0
        %v3941 = vsel %vm1100, %v3836, 0
        %v3944 = vsel %vm1100, %v3838, 0
        %v3947 = vsel %vm1100, %v3840, 0
        %v3950 = vsel %vm1100, %v3842, 0
        %v3953 = vsel %vm1100, %v3844, 0
        %v3956 = vsel %vm1100, %v3846, 0
        %v3959 = vsel %vm1100, %v3848, 0
        %v3962 = vsel %vm1100, %v3850, 0
        %v3965 = vsel %vm1100, %v3852, 0
        %v3968 = vsel %vm1100, %v3854, 0
        %v3971 = vsel %vm1100, %v3856, 0
        %v3974 = vsel %vm1100, %v3858, 0
        %v3977 = vsel %vm1100, %v3860, 0
        %3979 = vmatpush.msra.mxu0 %v3876
        %3980 = vmatpush.msra.mxu0 %v3875
        %3981 = vmatpush.msra.mxu0 %v3874
        %3982 = vmatpush.msra.mxu0 %v3873
        %3983 = vmatpush.msra.mxu0 %v3872
        %3984 = vmatpush.msra.mxu0 %v3871
        %3985 = vmatpush.msra.mxu0 %v3870
        %3986 = vmatpush.msra.mxu0 %v3869
        %3987 = vmatpush.msra.mxu0 %v3868
        %3988 = vmatpush.msra.mxu0 %v3867
        %3989 = vmatpush.msra.mxu0 %v3866
        %3990 = vmatpush.msra.mxu0 %v3865
        %3991 = vmatpush.msra.mxu0 %v3864
        %3992 = vmatpush.msra.mxu0 %v3863
        %3993 = vmatpush.msra.mxu0 %v3862
        %3994 = vmatpush.msra.mxu0 %v3861
        %3995 = vmatmul.f32.gmra.mxu0 %v3797
        %v3996 = vpop.f32.mrf.mxu0
        %v3997 = vadd.f32 %v3881, %v3996
        %3998 = vmatmul.f32.gmra.mxu0 %v3799
        %v3999 = vpop.f32.mrf.mxu0
        %v4000 = vadd.f32 %v3881, %v3999
        %4001 = vmatmul.f32.gmra.mxu0 %v3801
        %v4002 = vpop.f32.mrf.mxu0
        %v4003 = vadd.f32 %v3881, %v4002
        %4004 = vmatmul.f32.gmra.mxu0 %v3803
        %v4005 = vpop.f32.mrf.mxu0
        %v4006 = vadd.f32 %v3881, %v4005
        %4007 = vmatmul.f32.gmra.mxu0 %v3805
        %v4008 = vpop.f32.mrf.mxu0
        %v4009 = vadd.f32 %v3881, %v4008
        %4010 = vmatmul.f32.gmra.mxu0 %v3807
        %v4011 = vpop.f32.mrf.mxu0
        %v4012 = vadd.f32 %v3881, %v4011
        %4013 = vmatmul.f32.gmra.mxu0 %v3809
        %v4014 = vpop.f32.mrf.mxu0
        %v4015 = vadd.f32 %v3881, %v4014
        %4016 = vmatmul.f32.gmra.mxu0 %v3811
        %v4017 = vpop.f32.mrf.mxu0
        %v4018 = vadd.f32 %v3881, %v4017
        %4019 = vmatmul.f32.gmra.mxu0 %v3813
        %v4020 = vpop.f32.mrf.mxu0
        %v4021 = vadd.f32 %v3881, %v4020
        %4022 = vmatmul.f32.gmra.mxu0 %v3815
        %v4023 = vpop.f32.mrf.mxu0
        %v4024 = vadd.f32 %v3881, %v4023
        %4025 = vmatmul.f32.gmra.mxu0 %v3817
        %v4026 = vpop.f32.mrf.mxu0
        %v4027 = vadd.f32 %v3881, %v4026
        %4028 = vmatmul.f32.gmra.mxu0 %v3819
        %v4029 = vpop.f32.mrf.mxu0
        %v4030 = vadd.f32 %v3881, %v4029
        %4031 = vmatmul.f32.gmra.mxu0 %v3821
        %v4032 = vpop.f32.mrf.mxu0
        %v4033 = vadd.f32 %v3881, %v4032
        %4034 = vmatmul.f32.gmra.mxu0 %v3823
        %v4035 = vpop.f32.mrf.mxu0
        %v4036 = vadd.f32 %v3881, %v4035
        %4037 = vmatmul.f32.gmra.mxu0 %v3825
        %v4038 = vpop.f32.mrf.mxu0
        %v4039 = vadd.f32 %v3881, %v4038
        %4040 = vmatmul.f32.gmra.mxu0 %v3827
        %v4041 = vpop.f32.mrf.mxu0
        %v4042 = vadd.f32 %v3881, %v4041
        %4043 = vmatmul.f32.gmra.mxu0 %v3829
        %v4044 = vpop.f32.mrf.mxu0
        %v4045 = vadd.f32 %v3881, %v4044
        %4046 = vmatmul.f32.gmra.mxu0 %v3831
        %v4047 = vpop.f32.mrf.mxu0
        %v4048 = vadd.f32 %v3881, %v4047
        %4049 = vmatmul.f32.gmra.mxu0 %v3833
        %v4050 = vpop.f32.mrf.mxu0
        %v4051 = vadd.f32 %v3881, %v4050
        %4052 = vmatmul.f32.gmra.mxu0 %v3835
        %v4053 = vpop.f32.mrf.mxu0
        %v4054 = vadd.f32 %v3881, %v4053
        %4055 = vmatmul.f32.gmra.mxu0 %v3837
        %v4056 = vpop.f32.mrf.mxu0
        %v4057 = vadd.f32 %v3881, %v4056
        %4058 = vmatmul.f32.gmra.mxu0 %v3839
        %v4059 = vpop.f32.mrf.mxu0
        %v4060 = vadd.f32 %v3881, %v4059
        %4061 = vmatmul.f32.gmra.mxu0 %v3841
        %v4062 = vpop.f32.mrf.mxu0
        %v4063 = vadd.f32 %v3881, %v4062
        %4064 = vmatmul.f32.gmra.mxu0 %v3843
        %v4065 = vpop.f32.mrf.mxu0
        %v4066 = vadd.f32 %v3881, %v4065
        %4067 = vmatmul.f32.gmra.mxu0 %v3845
        %v4068 = vpop.f32.mrf.mxu0
        %v4069 = vadd.f32 %v3881, %v4068
        %4070 = vmatmul.f32.gmra.mxu0 %v3847
        %v4071 = vpop.f32.mrf.mxu0
        %v4072 = vadd.f32 %v3881, %v4071
        %4073 = vmatmul.f32.gmra.mxu0 %v3849
        %v4074 = vpop.f32.mrf.mxu0
        %v4075 = vadd.f32 %v3881, %v4074
        %4076 = vmatmul.f32.gmra.mxu0 %v3851
        %v4077 = vpop.f32.mrf.mxu0
        %v4078 = vadd.f32 %v3881, %v4077
        %4079 = vmatmul.f32.gmra.mxu0 %v3853
        %v4080 = vpop.f32.mrf.mxu0
        %v4081 = vadd.f32 %v3881, %v4080
        %4082 = vmatmul.f32.gmra.mxu0 %v3855
        %v4083 = vpop.f32.mrf.mxu0
        %v4084 = vadd.f32 %v3881, %v4083
        %4085 = vmatmul.f32.gmra.mxu0 %v3857
        %v4086 = vpop.f32.mrf.mxu0
        %v4087 = vadd.f32 %v3881, %v4086
        %4088 = vmatmul.f32.gmra.mxu0 %v3859
        %v4089 = vpop.f32.mrf.mxu0
        %v4090 = vadd.f32 %v3881, %v4089
        %4091 = vdwg.mxu0
        %4092 = vmatpush.msra.mxu0 0.0
        %4093 = vmatpush.msra.mxu0 0.0
        %4094 = vmatpush.msra.mxu0 0.0
        %4095 = vmatpush.msra.mxu0 0.0
        %4096 = vmatpush.msra.mxu0 0.0
        %4097 = vmatpush.msra.mxu0 0.0
        %4098 = vmatpush.msra.mxu0 0.0
        %4099 = vmatpush.msra.mxu0 0.0
        %4100 = vmatpush.msra.mxu0 0.0
        %4101 = vmatpush.msra.mxu0 0.0
        %4102 = vmatpush.msra.mxu0 0.0
        %4103 = vmatpush.msra.mxu0 0.0
        %4104 = vmatpush.msra.mxu0 0.0
        %4105 = vmatpush.msra.mxu0 0.0
        %4106 = vmatpush.msra.mxu0 %v3878
        %4107 = vmatpush.msra.mxu0 %v3877
        %4108 = vmatmul.f32.gmra.mxu0 %v3884
        %v4109 = vpop.f32.mrf.mxu0
        %v4110 = vadd.f32 %v3997, %v4109
        %4111 = vmatmul.f32.gmra.mxu0 %v3887
        %v4112 = vpop.f32.mrf.mxu0
        %v4113 = vadd.f32 %v4000, %v4112
        %4114 = vmatmul.f32.gmra.mxu0 %v3890
        %v4115 = vpop.f32.mrf.mxu0
        %v4116 = vadd.f32 %v4003, %v4115
        %4117 = vmatmul.f32.gmra.mxu0 %v3893
        %v4118 = vpop.f32.mrf.mxu0
        %v4119 = vadd.f32 %v4006, %v4118
        %4120 = vmatmul.f32.gmra.mxu0 %v3896
        %v4121 = vpop.f32.mrf.mxu0
        %v4122 = vadd.f32 %v4009, %v4121
        %4123 = vmatmul.f32.gmra.mxu0 %v3899
        %v4124 = vpop.f32.mrf.mxu0
        %v4125 = vadd.f32 %v4012, %v4124
        %4126 = vmatmul.f32.gmra.mxu0 %v3902
        %v4127 = vpop.f32.mrf.mxu0
        %v4128 = vadd.f32 %v4015, %v4127
        %4129 = vmatmul.f32.gmra.mxu0 %v3905
        %v4130 = vpop.f32.mrf.mxu0
        %v4131 = vadd.f32 %v4018, %v4130
        %4132 = vmatmul.f32.gmra.mxu0 %v3908
        %v4133 = vpop.f32.mrf.mxu0
        %v4134 = vadd.f32 %v4021, %v4133
        %4135 = vmatmul.f32.gmra.mxu0 %v3911
        %v4136 = vpop.f32.mrf.mxu0
        %v4137 = vadd.f32 %v4024, %v4136
        %4138 = vmatmul.f32.gmra.mxu0 %v3914
        %v4139 = vpop.f32.mrf.mxu0
        %v4140 = vadd.f32 %v4027, %v4139
        %4141 = vmatmul.f32.gmra.mxu0 %v3917
        %v4142 = vpop.f32.mrf.mxu0
        %v4143 = vadd.f32 %v4030, %v4142
        %4144 = vmatmul.f32.gmra.mxu0 %v3920
        %v4145 = vpop.f32.mrf.mxu0
        %v4146 = vadd.f32 %v4033, %v4145
        %4147 = vmatmul.f32.gmra.mxu0 %v3923
        %v4148 = vpop.f32.mrf.mxu0
        %v4149 = vadd.f32 %v4036, %v4148
        %4150 = vmatmul.f32.gmra.mxu0 %v3926
        %v4151 = vpop.f32.mrf.mxu0
        %v4152 = vadd.f32 %v4039, %v4151
        %4153 = vmatmul.f32.gmra.mxu0 %v3929
        %v4154 = vpop.f32.mrf.mxu0
        %v4155 = vadd.f32 %v4042, %v4154
        %4156 = vmatmul.f32.gmra.mxu0 %v3932
        %v4157 = vpop.f32.mrf.mxu0
        %v4158 = vadd.f32 %v4045, %v4157
        %4159 = vmatmul.f32.gmra.mxu0 %v3935
        %v4160 = vpop.f32.mrf.mxu0
        %v4161 = vadd.f32 %v4048, %v4160
        %4162 = vmatmul.f32.gmra.mxu0 %v3938
        %v4163 = vpop.f32.mrf.mxu0
        %v4164 = vadd.f32 %v4051, %v4163
        %4165 = vmatmul.f32.gmra.mxu0 %v3941
        %v4166 = vpop.f32.mrf.mxu0
        %v4167 = vadd.f32 %v4054, %v4166
        %4168 = vmatmul.f32.gmra.mxu0 %v3944
        %v4169 = vpop.f32.mrf.mxu0
        %v4170 = vadd.f32 %v4057, %v4169
        %4171 = vmatmul.f32.gmra.mxu0 %v3947
        %v4172 = vpop.f32.mrf.mxu0
        %v4173 = vadd.f32 %v4060, %v4172
        %4174 = vmatmul.f32.gmra.mxu0 %v3950
        %v4175 = vpop.f32.mrf.mxu0
        %v4176 = vadd.f32 %v4063, %v4175
        %4177 = vmatmul.f32.gmra.mxu0 %v3953
        %v4178 = vpop.f32.mrf.mxu0
        %v4179 = vadd.f32 %v4066, %v4178
        %4180 = vmatmul.f32.gmra.mxu0 %v3956
        %v4181 = vpop.f32.mrf.mxu0
        %v4182 = vadd.f32 %v4069, %v4181
        %4183 = vmatmul.f32.gmra.mxu0 %v3959
        %v4184 = vpop.f32.mrf.mxu0
        %v4185 = vadd.f32 %v4072, %v4184
        %4186 = vmatmul.f32.gmra.mxu0 %v3962
        %v4187 = vpop.f32.mrf.mxu0
        %v4188 = vadd.f32 %v4075, %v4187
        %4189 = vmatmul.f32.gmra.mxu0 %v3965
        %v4190 = vpop.f32.mrf.mxu0
        %v4191 = vadd.f32 %v4078, %v4190
        %4192 = vmatmul.f32.gmra.mxu0 %v3968
        %v4193 = vpop.f32.mrf.mxu0
        %v4194 = vadd.f32 %v4081, %v4193
        %4195 = vmatmul.f32.gmra.mxu0 %v3971
        %v4196 = vpop.f32.mrf.mxu0
        %v4197 = vadd.f32 %v4084, %v4196
        %4198 = vmatmul.f32.gmra.mxu0 %v3974
        %v4199 = vpop.f32.mrf.mxu0
        %v4200 = vadd.f32 %v4087, %v4199
        %4201 = vmatmul.f32.gmra.mxu0 %v3977
        %v4202 = vpop.f32.mrf.mxu0
        %v4203 = vadd.f32 %v4090, %v4202
        %4204 = vdwg.mxu0
        %v4205 = vmax.f32 %v4110, 0.0
        %v4206 = vmax.f32 %v4113, 0.0
        %v4207 = vmax.f32 %v4116, 0.0
        %v4208 = vmax.f32 %v4119, 0.0
        %v4209 = vmax.f32 %v4122, 0.0
        %v4210 = vmax.f32 %v4125, 0.0
        %v4211 = vmax.f32 %v4128, 0.0
        %v4212 = vmax.f32 %v4131, 0.0
        %v4213 = vmax.f32 %v4134, 0.0
        %v4214 = vmax.f32 %v4137, 0.0
        %v4215 = vmax.f32 %v4140, 0.0
        %v4216 = vmax.f32 %v4143, 0.0
        %v4217 = vmax.f32 %v4146, 0.0
        %v4218 = vmax.f32 %v4149, 0.0
        %v4219 = vmax.f32 %v4152, 0.0
        %v4220 = vmax.f32 %v4155, 0.0
        %v4221 = vmax.f32 %v4158, 0.0
        %v4222 = vmax.f32 %v4161, 0.0
        %v4223 = vmax.f32 %v4164, 0.0
        %v4224 = vmax.f32 %v4167, 0.0
        %v4225 = vmax.f32 %v4170, 0.0
        %v4226 = vmax.f32 %v4173, 0.0
        %v4227 = vmax.f32 %v4176, 0.0
        %v4228 = vmax.f32 %v4179, 0.0
        %v4229 = vmax.f32 %v4182, 0.0
        %v4230 = vmax.f32 %v4185, 0.0
        %v4231 = vmax.f32 %v4188, 0.0
        %v4232 = vmax.f32 %v4191, 0.0
        %v4233 = vmax.f32 %v4194, 0.0
        %v4234 = vmax.f32 %v4197, 0.0
        %v4235 = vmax.f32 %v4200, 0.0
        %v4236 = vmax.f32 %v4203, 0.0
        %v4237 = vld [vmem:[%s7] sm:$0xff]
        %v4238 = vld [vmem:[%s7 + $0x8] sm:$0xff]
        %v4239 = vld [vmem:[%s330] sm:$0xff]
        %v4240 = vld [vmem:[%s330 + $0x8] sm:$0xff]
        %v4241 = vld [vmem:[%s330 + $0x10] sm:$0xff]
        %v4242 = vld [vmem:[%s330 + $0x18] sm:$0xff]
        %v4243 = vld [vmem:[%s330 + $0x20] sm:$0xff]
        %v4244 = vld [vmem:[%s330 + $0x28] sm:$0xff]
        %v4245 = vld [vmem:[%s330 + $0x30] sm:$0xff]
        %v4246 = vld [vmem:[%s330 + $0x38] sm:$0xff]
        %v4247 = vld [vmem:[%s330 + $0x40] sm:$0xff]
        %v4248 = vld [vmem:[%s330 + $0x48] sm:$0xff]
        %v4249 = vld [vmem:[%s330 + $0x50] sm:$0xff]
        %v4250 = vld [vmem:[%s330 + $0x58] sm:$0xff]
        %v4251 = vld [vmem:[%s330 + $0x60] sm:$0xff]
        %v4252 = vld [vmem:[%s330 + $0x68] sm:$0xff]
        %v4253 = vld [vmem:[%s330 + $0x70] sm:$0xff]
        %v4254 = vld [vmem:[%s330 + $0x78] sm:$0xff]
        %v4255 = vld [vmem:[%s330 + $0x80] sm:$0xff]
        %v4256 = vld [vmem:[%s330 + $0x88] sm:$0xff]
        %v4257 = vld [vmem:[%s330 + $0x90] sm:$0xff]
        %v4258 = vld [vmem:[%s330 + $0x98] sm:$0xff]
        %v4259 = vld [vmem:[%s330 + $0xa0] sm:$0xff]
        %v4260 = vld [vmem:[%s330 + $0xa8] sm:$0xff]
        %v4261 = vld [vmem:[%s330 + $0xb0] sm:$0xff]
        %v4262 = vld [vmem:[%s330 + $0xb8] sm:$0xff]
        %v4263 = vld [vmem:[%s330 + $0xc0] sm:$0xff]
        %v4264 = vld [vmem:[%s330 + $0xc8] sm:$0xff]
        %v4265 = vld [vmem:[%s330 + $0xd0] sm:$0xff]
        %v4266 = vld [vmem:[%s330 + $0xd8] sm:$0xff]
        %v4267 = vld [vmem:[%s330 + $0xe0] sm:$0xff]
        %v4268 = vld [vmem:[%s330 + $0xe8] sm:$0xff]
        %v4269 = vld [vmem:[%s330 + $0xf0] sm:$0xff]
        %v4270 = vld [vmem:[%s330 + $0xf8] sm:$0xff]
        %v4271 = vld [vmem:[%s8] sm:$0x1]
        %v4273 = vperm.slane %v4271, 0
        %v4276 = vsel %vm1100, %v4205, 0
        %v4279 = vsel %vm1100, %v4206, 0
        %v4282 = vsel %vm1100, %v4207, 0
        %v4285 = vsel %vm1100, %v4208, 0
        %v4288 = vsel %vm1100, %v4209, 0
        %v4291 = vsel %vm1100, %v4210, 0
        %v4294 = vsel %vm1100, %v4211, 0
        %v4297 = vsel %vm1100, %v4212, 0
        %v4300 = vsel %vm1100, %v4213, 0
        %v4303 = vsel %vm1100, %v4214, 0
        %v4306 = vsel %vm1100, %v4215, 0
        %v4309 = vsel %vm1100, %v4216, 0
        %v4312 = vsel %vm1100, %v4217, 0
        %v4315 = vsel %vm1100, %v4218, 0
        %v4318 = vsel %vm1100, %v4219, 0
        %v4321 = vsel %vm1100, %v4220, 0
        %v4324 = vsel %vm1100, %v4221, 0
        %v4327 = vsel %vm1100, %v4222, 0
        %v4330 = vsel %vm1100, %v4223, 0
        %v4333 = vsel %vm1100, %v4224, 0
        %v4336 = vsel %vm1100, %v4225, 0
        %v4339 = vsel %vm1100, %v4226, 0
        %v4342 = vsel %vm1100, %v4227, 0
        %v4345 = vsel %vm1100, %v4228, 0
        %v4348 = vsel %vm1100, %v4229, 0
        %v4351 = vsel %vm1100, %v4230, 0
        %v4354 = vsel %vm1100, %v4231, 0
        %v4357 = vsel %vm1100, %v4232, 0
        %v4360 = vsel %vm1100, %v4233, 0
        %v4363 = vsel %vm1100, %v4234, 0
        %v4366 = vsel %vm1100, %v4235, 0
        %v4369 = vsel %vm1100, %v4236, 0
        %4371 = vmatpush.msra.mxu0 0.0
        %4372 = vmatpush.msra.mxu0 0.0
        %4373 = vmatpush.msra.mxu0 0.0
        %4374 = vmatpush.msra.mxu0 0.0
        %4375 = vmatpush.msra.mxu0 0.0
        %4376 = vmatpush.msra.mxu0 0.0
        %4377 = vmatpush.msra.mxu0 0.0
        %4378 = vmatpush.msra.mxu0 0.0
        %4379 = vmatpush.msra.mxu0 0.0
        %4380 = vmatpush.msra.mxu0 0.0
        %4381 = vmatpush.msra.mxu0 0.0
        %4382 = vmatpush.msra.mxu0 0.0
        %4383 = vmatpush.msra.mxu0 0.0
        %4384 = vmatpush.msra.mxu0 0.0
        %4385 = vmatpush.msra.mxu0 %v4238
        %4386 = vmatpush.msra.mxu0 %v4237
        %4387 = vmatmul.f32.gmra.mxu0 %v4276
        %v4388 = vpop.f32.mrf.mxu0
        %v4389 = vadd.f32 %v4273, %v4388
        %4390 = vmatmul.f32.gmra.mxu0 %v4279
        %v4391 = vpop.f32.mrf.mxu0
        %v4392 = vadd.f32 %v4273, %v4391
        %4393 = vmatmul.f32.gmra.mxu0 %v4282
        %v4394 = vpop.f32.mrf.mxu0
        %v4395 = vadd.f32 %v4273, %v4394
        %4396 = vmatmul.f32.gmra.mxu0 %v4285
        %v4397 = vpop.f32.mrf.mxu0
        %v4398 = vadd.f32 %v4273, %v4397
        %4399 = vmatmul.f32.gmra.mxu0 %v4288
        %v4400 = vpop.f32.mrf.mxu0
        %v4401 = vadd.f32 %v4273, %v4400
        %4402 = vmatmul.f32.gmra.mxu0 %v4291
        %v4403 = vpop.f32.mrf.mxu0
        %v4404 = vadd.f32 %v4273, %v4403
        %4405 = vmatmul.f32.gmra.mxu0 %v4294
        %v4406 = vpop.f32.mrf.mxu0
        %v4407 = vadd.f32 %v4273, %v4406
        %4408 = vmatmul.f32.gmra.mxu0 %v4297
        %v4409 = vpop.f32.mrf.mxu0
        %v4410 = vadd.f32 %v4273, %v4409
        %4411 = vmatmul.f32.gmra.mxu0 %v4300
        %v4412 = vpop.f32.mrf.mxu0
        %v4413 = vadd.f32 %v4273, %v4412
        %4414 = vmatmul.f32.gmra.mxu0 %v4303
        %v4415 = vpop.f32.mrf.mxu0
        %v4416 = vadd.f32 %v4273, %v4415
        %4417 = vmatmul.f32.gmra.mxu0 %v4306
        %v4418 = vpop.f32.mrf.mxu0
        %v4419 = vadd.f32 %v4273, %v4418
        %4420 = vmatmul.f32.gmra.mxu0 %v4309
        %v4421 = vpop.f32.mrf.mxu0
        %v4422 = vadd.f32 %v4273, %v4421
        %4423 = vmatmul.f32.gmra.mxu0 %v4312
        %v4424 = vpop.f32.mrf.mxu0
        %v4425 = vadd.f32 %v4273, %v4424
        %4426 = vmatmul.f32.gmra.mxu0 %v4315
        %v4427 = vpop.f32.mrf.mxu0
        %v4428 = vadd.f32 %v4273, %v4427
        %4429 = vmatmul.f32.gmra.mxu0 %v4318
        %v4430 = vpop.f32.mrf.mxu0
        %v4431 = vadd.f32 %v4273, %v4430
        %4432 = vmatmul.f32.gmra.mxu0 %v4321
        %v4433 = vpop.f32.mrf.mxu0
        %v4434 = vadd.f32 %v4273, %v4433
        %4435 = vmatmul.f32.gmra.mxu0 %v4324
        %v4436 = vpop.f32.mrf.mxu0
        %v4437 = vadd.f32 %v4273, %v4436
        %4438 = vmatmul.f32.gmra.mxu0 %v4327
        %v4439 = vpop.f32.mrf.mxu0
        %v4440 = vadd.f32 %v4273, %v4439
        %4441 = vmatmul.f32.gmra.mxu0 %v4330
        %v4442 = vpop.f32.mrf.mxu0
        %v4443 = vadd.f32 %v4273, %v4442
        %4444 = vmatmul.f32.gmra.mxu0 %v4333
        %v4445 = vpop.f32.mrf.mxu0
        %v4446 = vadd.f32 %v4273, %v4445
        %4447 = vmatmul.f32.gmra.mxu0 %v4336
        %v4448 = vpop.f32.mrf.mxu0
        %v4449 = vadd.f32 %v4273, %v4448
        %4450 = vmatmul.f32.gmra.mxu0 %v4339
        %v4451 = vpop.f32.mrf.mxu0
        %v4452 = vadd.f32 %v4273, %v4451
        %4453 = vmatmul.f32.gmra.mxu0 %v4342
        %v4454 = vpop.f32.mrf.mxu0
        %v4455 = vadd.f32 %v4273, %v4454
        %4456 = vmatmul.f32.gmra.mxu0 %v4345
        %v4457 = vpop.f32.mrf.mxu0
        %v4458 = vadd.f32 %v4273, %v4457
        %4459 = vmatmul.f32.gmra.mxu0 %v4348
        %v4460 = vpop.f32.mrf.mxu0
        %v4461 = vadd.f32 %v4273, %v4460
        %4462 = vmatmul.f32.gmra.mxu0 %v4351
        %v4463 = vpop.f32.mrf.mxu0
        %v4464 = vadd.f32 %v4273, %v4463
        %4465 = vmatmul.f32.gmra.mxu0 %v4354
        %v4466 = vpop.f32.mrf.mxu0
        %v4467 = vadd.f32 %v4273, %v4466
        %4468 = vmatmul.f32.gmra.mxu0 %v4357
        %v4469 = vpop.f32.mrf.mxu0
        %v4470 = vadd.f32 %v4273, %v4469
        %4471 = vmatmul.f32.gmra.mxu0 %v4360
        %v4472 = vpop.f32.mrf.mxu0
        %v4473 = vadd.f32 %v4273, %v4472
        %4474 = vmatmul.f32.gmra.mxu0 %v4363
        %v4475 = vpop.f32.mrf.mxu0
        %v4476 = vadd.f32 %v4273, %v4475
        %4477 = vmatmul.f32.gmra.mxu0 %v4366
        %v4478 = vpop.f32.mrf.mxu0
        %v4479 = vadd.f32 %v4273, %v4478
        %4480 = vmatmul.f32.gmra.mxu0 %v4369
        %v4481 = vpop.f32.mrf.mxu0
        %v4482 = vadd.f32 %v4273, %v4481
        %4483 = vdwg.mxu0
        %v4484 = vadd.f32 %v4389, %v4239
        %v4485 = vadd.f32 %v4392, %v4240
        %v4486 = vadd.f32 %v4395, %v4241
        %v4487 = vadd.f32 %v4398, %v4242
        %v4488 = vadd.f32 %v4401, %v4243
        %v4489 = vadd.f32 %v4404, %v4244
        %v4490 = vadd.f32 %v4407, %v4245
        %v4491 = vadd.f32 %v4410, %v4246
        %v4492 = vadd.f32 %v4413, %v4247
        %v4493 = vadd.f32 %v4416, %v4248
        %v4494 = vadd.f32 %v4419, %v4249
        %v4495 = vadd.f32 %v4422, %v4250
        %v4496 = vadd.f32 %v4425, %v4251
        %v4497 = vadd.f32 %v4428, %v4252
        %v4498 = vadd.f32 %v4431, %v4253
        %v4499 = vadd.f32 %v4434, %v4254
        %v4500 = vadd.f32 %v4437, %v4255
        %v4501 = vadd.f32 %v4440, %v4256
        %v4502 = vadd.f32 %v4443, %v4257
        %v4503 = vadd.f32 %v4446, %v4258
        %v4504 = vadd.f32 %v4449, %v4259
        %v4505 = vadd.f32 %v4452, %v4260
        %v4506 = vadd.f32 %v4455, %v4261
        %v4507 = vadd.f32 %v4458, %v4262
        %v4508 = vadd.f32 %v4461, %v4263
        %v4509 = vadd.f32 %v4464, %v4264
        %v4510 = vadd.f32 %v4467, %v4265
        %v4511 = vadd.f32 %v4470, %v4266
        %v4512 = vadd.f32 %v4473, %v4267
        %v4513 = vadd.f32 %v4476, %v4268
        %v4514 = vadd.f32 %v4479, %v4269
        %v4515 = vadd.f32 %v4482, %v4270
        %v4516 = vmax.f32 %v4484, 0.0
        %v4517 = vmax.f32 %v4485, 0.0
        %v4518 = vmax.f32 %v4486, 0.0
        %v4519 = vmax.f32 %v4487, 0.0
        %v4520 = vmax.f32 %v4488, 0.0
        %v4521 = vmax.f32 %v4489, 0.0
        %v4522 = vmax.f32 %v4490, 0.0
        %v4523 = vmax.f32 %v4491, 0.0
        %v4524 = vmax.f32 %v4492, 0.0
        %v4525 = vmax.f32 %v4493, 0.0
        %v4526 = vmax.f32 %v4494, 0.0
        %v4527 = vmax.f32 %v4495, 0.0
        %v4528 = vmax.f32 %v4496, 0.0
        %v4529 = vmax.f32 %v4497, 0.0
        %v4530 = vmax.f32 %v4498, 0.0
        %v4531 = vmax.f32 %v4499, 0.0
        %v4532 = vmax.f32 %v4500, 0.0
        %v4533 = vmax.f32 %v4501, 0.0
        %v4534 = vmax.f32 %v4502, 0.0
        %v4535 = vmax.f32 %v4503, 0.0
        %v4536 = vmax.f32 %v4504, 0.0
        %v4537 = vmax.f32 %v4505, 0.0
        %v4538 = vmax.f32 %v4506, 0.0
        %v4539 = vmax.f32 %v4507, 0.0
        %v4540 = vmax.f32 %v4508, 0.0
        %v4541 = vmax.f32 %v4509, 0.0
        %v4542 = vmax.f32 %v4510, 0.0
        %v4543 = vmax.f32 %v4511, 0.0
        %v4544 = vmax.f32 %v4512, 0.0
        %v4545 = vmax.f32 %v4513, 0.0
        %v4546 = vmax.f32 %v4514, 0.0
        %v4547 = vmax.f32 %v4515, 0.0
        %4548 = vst.msk [vmem:[%s325] sm:$0xff] %vm375, %v4516
        %4549 = vst.msk [vmem:[%s325 + $0x8] sm:$0xff] %vm375, %v4517
        %4550 = vst.msk [vmem:[%s325 + $0x10] sm:$0xff] %vm375, %v4518
        %4551 = vst.msk [vmem:[%s325 + $0x18] sm:$0xff] %vm375, %v4519
        %4552 = vst.msk [vmem:[%s325 + $0x20] sm:$0xff] %vm375, %v4520
        %4553 = vst.msk [vmem:[%s325 + $0x28] sm:$0xff] %vm375, %v4521
        %4554 = vst.msk [vmem:[%s325 + $0x30] sm:$0xff] %vm375, %v4522
        %4555 = vst.msk [vmem:[%s325 + $0x38] sm:$0xff] %vm375, %v4523
        %4556 = vst.msk [vmem:[%s325 + $0x40] sm:$0xff] %vm375, %v4524
        %4557 = vst.msk [vmem:[%s325 + $0x48] sm:$0xff] %vm375, %v4525
        %4558 = vst.msk [vmem:[%s325 + $0x50] sm:$0xff] %vm375, %v4526
        %4559 = vst.msk [vmem:[%s325 + $0x58] sm:$0xff] %vm375, %v4527
        %4560 = vst.msk [vmem:[%s325 + $0x60] sm:$0xff] %vm375, %v4528
        %4561 = vst.msk [vmem:[%s325 + $0x68] sm:$0xff] %vm375, %v4529
        %4562 = vst.msk [vmem:[%s325 + $0x70] sm:$0xff] %vm375, %v4530
        %4563 = vst.msk [vmem:[%s325 + $0x78] sm:$0xff] %vm375, %v4531
        %4564 = vst.msk [vmem:[%s325 + $0x80] sm:$0xff] %vm375, %v4532
        %4565 = vst.msk [vmem:[%s325 + $0x88] sm:$0xff] %vm375, %v4533
        %4566 = vst.msk [vmem:[%s325 + $0x90] sm:$0xff] %vm375, %v4534
        %4567 = vst.msk [vmem:[%s325 + $0x98] sm:$0xff] %vm375, %v4535
        %4568 = vst.msk [vmem:[%s325 + $0xa0] sm:$0xff] %vm375, %v4536
        %4569 = vst.msk [vmem:[%s325 + $0xa8] sm:$0xff] %vm375, %v4537
        %4570 = vst.msk [vmem:[%s325 + $0xb0] sm:$0xff] %vm375, %v4538
        %4571 = vst.msk [vmem:[%s325 + $0xb8] sm:$0xff] %vm375, %v4539
        %4572 = vst.msk [vmem:[%s325 + $0xc0] sm:$0xff] %vm375, %v4540
        %4573 = vst.msk [vmem:[%s325 + $0xc8] sm:$0xff] %vm375, %v4541
        %4574 = vst.msk [vmem:[%s325 + $0xd0] sm:$0xff] %vm375, %v4542
        %4575 = vst.msk [vmem:[%s325 + $0xd8] sm:$0xff] %vm375, %v4543
        %4576 = vst.msk [vmem:[%s325 + $0xe0] sm:$0xff] %vm375, %v4544
        %4577 = vst.msk [vmem:[%s325 + $0xe8] sm:$0xff] %vm375, %v4545
        %4578 = vst.msk [vmem:[%s325 + $0xf0] sm:$0xff] %vm375, %v4546
        %4579 = vst.msk [vmem:[%s325 + $0xf8] sm:$0xff] %vm375, %v4547
        %s4580 = sand.u32 %s225, 1
        %s4581 = scalar_lea.sflag [#allocation4], %s4580
        %s4582 = sand.u32 %s225, 1
        %s4583 = smul.addr %s4582, 256
        %s4584 = scalar_lea.vmem [#allocation3], %s4583
        // Predicated region
        $region57: #{tpu_custom_call.1} parent=55 // pred_check
          %p4585 = pneg %p235
        $region58: #{tpu_custom_call.1} parent=55 // pred_check_branch
          %4587 = sbr.rel (%p4585) target = $region60
        $region59: #{tpu_custom_call.1} parent=55 // pred_region
          %4589 = vsyncadd %s4581, 0
          %s4590 = smul.addr %s23, 32
          %s4591 = smul.addr %s4590, 8
          %s4592 = scalar_lea.hbm %s9, %s4591
          %s4593 = sshll.u32 %s4584, 4
          %s4594 = int_to_ptr.vmem [resolvable:$true] %s4593
          %s4595 = sshll.u32 %s4592, 4
          %s4596 = int_to_ptr.hbm [resolvable:$true] %s4595
          %4601 = dma.vmem_to_hbm [thread:$0]  %s4594, 4096, %s4596, %s4581, 128, 128, 8
        $region60: #{tpu_custom_call.1} parent=55 // pred_fallthru
          _
      $region56: #{tpu_custom_call.1} parent=5 // pred_fallthru
        _
      %p4602 = scmp.le.s32.totalorder 2, %s18
      // Predicated region
      $region61: #{tpu_custom_call.1} parent=5 // pred_check
        %p4603 = pneg %p4602
      $region62: #{tpu_custom_call.1} parent=5 // pred_check_branch
        %4605 = sbr.rel (%p4603) target = $region64
      $region63: #{tpu_custom_call.1} parent=5 // pred_region
        %s4606 = ssub.s32 %s18, 2
        // Predicated region
        $region65: #{tpu_custom_call.1} parent=63 // pred_check
          %p4607 = pneg %p241
        $region66: #{tpu_custom_call.1} parent=63 // pred_check_branch
          %4609 = sbr.rel (%p4607) target = $region68
        $region67: #{tpu_custom_call.1} parent=63 // pred_region
          %s4610 = sand.u32 %s226, 1
          %s4611 = scalar_lea.sflag [#allocation4], %s4610
          %s4612 = sand.u32 %s226, 1
          %s4613 = smul.addr %s4612, 256
          %s4614 = scalar_lea.vmem [#allocation3], %s4613
          %4616 = dma.done %s4611, 4096
        $region68: #{tpu_custom_call.1} parent=63 // pred_fallthru
          _
      $region64: #{tpu_custom_call.1} parent=5 // pred_fallthru
        _
    $region6: #{tpu_custom_call.1} parent=1 // loop_footer
      %s22 = sadd.s32 1, %s18
    $region7: #{tpu_custom_call.1} parent=1 // loop_footer_branch
      %17 = sbr.rel target = $region3
    $region8: #{tpu_custom_call.1} parent=1 // loop_exit
      _
    %4617 = vsyncpa [#allocation4], 1
    %s4618 = scalar_lea.sflag [#allocation4], 1
    %4619 = vsyncpa %s4618, 1

</llo_original>
